<compile_context>
chip_gen: v7x
topology: tpu7x:2x2x1
jax: 0.10.0
libtpu: 0.0.40
codegen_flags: <defaults>
</compile_context>

<pallas_src>
import jax
import jax.numpy as jnp
from jax.experimental import pallas as pl
from jax.experimental.pallas import tpu as pltpu

# True layer dims: encoder 784->196->49->7, decoder 7->49->196->784
DIMS = [28 * 28, 196, 49, 7, 49, 196, 28 * 28]
# Hidden dims padded to lane multiples; input/output left at 784 (full-dim
# blocks are legal and avoid wasted compute / extra slice copies).
PDIMS = [28 * 28, 256, 128, 128, 128, 256, 28 * 28]


def make_autoencoder_kernel(bf16_act):
    """bf16_act=True -> ReLU/tanh in bf16 (v6e/v7x); False -> f32 (v5e)."""

    def kernel(x_ref,
               w1, b1, w2, b2, w3, b3,
               w4, b4, w5, b5, w6, b6,
               o_ref):
        def linear(h_bf16, w_ref, b_ref):
            # bf16 x bf16 -> f32 accumulate on the MXU; bias add in f32.
            return jnp.dot(h_bf16, w_ref[...],
                           preferred_element_type=jnp.float32) + b_ref[...]

        def relu_cast(y_f32):
            # relu-then-cast == cast-then-relu; pick the cheaper dtype.
            if bf16_act:
                return jnp.maximum(y_f32.astype(jnp.bfloat16), 0)
            return jnp.maximum(y_f32, 0.0).astype(jnp.bfloat16)

        # In-kernel f32 -> bf16 cast (VPU work hidden under the MXU).
        h = x_ref[...].astype(jnp.bfloat16)                 # (tm, 784)
        # ---- Encoder: Linear + ReLU x3 ----
        h = relu_cast(linear(h, w1, b1))
        h = relu_cast(linear(h, w2, b2))
        h = relu_cast(linear(h, w3, b3))
        # ---- Decoder: Linear + ReLU x2, Linear + tanh ----
        h = relu_cast(linear(h, w4, b4))
        h = relu_cast(linear(h, w5, b5))
        y = linear(h, w6, b6)                               # (tm, 784) f32
        if bf16_act:
            y = y.astype(jnp.bfloat16)
        o_ref[...] = jnp.tanh(y).astype(o_ref.dtype)

    return kernel


def init_params(key):
    """Deterministic init mimicking nn.Linear default (U[-1/sqrt(fan_in), ...])."""
    params = []
    for din, dout in zip(DIMS[:-1], DIMS[1:]):
        key, kw, kb = jax.random.split(key, 3)
        bound = 1.0 / (din ** 0.5)
        w = jax.random.uniform(kw, (din, dout), jnp.float32, -bound, bound)
        b = jax.random.uniform(kb, (1, dout), jnp.float32, -bound, bound)
        params.append((w, b))
    return params


def pack_params(params):
    """Zero-pad to padded dims; weights -> bf16, biases stay f32.

    Call ONCE (e.g. at parameter-update time), not per forward call.
    """
    packed = []
    for (w, b), din_p, dout_p in zip(params, PDIMS[:-1], PDIMS[1:]):
        din, dout = w.shape
        wp = jnp.zeros((din_p, dout_p), jnp.float32).at[:din, :dout].set(w)
        bp = jnp.zeros((1, dout_p), jnp.float32).at[:, :dout].set(b)
        packed.append((wp.astype(jnp.bfloat16), bp))
    return packed


def _pick_tm(batch, cap=1024):
    """Largest batch tile <= cap (multiple of 16) keeping >= 2 grid steps."""
    tm = cap
    while tm > 16 and batch < 2 * tm:
        tm //= 2
    return tm


def _default_bf16_act():
    """bf16 VPU/EUP exists on v6e and newer; keep f32 epilogue on v5e/older."""
    try:
        kind = jax.devices()[0].device_kind.lower()
    except Exception:
        return False
    for old in ("v2", "v3", "v4", "v5"):
        if old in kind:
            return False
    return True


def autoencoder_forward(x, packed_params, *, tm=None, out_dtype=jnp.bfloat16,
                        bf16_act=None):
    B, D = x.shape
    assert D == DIMS[0]
    if tm is None:
        tm = _pick_tm(B)
    assert tm % 16 == 0  # bf16 output sublane packing
    if bf16_act is None:
        bf16_act = _default_bf16_act()

    # Pad batch up to a tile multiple only when necessary (zero rows, sliced
    # off at the end); for B a multiple of tm this is a no-op (no extra copy).
    B_pad = -(-B // tm) * tm
    x_in = x if B_pad == B else jnp.pad(x, ((0, B_pad - B), (0, 0)))

    flat_args = [x_in]
    for (w, b) in packed_params:
        flat_args.extend([w, b])

    def build_in_specs(single_buffer_weights):
        specs = [pl.BlockSpec((tm, DIMS[0]), lambda i: (i, 0))]  # batch-tiled x
        wkw = ({"pipeline_mode": pl.Buffered(1)}
               if single_buffer_weights else {})
        for (w, b) in packed_params:
            din_p, dout_p = w.shape
            # Full, constant-index blocks -> weights/biases stay VMEM-resident.
            specs.append(pl.BlockSpec((din_p, dout_p), lambda i: (0, 0), **wkw))
            specs.append(pl.BlockSpec((1, dout_p), lambda i: (0, 0), **wkw))
        return specs

    flops = 2 * B_pad * sum(a * b for a, b in zip(PDIMS[:-1], PDIMS[1:]))
    bytes_accessed = (B_pad * DIMS[0] * 4                        # f32 input
                      + B_pad * DIMS[-1] * jnp.dtype(out_dtype).itemsize
                      + sum(w.size * 2 + b.size * 4 for w, b in packed_params))

    cparams = {"dimension_semantics": ("parallel",)}
    if tm > 512:
        # v5e scoped-VMEM default is 16 MiB; v7x physical VMEM is 64 MiB.
        cparams["vmem_limit_bytes"] = (32 if tm <= 1024 else 48) * 1024 * 1024

    kernel = make_autoencoder_kernel(bf16_act)

    def run(single_buffer_weights):
        return pl.pallas_call(
            kernel,
            out_shape=jax.ShapeDtypeStruct((B_pad, DIMS[-1]), out_dtype),
            grid_spec=pltpu.PrefetchScalarGridSpec(
                num_scalar_prefetch=0,
                grid=(B_pad // tm,),
                in_specs=build_in_specs(single_buffer_weights),
                out_specs=pl.BlockSpec((tm, DIMS[-1]), lambda i: (i, 0)),
            ),
            compiler_params=pltpu.CompilerParams(**cparams),
            cost_estimate=pl.CostEstimate(
                flops=flops,
                transcendentals=B_pad * DIMS[-1],
                bytes_accessed=bytes_accessed),
        )(*flat_args)

    try:
        out = run(single_buffer_weights=True)
    except Exception:
        # Fallback if this jax version rejects Buffered(1) single-buffering.
        out = run(single_buffer_weights=False)

    return out if B_pad == B else out[:B]


# ------------------------- references (for checking) -------------------------

def reference_forward_f32(x, params):
    h = x
    for li, (w, b) in enumerate(params):
        h = h @ w + b
        h = jnp.tanh(h) if li == len(params) - 1 else jnp.maximum(h, 0.0)
    return h


def reference_forward_bf16(x, params):
    """Same operand dtypes as the kernel (bf16 matmuls, f32 accumulate/bias)."""
    h = x.astype(jnp.bfloat16)
    for li, (w, b) in enumerate(params):
        y = jnp.dot(h, w.astype(jnp.bfloat16),
                    preferred_element_type=jnp.float32) + b
        if li == len(params) - 1:
            return jnp.tanh(y)
        h = jnp.maximum(y, 0.0).astype(jnp.bfloat16)


if __name__ == "__main__":
    key = jax.random.PRNGKey(0)
    kx, kp = jax.random.split(key)

    B = 64  # module's batch_size
    # flattened MNIST-like image batch, as produced by image.view(B, -1)
    x = jax.random.normal(kx, (B, DIMS[0]), jnp.float32)
    params = init_params(kp)
    packed = pack_params(params)          # hoisted out of the per-call path

    out = autoencoder_forward(x, packed)
    out = jax.block_until_ready(out)
    assert out.shape == (B, DIMS[-1])

    out_f32 = out.astype(jnp.float32)
    ref_bf16 = reference_forward_bf16(x, params)
    ref_f32 = reference_forward_f32(x, params)
    # Tight check vs dtype-matched reference (allows bf16 output quantization),
    # loose check vs pure-f32 PyTorch-equivalent math.
    assert jnp.allclose(out_f32, ref_bf16, atol=2e-2, rtol=2e-2)
    assert jnp.allclose(out_f32, ref_f32, atol=5e-2, rtol=5e-2)

    print("KERNEL_OK")
</pallas_src>

<mosaic_0001>
module attributes {stable_mosaic.version = 11 : i64} {
  func.func @kernel(%arg0: i32, %arg1: memref<32x784xf32, #tpu.memory_space<vmem>>, %arg2: memref<784x256xbf16, #tpu.memory_space<vmem>>, %arg3: memref<1x256xf32, #tpu.memory_space<vmem>>, %arg4: memref<256x128xbf16, #tpu.memory_space<vmem>>, %arg5: memref<1x128xf32, #tpu.memory_space<vmem>>, %arg6: memref<128x128xbf16, #tpu.memory_space<vmem>>, %arg7: memref<1x128xf32, #tpu.memory_space<vmem>>, %arg8: memref<128x128xbf16, #tpu.memory_space<vmem>>, %arg9: memref<1x128xf32, #tpu.memory_space<vmem>>, %arg10: memref<128x256xbf16, #tpu.memory_space<vmem>>, %arg11: memref<1x256xf32, #tpu.memory_space<vmem>>, %arg12: memref<256x784xbf16, #tpu.memory_space<vmem>>, %arg13: memref<1x784xf32, #tpu.memory_space<vmem>>, %arg14: memref<32x784xbf16, #tpu.memory_space<vmem>>) attributes {dimension_semantics = [#tpu.dimension_semantics<parallel>], iteration_bounds = array<i64: 2>, scalar_prefetch = 0 : i64, scratch_operands = 0 : i64, tpu.core_type = #tpu.core_type<tc>, window_params = [{transform_indices = @transform_0, window_bounds = array<i64: 32, 784>}, {pipeline_mode = #tpu.pipeline_mode<synchronous>, transform_indices = @transform_1, window_bounds = array<i64: 784, 256>}, {pipeline_mode = #tpu.pipeline_mode<synchronous>, transform_indices = @transform_2, window_bounds = array<i64: 1, 256>}, {pipeline_mode = #tpu.pipeline_mode<synchronous>, transform_indices = @transform_3, window_bounds = array<i64: 256, 128>}, {pipeline_mode = #tpu.pipeline_mode<synchronous>, transform_indices = @transform_4, window_bounds = array<i64: 1, 128>}, {pipeline_mode = #tpu.pipeline_mode<synchronous>, transform_indices = @transform_5, window_bounds = array<i64: 128, 128>}, {pipeline_mode = #tpu.pipeline_mode<synchronous>, transform_indices = @transform_6, window_bounds = array<i64: 1, 128>}, {pipeline_mode = #tpu.pipeline_mode<synchronous>, transform_indices = @transform_7, window_bounds = array<i64: 128, 128>}, {pipeline_mode = #tpu.pipeline_mode<synchronous>, transform_indices = @transform_8, window_bounds = array<i64: 1, 128>}, {pipeline_mode = #tpu.pipeline_mode<synchronous>, transform_indices = @transform_9, window_bounds = array<i64: 128, 256>}, {pipeline_mode = #tpu.pipeline_mode<synchronous>, transform_indices = @transform_10, window_bounds = array<i64: 1, 256>}, {pipeline_mode = #tpu.pipeline_mode<synchronous>, transform_indices = @transform_11, window_bounds = array<i64: 256, 784>}, {pipeline_mode = #tpu.pipeline_mode<synchronous>, transform_indices = @transform_12, window_bounds = array<i64: 1, 784>}, {transform_indices = @transform_13, window_bounds = array<i64: 32, 784>}]} {
    %c0 = arith.constant 0 : index
    %c0_0 = arith.constant 0 : index
    %0 = vector.load %arg1[%c0, %c0_0] : memref<32x784xf32, #tpu.memory_space<vmem>>, vector<32x784xf32>
    %1 = arith.truncf %0 : vector<32x784xf32> to vector<32x784xbf16>
    %c0_1 = arith.constant 0 : index
    %c0_2 = arith.constant 0 : index
    %2 = vector.load %arg2[%c0_1, %c0_2] : memref<784x256xbf16, #tpu.memory_space<vmem>>, vector<784x256xbf16>
    %cst = arith.constant dense<0.000000e+00> : vector<32x256xf32>
    %3 = tpu.matmul %1, %2, %cst {dimension_numbers = #tpu.dot_dimension_numbers<[1], [0], [0], [1], [0, 0, 1, 1], [], []>} : vector<32x784xbf16>, vector<784x256xbf16>, vector<32x256xf32> -> vector<32x256xf32>
    %c0_3 = arith.constant 0 : index
    %c0_4 = arith.constant 0 : index
    %4 = vector.load %arg3[%c0_3, %c0_4] : memref<1x256xf32, #tpu.memory_space<vmem>>, vector<1x256xf32>
    %5 = vector.broadcast %4 : vector<1x256xf32> to vector<32x256xf32>
    %6 = arith.addf %3, %5 : vector<32x256xf32>
    %7 = arith.truncf %6 : vector<32x256xf32> to vector<32x256xbf16>
    %cst_5 = arith.constant 0.000000e+00 : bf16
    %8 = vector.broadcast %cst_5 : bf16 to vector<32x256xbf16>
    %9 = arith.maximumf %7, %8 : vector<32x256xbf16>
    %c0_6 = arith.constant 0 : index
    %c0_7 = arith.constant 0 : index
    %10 = vector.load %arg4[%c0_6, %c0_7] : memref<256x128xbf16, #tpu.memory_space<vmem>>, vector<256x128xbf16>
    %cst_8 = arith.constant dense<0.000000e+00> : vector<32x128xf32>
    %11 = tpu.matmul %9, %10, %cst_8 {dimension_numbers = #tpu.dot_dimension_numbers<[1], [0], [0], [1], [0, 0, 1, 1], [], []>} : vector<32x256xbf16>, vector<256x128xbf16>, vector<32x128xf32> -> vector<32x128xf32>
    %c0_9 = arith.constant 0 : index
    %c0_10 = arith.constant 0 : index
    %12 = vector.load %arg5[%c0_9, %c0_10] : memref<1x128xf32, #tpu.memory_space<vmem>>, vector<1x128xf32>
    %13 = vector.broadcast %12 : vector<1x128xf32> to vector<32x128xf32>
    %14 = arith.addf %11, %13 : vector<32x128xf32>
    %15 = arith.truncf %14 : vector<32x128xf32> to vector<32x128xbf16>
    %cst_11 = arith.constant 0.000000e+00 : bf16
    %16 = vector.broadcast %cst_11 : bf16 to vector<32x128xbf16>
    %17 = arith.maximumf %15, %16 : vector<32x128xbf16>
    %c0_12 = arith.constant 0 : index
    %c0_13 = arith.constant 0 : index
    %18 = vector.load %arg6[%c0_12, %c0_13] : memref<128x128xbf16, #tpu.memory_space<vmem>>, vector<128x128xbf16>
    %cst_14 = arith.constant dense<0.000000e+00> : vector<32x128xf32>
    %19 = tpu.matmul %17, %18, %cst_14 {dimension_numbers = #tpu.dot_dimension_numbers<[1], [0], [0], [1], [0, 0, 1, 1], [], []>} : vector<32x128xbf16>, vector<128x128xbf16>, vector<32x128xf32> -> vector<32x128xf32>
    %c0_15 = arith.constant 0 : index
    %c0_16 = arith.constant 0 : index
    %20 = vector.load %arg7[%c0_15, %c0_16] : memref<1x128xf32, #tpu.memory_space<vmem>>, vector<1x128xf32>
    %21 = vector.broadcast %20 : vector<1x128xf32> to vector<32x128xf32>
    %22 = arith.addf %19, %21 : vector<32x128xf32>
    %23 = arith.truncf %22 : vector<32x128xf32> to vector<32x128xbf16>
    %cst_17 = arith.constant 0.000000e+00 : bf16
    %24 = vector.broadcast %cst_17 : bf16 to vector<32x128xbf16>
    %25 = arith.maximumf %23, %24 : vector<32x128xbf16>
    %c0_18 = arith.constant 0 : index
    %c0_19 = arith.constant 0 : index
    %26 = vector.load %arg8[%c0_18, %c0_19] : memref<128x128xbf16, #tpu.memory_space<vmem>>, vector<128x128xbf16>
    %cst_20 = arith.constant dense<0.000000e+00> : vector<32x128xf32>
    %27 = tpu.matmul %25, %26, %cst_20 {dimension_numbers = #tpu.dot_dimension_numbers<[1], [0], [0], [1], [0, 0, 1, 1], [], []>} : vector<32x128xbf16>, vector<128x128xbf16>, vector<32x128xf32> -> vector<32x128xf32>
    %c0_21 = arith.constant 0 : index
    %c0_22 = arith.constant 0 : index
    %28 = vector.load %arg9[%c0_21, %c0_22] : memref<1x128xf32, #tpu.memory_space<vmem>>, vector<1x128xf32>
    %29 = vector.broadcast %28 : vector<1x128xf32> to vector<32x128xf32>
    %30 = arith.addf %27, %29 : vector<32x128xf32>
    %31 = arith.truncf %30 : vector<32x128xf32> to vector<32x128xbf16>
    %cst_23 = arith.constant 0.000000e+00 : bf16
    %32 = vector.broadcast %cst_23 : bf16 to vector<32x128xbf16>
    %33 = arith.maximumf %31, %32 : vector<32x128xbf16>
    %c0_24 = arith.constant 0 : index
    %c0_25 = arith.constant 0 : index
    %34 = vector.load %arg10[%c0_24, %c0_25] : memref<128x256xbf16, #tpu.memory_space<vmem>>, vector<128x256xbf16>
    %cst_26 = arith.constant dense<0.000000e+00> : vector<32x256xf32>
    %35 = tpu.matmul %33, %34, %cst_26 {dimension_numbers = #tpu.dot_dimension_numbers<[1], [0], [0], [1], [0, 0, 1, 1], [], []>} : vector<32x128xbf16>, vector<128x256xbf16>, vector<32x256xf32> -> vector<32x256xf32>
    %c0_27 = arith.constant 0 : index
    %c0_28 = arith.constant 0 : index
    %36 = vector.load %arg11[%c0_27, %c0_28] : memref<1x256xf32, #tpu.memory_space<vmem>>, vector<1x256xf32>
    %37 = vector.broadcast %36 : vector<1x256xf32> to vector<32x256xf32>
    %38 = arith.addf %35, %37 : vector<32x256xf32>
    %39 = arith.truncf %38 : vector<32x256xf32> to vector<32x256xbf16>
    %cst_29 = arith.constant 0.000000e+00 : bf16
    %40 = vector.broadcast %cst_29 : bf16 to vector<32x256xbf16>
    %41 = arith.maximumf %39, %40 : vector<32x256xbf16>
    %c0_30 = arith.constant 0 : index
    %c0_31 = arith.constant 0 : index
    %42 = vector.load %arg12[%c0_30, %c0_31] : memref<256x784xbf16, #tpu.memory_space<vmem>>, vector<256x784xbf16>
    %cst_32 = arith.constant dense<0.000000e+00> : vector<32x784xf32>
    %43 = tpu.matmul %41, %42, %cst_32 {dimension_numbers = #tpu.dot_dimension_numbers<[1], [0], [0], [1], [0, 0, 1, 1], [], []>} : vector<32x256xbf16>, vector<256x784xbf16>, vector<32x784xf32> -> vector<32x784xf32>
    %c0_33 = arith.constant 0 : index
    %c0_34 = arith.constant 0 : index
    %44 = vector.load %arg13[%c0_33, %c0_34] : memref<1x784xf32, #tpu.memory_space<vmem>>, vector<1x784xf32>
    %45 = vector.broadcast %44 : vector<1x784xf32> to vector<32x784xf32>
    %46 = arith.addf %43, %45 : vector<32x784xf32>
    %47 = arith.truncf %46 : vector<32x784xf32> to vector<32x784xbf16>
    %48 = math.tanh %47 : vector<32x784xbf16>
    %c0_35 = arith.constant 0 : index
    %c0_36 = arith.constant 0 : index
    %49 = vector.load %arg14[%c0_35, %c0_36] : memref<32x784xbf16, #tpu.memory_space<vmem>>, vector<32x784xbf16>
    tpu.vector_store %arg14[%c0_35, %c0_36], %48 {strides = array<i32>} : memref<32x784xbf16, #tpu.memory_space<vmem>>, vector<32x784xbf16>,
    return
  }
  func.func @transform_0(%arg0: i32) -> (i32, i32) {
    %c0_i32 = arith.constant 0 : i32
    %c0_i32_0 = arith.constant 0 : i32
    return %arg0, %c0_i32 : i32, i32
  }
  func.func @transform_1(%arg0: i32) -> (i32, i32) {
    %c0_i32 = arith.constant 0 : i32
    %c0_i32_0 = arith.constant 0 : i32
    %c0_i32_1 = arith.constant 0 : i32
    return %c0_i32, %c0_i32_0 : i32, i32
  }
  func.func @transform_2(%arg0: i32) -> (i32, i32) {
    %c0_i32 = arith.constant 0 : i32
    %c0_i32_0 = arith.constant 0 : i32
    %c0_i32_1 = arith.constant 0 : i32
    return %c0_i32, %c0_i32_0 : i32, i32
  }
  func.func @transform_3(%arg0: i32) -> (i32, i32) {
    %c0_i32 = arith.constant 0 : i32
    %c0_i32_0 = arith.constant 0 : i32
    %c0_i32_1 = arith.constant 0 : i32
    return %c0_i32, %c0_i32_0 : i32, i32
  }
  func.func @transform_4(%arg0: i32) -> (i32, i32) {
    %c0_i32 = arith.constant 0 : i32
    %c0_i32_0 = arith.constant 0 : i32
    %c0_i32_1 = arith.constant 0 : i32
    return %c0_i32, %c0_i32_0 : i32, i32
  }
  func.func @transform_5(%arg0: i32) -> (i32, i32) {
    %c0_i32 = arith.constant 0 : i32
    %c0_i32_0 = arith.constant 0 : i32
    %c0_i32_1 = arith.constant 0 : i32
    return %c0_i32, %c0_i32_0 : i32, i32
  }
  func.func @transform_6(%arg0: i32) -> (i32, i32) {
    %c0_i32 = arith.constant 0 : i32
    %c0_i32_0 = arith.constant 0 : i32
    %c0_i32_1 = arith.constant 0 : i32
    return %c0_i32, %c0_i32_0 : i32, i32
  }
  func.func @transform_7(%arg0: i32) -> (i32, i32) {
    %c0_i32 = arith.constant 0 : i32
    %c0_i32_0 = arith.constant 0 : i32
    %c0_i32_1 = arith.constant 0 : i32
    return %c0_i32, %c0_i32_0 : i32, i32
  }
  func.func @transform_8(%arg0: i32) -> (i32, i32) {
    %c0_i32 = arith.constant 0 : i32
    %c0_i32_0 = arith.constant 0 : i32
    %c0_i32_1 = arith.constant 0 : i32
    return %c0_i32, %c0_i32_0 : i32, i32
  }
  func.func @transform_9(%arg0: i32) -> (i32, i32) {
    %c0_i32 = arith.constant 0 : i32
    %c0_i32_0 = arith.constant 0 : i32
    %c0_i32_1 = arith.constant 0 : i32
    return %c0_i32, %c0_i32_0 : i32, i32
  }
  func.func @transform_10(%arg0: i32) -> (i32, i32) {
    %c0_i32 = arith.constant 0 : i32
    %c0_i32_0 = arith.constant 0 : i32
    %c0_i32_1 = arith.constant 0 : i32
    return %c0_i32, %c0_i32_0 : i32, i32
  }
  func.func @transform_11(%arg0: i32) -> (i32, i32) {
    %c0_i32 = arith.constant 0 : i32
    %c0_i32_0 = arith.constant 0 : i32
    %c0_i32_1 = arith.constant 0 : i32
    return %c0_i32, %c0_i32_0 : i32, i32
  }
  func.func @transform_12(%arg0: i32) -> (i32, i32) {
    %c0_i32 = arith.constant 0 : i32
    %c0_i32_0 = arith.constant 0 : i32
    %c0_i32_1 = arith.constant 0 : i32
    return %c0_i32, %c0_i32_0 : i32, i32
  }
  func.func @transform_13(%arg0: i32) -> (i32, i32) {
    %c0_i32 = arith.constant 0 : i32
    %c0_i32_0 = arith.constant 0 : i32
    return %arg0, %c0_i32 : i32, i32
  }
}

module attributes {stable_mosaic.version = 11 : i64} {
  func.func @kernel(%arg0: i32, %arg1: memref<32x784xf32, #tpu.memory_space<vmem>>, %arg2: memref<784x256xbf16, #tpu.memory_space<vmem>>, %arg3: memref<1x256xf32, #tpu.memory_space<vmem>>, %arg4: memref<256x128xbf16, #tpu.memory_space<vmem>>, %arg5: memref<1x128xf32, #tpu.memory_space<vmem>>, %arg6: memref<128x128xbf16, #tpu.memory_space<vmem>>, %arg7: memref<1x128xf32, #tpu.memory_space<vmem>>, %arg8: memref<128x128xbf16, #tpu.memory_space<vmem>>, %arg9: memref<1x128xf32, #tpu.memory_space<vmem>>, %arg10: memref<128x256xbf16, #tpu.memory_space<vmem>>, %arg11: memref<1x256xf32, #tpu.memory_space<vmem>>, %arg12: memref<256x784xbf16, #tpu.memory_space<vmem>>, %arg13: memref<1x784xf32, #tpu.memory_space<vmem>>, %arg14: memref<32x784xbf16, #tpu.memory_space<vmem>>) attributes {dimension_semantics = [#tpu.dimension_semantics<parallel>], iteration_bounds = array<i64: 2>, scalar_prefetch = 0 : i64, scratch_operands = 0 : i64, tpu.core_type = #tpu.core_type<tc>, window_params = [{transform_indices = @transform_0, window_bounds = array<i64: 32, 784>}, {pipeline_mode = #tpu.pipeline_mode<synchronous>, transform_indices = @transform_1, window_bounds = array<i64: 784, 256>}, {pipeline_mode = #tpu.pipeline_mode<synchronous>, transform_indices = @transform_2, window_bounds = array<i64: 1, 256>}, {pipeline_mode = #tpu.pipeline_mode<synchronous>, transform_indices = @transform_3, window_bounds = array<i64: 256, 128>}, {pipeline_mode = #tpu.pipeline_mode<synchronous>, transform_indices = @transform_4, window_bounds = array<i64: 1, 128>}, {pipeline_mode = #tpu.pipeline_mode<synchronous>, transform_indices = @transform_5, window_bounds = array<i64: 128, 128>}, {pipeline_mode = #tpu.pipeline_mode<synchronous>, transform_indices = @transform_6, window_bounds = array<i64: 1, 128>}, {pipeline_mode = #tpu.pipeline_mode<synchronous>, transform_indices = @transform_7, window_bounds = array<i64: 128, 128>}, {pipeline_mode = #tpu.pipeline_mode<synchronous>, transform_indices = @transform_8, window_bounds = array<i64: 1, 128>}, {pipeline_mode = #tpu.pipeline_mode<synchronous>, transform_indices = @transform_9, window_bounds = array<i64: 128, 256>}, {pipeline_mode = #tpu.pipeline_mode<synchronous>, transform_indices = @transform_10, window_bounds = array<i64: 1, 256>}, {pipeline_mode = #tpu.pipeline_mode<synchronous>, transform_indices = @transform_11, window_bounds = array<i64: 256, 784>}, {pipeline_mode = #tpu.pipeline_mode<synchronous>, transform_indices = @transform_12, window_bounds = array<i64: 1, 784>}, {transform_indices = @transform_13, window_bounds = array<i64: 32, 784>}]} {
    %c0 = arith.constant 0 : index
    %c0_0 = arith.constant 0 : index
    %0 = vector.load %arg1[%c0, %c0_0] : memref<32x784xf32, #tpu.memory_space<vmem>>, vector<32x784xf32>
    %1 = arith.truncf %0 : vector<32x784xf32> to vector<32x784xbf16>
    %c0_1 = arith.constant 0 : index
    %c0_2 = arith.constant 0 : index
    %2 = vector.load %arg2[%c0_1, %c0_2] : memref<784x256xbf16, #tpu.memory_space<vmem>>, vector<784x256xbf16>
    %cst = arith.constant dense<0.000000e+00> : vector<32x256xf32>
    %3 = tpu.matmul %1, %2, %cst {dimension_numbers = #tpu.dot_dimension_numbers<[1], [0], [0], [1], [0, 0, 1, 1], [], []>} : vector<32x784xbf16>, vector<784x256xbf16>, vector<32x256xf32> -> vector<32x256xf32>
    %c0_3 = arith.constant 0 : index
    %c0_4 = arith.constant 0 : index
    %4 = vector.load %arg3[%c0_3, %c0_4] : memref<1x256xf32, #tpu.memory_space<vmem>>, vector<1x256xf32>
    %5 = vector.broadcast %4 : vector<1x256xf32> to vector<32x256xf32>
    %6 = arith.addf %3, %5 : vector<32x256xf32>
    %7 = arith.truncf %6 : vector<32x256xf32> to vector<32x256xbf16>
    %cst_5 = arith.constant 0.000000e+00 : bf16
    %8 = vector.broadcast %cst_5 : bf16 to vector<32x256xbf16>
    %9 = arith.maximumf %7, %8 : vector<32x256xbf16>
    %c0_6 = arith.constant 0 : index
    %c0_7 = arith.constant 0 : index
    %10 = vector.load %arg4[%c0_6, %c0_7] : memref<256x128xbf16, #tpu.memory_space<vmem>>, vector<256x128xbf16>
    %cst_8 = arith.constant dense<0.000000e+00> : vector<32x128xf32>
    %11 = tpu.matmul %9, %10, %cst_8 {dimension_numbers = #tpu.dot_dimension_numbers<[1], [0], [0], [1], [0, 0, 1, 1], [], []>} : vector<32x256xbf16>, vector<256x128xbf16>, vector<32x128xf32> -> vector<32x128xf32>
    %c0_9 = arith.constant 0 : index
    %c0_10 = arith.constant 0 : index
    %12 = vector.load %arg5[%c0_9, %c0_10] : memref<1x128xf32, #tpu.memory_space<vmem>>, vector<1x128xf32>
    %13 = vector.broadcast %12 : vector<1x128xf32> to vector<32x128xf32>
    %14 = arith.addf %11, %13 : vector<32x128xf32>
    %15 = arith.truncf %14 : vector<32x128xf32> to vector<32x128xbf16>
    %cst_11 = arith.constant 0.000000e+00 : bf16
    %16 = vector.broadcast %cst_11 : bf16 to vector<32x128xbf16>
    %17 = arith.maximumf %15, %16 : vector<32x128xbf16>
    %c0_12 = arith.constant 0 : index
    %c0_13 = arith.constant 0 : index
    %18 = vector.load %arg6[%c0_12, %c0_13] : memref<128x128xbf16, #tpu.memory_space<vmem>>, vector<128x128xbf16>
    %cst_14 = arith.constant dense<0.000000e+00> : vector<32x128xf32>
    %19 = tpu.matmul %17, %18, %cst_14 {dimension_numbers = #tpu.dot_dimension_numbers<[1], [0], [0], [1], [0, 0, 1, 1], [], []>} : vector<32x128xbf16>, vector<128x128xbf16>, vector<32x128xf32> -> vector<32x128xf32>
    %c0_15 = arith.constant 0 : index
    %c0_16 = arith.constant 0 : index
    %20 = vector.load %arg7[%c0_15, %c0_16] : memref<1x128xf32, #tpu.memory_space<vmem>>, vector<1x128xf32>
    %21 = vector.broadcast %20 : vector<1x128xf32> to vector<32x128xf32>
    %22 = arith.addf %19, %21 : vector<32x128xf32>
    %23 = arith.truncf %22 : vector<32x128xf32> to vector<32x128xbf16>
    %cst_17 = arith.constant 0.000000e+00 : bf16
    %24 = vector.broadcast %cst_17 : bf16 to vector<32x128xbf16>
    %25 = arith.maximumf %23, %24 : vector<32x128xbf16>
    %c0_18 = arith.constant 0 : index
    %c0_19 = arith.constant 0 : index
    %26 = vector.load %arg8[%c0_18, %c0_19] : memref<128x128xbf16, #tpu.memory_space<vmem>>, vector<128x128xbf16>
    %cst_20 = arith.constant dense<0.000000e+00> : vector<32x128xf32>
    %27 = tpu.matmul %25, %26, %cst_20 {dimension_numbers = #tpu.dot_dimension_numbers<[1], [0], [0], [1], [0, 0, 1, 1], [], []>} : vector<32x128xbf16>, vector<128x128xbf16>, vector<32x128xf32> -> vector<32x128xf32>
    %c0_21 = arith.constant 0 : index
    %c0_22 = arith.constant 0 : index
    %28 = vector.load %arg9[%c0_21, %c0_22] : memref<1x128xf32, #tpu.memory_space<vmem>>, vector<1x128xf32>
    %29 = vector.broadcast %28 : vector<1x128xf32> to vector<32x128xf32>
    %30 = arith.addf %27, %29 : vector<32x128xf32>
    %31 = arith.truncf %30 : vector<32x128xf32> to vector<32x128xbf16>
    %cst_23 = arith.constant 0.000000e+00 : bf16
    %32 = vector.broadcast %cst_23 : bf16 to vector<32x128xbf16>
    %33 = arith.maximumf %31, %32 : vector<32x128xbf16>
    %c0_24 = arith.constant 0 : index
    %c0_25 = arith.constant 0 : index
    %34 = vector.load %arg10[%c0_24, %c0_25] : memref<128x256xbf16, #tpu.memory_space<vmem>>, vector<128x256xbf16>
    %cst_26 = arith.constant dense<0.000000e+00> : vector<32x256xf32>
    %35 = tpu.matmul %33, %34, %cst_26 {dimension_numbers = #tpu.dot_dimension_numbers<[1], [0], [0], [1], [0, 0, 1, 1], [], []>} : vector<32x128xbf16>, vector<128x256xbf16>, vector<32x256xf32> -> vector<32x256xf32>
    %c0_27 = arith.constant 0 : index
    %c0_28 = arith.constant 0 : index
    %36 = vector.load %arg11[%c0_27, %c0_28] : memref<1x256xf32, #tpu.memory_space<vmem>>, vector<1x256xf32>
    %37 = vector.broadcast %36 : vector<1x256xf32> to vector<32x256xf32>
    %38 = arith.addf %35, %37 : vector<32x256xf32>
    %39 = arith.truncf %38 : vector<32x256xf32> to vector<32x256xbf16>
    %cst_29 = arith.constant 0.000000e+00 : bf16
    %40 = vector.broadcast %cst_29 : bf16 to vector<32x256xbf16>
    %41 = arith.maximumf %39, %40 : vector<32x256xbf16>
    %c0_30 = arith.constant 0 : index
    %c0_31 = arith.constant 0 : index
    %42 = vector.load %arg12[%c0_30, %c0_31] : memref<256x784xbf16, #tpu.memory_space<vmem>>, vector<256x784xbf16>
    %cst_32 = arith.constant dense<0.000000e+00> : vector<32x784xf32>
    %43 = tpu.matmul %41, %42, %cst_32 {dimension_numbers = #tpu.dot_dimension_numbers<[1], [0], [0], [1], [0, 0, 1, 1], [], []>} : vector<32x256xbf16>, vector<256x784xbf16>, vector<32x784xf32> -> vector<32x784xf32>
    %c0_33 = arith.constant 0 : index
    %c0_34 = arith.constant 0 : index
    %44 = vector.load %arg13[%c0_33, %c0_34] : memref<1x784xf32, #tpu.memory_space<vmem>>, vector<1x784xf32>
    %45 = vector.broadcast %44 : vector<1x784xf32> to vector<32x784xf32>
    %46 = arith.addf %43, %45 : vector<32x784xf32>
    %47 = arith.truncf %46 : vector<32x784xf32> to vector<32x784xbf16>
    %48 = math.tanh %47 : vector<32x784xbf16>
    %c0_35 = arith.constant 0 : index
    %c0_36 = arith.constant 0 : index
    %49 = vector.load %arg14[%c0_35, %c0_36] : memref<32x784xbf16, #tpu.memory_space<vmem>>, vector<32x784xbf16>
    tpu.vector_store %arg14[%c0_35, %c0_36], %48 {strides = array<i32>} : memref<32x784xbf16, #tpu.memory_space<vmem>>, vector<32x784xbf16>,
    return
  }
  func.func @transform_0(%arg0: i32) -> (i32, i32) {
    %c0_i32 = arith.constant 0 : i32
    %c0_i32_0 = arith.constant 0 : i32
    return %arg0, %c0_i32 : i32, i32
  }
  func.func @transform_1(%arg0: i32) -> (i32, i32) {
    %c0_i32 = arith.constant 0 : i32
    %c0_i32_0 = arith.constant 0 : i32
    %c0_i32_1 = arith.constant 0 : i32
    return %c0_i32, %c0_i32_0 : i32, i32
  }
  func.func @transform_2(%arg0: i32) -> (i32, i32) {
    %c0_i32 = arith.constant 0 : i32
    %c0_i32_0 = arith.constant 0 : i32
    %c0_i32_1 = arith.constant 0 : i32
    return %c0_i32, %c0_i32_0 : i32, i32
  }
  func.func @transform_3(%arg0: i32) -> (i32, i32) {
    %c0_i32 = arith.constant 0 : i32
    %c0_i32_0 = arith.constant 0 : i32
    %c0_i32_1 = arith.constant 0 : i32
    return %c0_i32, %c0_i32_0 : i32, i32
  }
  func.func @transform_4(%arg0: i32) -> (i32, i32) {
    %c0_i32 = arith.constant 0 : i32
    %c0_i32_0 = arith.constant 0 : i32
    %c0_i32_1 = arith.constant 0 : i32
    return %c0_i32, %c0_i32_0 : i32, i32
  }
  func.func @transform_5(%arg0: i32) -> (i32, i32) {
    %c0_i32 = arith.constant 0 : i32
    %c0_i32_0 = arith.constant 0 : i32
    %c0_i32_1 = arith.constant 0 : i32
    return %c0_i32, %c0_i32_0 : i32, i32
  }
  func.func @transform_6(%arg0: i32) -> (i32, i32) {
    %c0_i32 = arith.constant 0 : i32
    %c0_i32_0 = arith.constant 0 : i32
    %c0_i32_1 = arith.constant 0 : i32
    return %c0_i32, %c0_i32_0 : i32, i32
  }
  func.func @transform_7(%arg0: i32) -> (i32, i32) {
    %c0_i32 = arith.constant 0 : i32
    %c0_i32_0 = arith.constant 0 : i32
    %c0_i32_1 = arith.constant 0 : i32
    return %c0_i32, %c0_i32_0 : i32, i32
  }
  func.func @transform_8(%arg0: i32) -> (i32, i32) {
    %c0_i32 = arith.constant 0 : i32
    %c0_i32_0 = arith.constant 0 : i32
    %c0_i32_1 = arith.constant 0 : i32
    return %c0_i32, %c0_i32_0 : i32, i32
  }
  func.func @transform_9(%arg0: i32) -> (i32, i32) {
    %c0_i32 = arith.constant 0 : i32
    %c0_i32_0 = arith.constant 0 : i32
    %c0_i32_1 = arith.constant 0 : i32
    return %c0_i32, %c0_i32_0 : i32, i32
  }
  func.func @transform_10(%arg0: i32) -> (i32, i32) {
    %c0_i32 = arith.constant 0 : i32
    %c0_i32_0 = arith.constant 0 : i32
    %c0_i32_1 = arith.constant 0 : i32
    return %c0_i32, %c0_i32_0 : i32, i32
  }
  func.func @transform_11(%arg0: i32) -> (i32, i32) {
    %c0_i32 = arith.constant 0 : i32
    %c0_i32_0 = arith.constant 0 : i32
    %c0_i32_1 = arith.constant 0 : i32
    return %c0_i32, %c0_i32_0 : i32, i32
  }
  func.func @transform_12(%arg0: i32) -> (i32, i32) {
    %c0_i32 = arith.constant 0 : i32
    %c0_i32_0 = arith.constant 0 : i32
    %c0_i32_1 = arith.constant 0 : i32
    return %c0_i32, %c0_i32_0 : i32, i32
  }
  func.func @transform_13(%arg0: i32) -> (i32, i32) {
    %c0_i32 = arith.constant 0 : i32
    %c0_i32_0 = arith.constant 0 : i32
    return %arg0, %c0_i32 : i32, i32
  }
}

</mosaic_0001>

<llo_original>
// kernel: tpu_custom_call.1
$region0: #{tpu_custom_call.1}
  #allocation0 [shape = 'u32[]', space=smem, size = 0x4, offset = 0x4, fixed_abs, tag = 'smem constant byte address 0x4 - core index']
  #allocation1 [shape = 'u32[144,128]{1,0:T(1,128)}', space=vmem, size = 0x12000, scoped, tag = 'internal scratch']
  %s0 = inlined_call_operand.vmem [shape: f32[64,784], index: 0, kind: input, shape index: {}]
  %s1 = inlined_call_operand.vmem [shape: bf16[784,256], index: 1, kind: input, shape index: {}]
  %s2 = inlined_call_operand.vmem [shape: f32[1,256], index: 2, kind: input, shape index: {}]
  %s3 = inlined_call_operand.vmem [shape: bf16[256,128], index: 3, kind: input, shape index: {}]
  %s4 = inlined_call_operand.vmem [shape: f32[1,128], index: 4, kind: input, shape index: {}]
  %s5 = inlined_call_operand.vmem [shape: bf16[128,128], index: 5, kind: input, shape index: {}]
  %s6 = inlined_call_operand.vmem [shape: f32[1,128], index: 6, kind: input, shape index: {}]
  %s7 = inlined_call_operand.vmem [shape: bf16[128,128], index: 7, kind: input, shape index: {}]
  %s8 = inlined_call_operand.vmem [shape: f32[1,128], index: 8, kind: input, shape index: {}]
  %s9 = inlined_call_operand.vmem [shape: bf16[128,256], index: 9, kind: input, shape index: {}]
  %s10 = inlined_call_operand.vmem [shape: f32[1,256], index: 10, kind: input, shape index: {}]
  %s11 = inlined_call_operand.vmem [shape: bf16[256,784], index: 11, kind: input, shape index: {}]
  %s12 = inlined_call_operand.vmem [shape: f32[1,784], index: 12, kind: input, shape index: {}]
  %s13 = inlined_call_operand.hbm [shape: bf16[64,784], index: 13, kind: output, shape index: {}]
  %s14 = sld [smem:[#allocation0]]
  $region85: #{tpu_custom_call.1} parent=0
    _
  %s16 = ssub.s32 1, %s14
  %s17 = scalar_select 0, %s16, %s14
  $region1: #{tpu_custom_call.1} parent=0
    #allocation2 [shape = 'u8[114688]{0}', space=vmem, size = 0x1c000, scoped, tag = 'output window, operand 0']
    #allocation3 [shape = 's32[2]{0}', space=sflag, size = 0x8, scoped, tag = 'scoped memory for tpu_custom_call.1']
    %18 = vsyncpa [#allocation3], 0
    %s19 = scalar_lea.sflag [#allocation3], 1
    %20 = vsyncpa %s19, 0
    loop: start=0, step=1, limit=4
    $region2: #{tpu_custom_call.1} parent=1 // loop_pre_header
      _
    $region3: #{tpu_custom_call.1} parent=1 // loop_header
      %s22 = sphi 0, %s26
      %p23 = scmp.ge.s32.totalorder %s22, 4
      %s32 = sphi 0, %s34
      %s35 = sphi 0, %s32
      %s36 = sphi 0, %s35
      %s52 = sphi 0, %s36
      %s56 = sphi 0, %s56
      %s58 = sphi 0, %s56
      %s59 = sphi 0, %s58
      %s73 = sphi 0, %s59
      %s77 = sphi 0, %s77
      %s79 = sphi 0, %s77
      %s80 = sphi 0, %s79
      %s94 = sphi 0, %s80
      %s98 = sphi 0, %s98
      %s100 = sphi 0, %s98
      %s101 = sphi 0, %s100
      %s115 = sphi 0, %s101
      %s119 = sphi 0, %s119
      %s121 = sphi 0, %s119
      %s122 = sphi 0, %s121
      %s136 = sphi 0, %s122
      %s140 = sphi 0, %s140
      %s142 = sphi 0, %s140
      %s143 = sphi 0, %s142
      %s157 = sphi 0, %s143
      %s161 = sphi 0, %s161
      %s163 = sphi 0, %s161
      %s164 = sphi 0, %s163
      %s178 = sphi 0, %s164
      %s182 = sphi 0, %s182
      %s184 = sphi 0, %s182
      %s185 = sphi 0, %s184
      %s199 = sphi 0, %s185
      %s203 = sphi 0, %s203
      %s205 = sphi 0, %s203
      %s206 = sphi 0, %s205
      %s220 = sphi 0, %s206
      %s224 = sphi 0, %s224
      %s226 = sphi 0, %s224
      %s227 = sphi 0, %s226
      %s241 = sphi 0, %s227
      %s245 = sphi 0, %s245
      %s247 = sphi 0, %s245
      %s248 = sphi 0, %s247
      %s262 = sphi 0, %s248
      %s266 = sphi 0, %s266
      %s268 = sphi 0, %s266
      %s269 = sphi 0, %s268
      %s283 = sphi 0, %s269
      %s287 = sphi 0, %s287
      %s289 = sphi 0, %s287
      %s290 = sphi 0, %s289
      %s304 = sphi 0, %s290
      %s310 = sphi 0, %s312
      %s313 = sphi 0, %s310
      %s314 = sphi 0, %s313
      %s330 = sphi 0, %s314
    $region4: #{tpu_custom_call.1} parent=1 // loop_header_branch
      %25 = sbr.rel (%p23) target = $region8
    $region5: #{tpu_custom_call.1} parent=1 // loop_body
      %s27 = ssub.s32 %s22, 1
      %s28 = ssub.s32 %s22, 2
      %s29 = sadd.s32 %s22, 1
      %s30 = ssub.s32 %s22, %s29
      %p31 = scmp.eq.s32.totalorder %s30, 0
      %s33 = sadd.s32 %s32, 1
      %s34 = scalar_select %p31, %s32, %s33
      %p37 = pneg %p31
      %p38 = scmp.eq.s32.totalorder %s22, 1
      %p39 = por %p37, %p38
      %p40 = scmp.ne.s32.totalorder %s32, %s35
      %p41 = scmp.eq.s32.totalorder %s22, 0
      %p42 = por %p40, %p41
      %p43 = scmp.ne.s32.totalorder %s32, %s35
      %p44 = scmp.eq.s32.totalorder %s27, 1
      %p45 = por %p43, %p44
      %p46 = scmp.ne.s32.totalorder %s35, %s36
      %p47 = scmp.eq.s32.totalorder %s27, 0
      %p48 = por %p46, %p47
      %p49 = scmp.ne.s32.totalorder %s35, %s36
      %p50 = scmp.eq.s32.totalorder %s28, 1
      %p51 = por %p49, %p50
      %p53 = scmp.ne.s32.totalorder %s36, %s52
      %p54 = scmp.eq.s32.totalorder %s28, 0
      %p55 = por %p53, %p54
      %s57 = sadd.s32 %s56, 1
      %p60 = scmp.eq.s32.totalorder %s22, 1
      %p61 = scmp.ne.s32.totalorder %s56, %s58
      %p62 = scmp.eq.s32.totalorder %s22, 0
      %p63 = por %p61, %p62
      %p64 = scmp.ne.s32.totalorder %s56, %s58
      %p65 = scmp.eq.s32.totalorder %s27, 1
      %p66 = por %p64, %p65
      %p67 = scmp.ne.s32.totalorder %s58, %s59
      %p68 = scmp.eq.s32.totalorder %s27, 0
      %p69 = por %p67, %p68
      %p70 = scmp.ne.s32.totalorder %s58, %s59
      %p71 = scmp.eq.s32.totalorder %s28, 1
      %p72 = por %p70, %p71
      %p74 = scmp.ne.s32.totalorder %s59, %s73
      %p75 = scmp.eq.s32.totalorder %s28, 0
      %p76 = por %p74, %p75
      %s78 = sadd.s32 %s77, 1
      %p81 = scmp.eq.s32.totalorder %s22, 1
      %p82 = scmp.ne.s32.totalorder %s77, %s79
      %p83 = scmp.eq.s32.totalorder %s22, 0
      %p84 = por %p82, %p83
      %p85 = scmp.ne.s32.totalorder %s77, %s79
      %p86 = scmp.eq.s32.totalorder %s27, 1
      %p87 = por %p85, %p86
      %p88 = scmp.ne.s32.totalorder %s79, %s80
      %p89 = scmp.eq.s32.totalorder %s27, 0
      %p90 = por %p88, %p89
      %p91 = scmp.ne.s32.totalorder %s79, %s80
      %p92 = scmp.eq.s32.totalorder %s28, 1
      %p93 = por %p91, %p92
      %p95 = scmp.ne.s32.totalorder %s80, %s94
      %p96 = scmp.eq.s32.totalorder %s28, 0
      %p97 = por %p95, %p96
      %s99 = sadd.s32 %s98, 1
      %p102 = scmp.eq.s32.totalorder %s22, 1
      %p103 = scmp.ne.s32.totalorder %s98, %s100
      %p104 = scmp.eq.s32.totalorder %s22, 0
      %p105 = por %p103, %p104
      %p106 = scmp.ne.s32.totalorder %s98, %s100
      %p107 = scmp.eq.s32.totalorder %s27, 1
      %p108 = por %p106, %p107
      %p109 = scmp.ne.s32.totalorder %s100, %s101
      %p110 = scmp.eq.s32.totalorder %s27, 0
      %p111 = por %p109, %p110
      %p112 = scmp.ne.s32.totalorder %s100, %s101
      %p113 = scmp.eq.s32.totalorder %s28, 1
      %p114 = por %p112, %p113
      %p116 = scmp.ne.s32.totalorder %s101, %s115
      %p117 = scmp.eq.s32.totalorder %s28, 0
      %p118 = por %p116, %p117
      %s120 = sadd.s32 %s119, 1
      %p123 = scmp.eq.s32.totalorder %s22, 1
      %p124 = scmp.ne.s32.totalorder %s119, %s121
      %p125 = scmp.eq.s32.totalorder %s22, 0
      %p126 = por %p124, %p125
      %p127 = scmp.ne.s32.totalorder %s119, %s121
      %p128 = scmp.eq.s32.totalorder %s27, 1
      %p129 = por %p127, %p128
      %p130 = scmp.ne.s32.totalorder %s121, %s122
      %p131 = scmp.eq.s32.totalorder %s27, 0
      %p132 = por %p130, %p131
      %p133 = scmp.ne.s32.totalorder %s121, %s122
      %p134 = scmp.eq.s32.totalorder %s28, 1
      %p135 = por %p133, %p134
      %p137 = scmp.ne.s32.totalorder %s122, %s136
      %p138 = scmp.eq.s32.totalorder %s28, 0
      %p139 = por %p137, %p138
      %s141 = sadd.s32 %s140, 1
      %p144 = scmp.eq.s32.totalorder %s22, 1
      %p145 = scmp.ne.s32.totalorder %s140, %s142
      %p146 = scmp.eq.s32.totalorder %s22, 0
      %p147 = por %p145, %p146
      %p148 = scmp.ne.s32.totalorder %s140, %s142
      %p149 = scmp.eq.s32.totalorder %s27, 1
      %p150 = por %p148, %p149
      %p151 = scmp.ne.s32.totalorder %s142, %s143
      %p152 = scmp.eq.s32.totalorder %s27, 0
      %p153 = por %p151, %p152
      %p154 = scmp.ne.s32.totalorder %s142, %s143
      %p155 = scmp.eq.s32.totalorder %s28, 1
      %p156 = por %p154, %p155
      %p158 = scmp.ne.s32.totalorder %s143, %s157
      %p159 = scmp.eq.s32.totalorder %s28, 0
      %p160 = por %p158, %p159
      %s162 = sadd.s32 %s161, 1
      %p165 = scmp.eq.s32.totalorder %s22, 1
      %p166 = scmp.ne.s32.totalorder %s161, %s163
      %p167 = scmp.eq.s32.totalorder %s22, 0
      %p168 = por %p166, %p167
      %p169 = scmp.ne.s32.totalorder %s161, %s163
      %p170 = scmp.eq.s32.totalorder %s27, 1
      %p171 = por %p169, %p170
      %p172 = scmp.ne.s32.totalorder %s163, %s164
      %p173 = scmp.eq.s32.totalorder %s27, 0
      %p174 = por %p172, %p173
      %p175 = scmp.ne.s32.totalorder %s163, %s164
      %p176 = scmp.eq.s32.totalorder %s28, 1
      %p177 = por %p175, %p176
      %p179 = scmp.ne.s32.totalorder %s164, %s178
      %p180 = scmp.eq.s32.totalorder %s28, 0
      %p181 = por %p179, %p180
      %s183 = sadd.s32 %s182, 1
      %p186 = scmp.eq.s32.totalorder %s22, 1
      %p187 = scmp.ne.s32.totalorder %s182, %s184
      %p188 = scmp.eq.s32.totalorder %s22, 0
      %p189 = por %p187, %p188
      %p190 = scmp.ne.s32.totalorder %s182, %s184
      %p191 = scmp.eq.s32.totalorder %s27, 1
      %p192 = por %p190, %p191
      %p193 = scmp.ne.s32.totalorder %s184, %s185
      %p194 = scmp.eq.s32.totalorder %s27, 0
      %p195 = por %p193, %p194
      %p196 = scmp.ne.s32.totalorder %s184, %s185
      %p197 = scmp.eq.s32.totalorder %s28, 1
      %p198 = por %p196, %p197
      %p200 = scmp.ne.s32.totalorder %s185, %s199
      %p201 = scmp.eq.s32.totalorder %s28, 0
      %p202 = por %p200, %p201
      %s204 = sadd.s32 %s203, 1
      %p207 = scmp.eq.s32.totalorder %s22, 1
      %p208 = scmp.ne.s32.totalorder %s203, %s205
      %p209 = scmp.eq.s32.totalorder %s22, 0
      %p210 = por %p208, %p209
      %p211 = scmp.ne.s32.totalorder %s203, %s205
      %p212 = scmp.eq.s32.totalorder %s27, 1
      %p213 = por %p211, %p212
      %p214 = scmp.ne.s32.totalorder %s205, %s206
      %p215 = scmp.eq.s32.totalorder %s27, 0
      %p216 = por %p214, %p215
      %p217 = scmp.ne.s32.totalorder %s205, %s206
      %p218 = scmp.eq.s32.totalorder %s28, 1
      %p219 = por %p217, %p218
      %p221 = scmp.ne.s32.totalorder %s206, %s220
      %p222 = scmp.eq.s32.totalorder %s28, 0
      %p223 = por %p221, %p222
      %s225 = sadd.s32 %s224, 1
      %p228 = scmp.eq.s32.totalorder %s22, 1
      %p229 = scmp.ne.s32.totalorder %s224, %s226
      %p230 = scmp.eq.s32.totalorder %s22, 0
      %p231 = por %p229, %p230
      %p232 = scmp.ne.s32.totalorder %s224, %s226
      %p233 = scmp.eq.s32.totalorder %s27, 1
      %p234 = por %p232, %p233
      %p235 = scmp.ne.s32.totalorder %s226, %s227
      %p236 = scmp.eq.s32.totalorder %s27, 0
      %p237 = por %p235, %p236
      %p238 = scmp.ne.s32.totalorder %s226, %s227
      %p239 = scmp.eq.s32.totalorder %s28, 1
      %p240 = por %p238, %p239
      %p242 = scmp.ne.s32.totalorder %s227, %s241
      %p243 = scmp.eq.s32.totalorder %s28, 0
      %p244 = por %p242, %p243
      %s246 = sadd.s32 %s245, 1
      %p249 = scmp.eq.s32.totalorder %s22, 1
      %p250 = scmp.ne.s32.totalorder %s245, %s247
      %p251 = scmp.eq.s32.totalorder %s22, 0
      %p252 = por %p250, %p251
      %p253 = scmp.ne.s32.totalorder %s245, %s247
      %p254 = scmp.eq.s32.totalorder %s27, 1
      %p255 = por %p253, %p254
      %p256 = scmp.ne.s32.totalorder %s247, %s248
      %p257 = scmp.eq.s32.totalorder %s27, 0
      %p258 = por %p256, %p257
      %p259 = scmp.ne.s32.totalorder %s247, %s248
      %p260 = scmp.eq.s32.totalorder %s28, 1
      %p261 = por %p259, %p260
      %p263 = scmp.ne.s32.totalorder %s248, %s262
      %p264 = scmp.eq.s32.totalorder %s28, 0
      %p265 = por %p263, %p264
      %s267 = sadd.s32 %s266, 1
      %p270 = scmp.eq.s32.totalorder %s22, 1
      %p271 = scmp.ne.s32.totalorder %s266, %s268
      %p272 = scmp.eq.s32.totalorder %s22, 0
      %p273 = por %p271, %p272
      %p274 = scmp.ne.s32.totalorder %s266, %s268
      %p275 = scmp.eq.s32.totalorder %s27, 1
      %p276 = por %p274, %p275
      %p277 = scmp.ne.s32.totalorder %s268, %s269
      %p278 = scmp.eq.s32.totalorder %s27, 0
      %p279 = por %p277, %p278
      %p280 = scmp.ne.s32.totalorder %s268, %s269
      %p281 = scmp.eq.s32.totalorder %s28, 1
      %p282 = por %p280, %p281
      %p284 = scmp.ne.s32.totalorder %s269, %s283
      %p285 = scmp.eq.s32.totalorder %s28, 0
      %p286 = por %p284, %p285
      %s288 = sadd.s32 %s287, 1
      %p291 = scmp.eq.s32.totalorder %s22, 1
      %p292 = scmp.ne.s32.totalorder %s287, %s289
      %p293 = scmp.eq.s32.totalorder %s22, 0
      %p294 = por %p292, %p293
      %p295 = scmp.ne.s32.totalorder %s287, %s289
      %p296 = scmp.eq.s32.totalorder %s27, 1
      %p297 = por %p295, %p296
      %p298 = scmp.ne.s32.totalorder %s289, %s290
      %p299 = scmp.eq.s32.totalorder %s27, 0
      %p300 = por %p298, %p299
      %p301 = scmp.ne.s32.totalorder %s289, %s290
      %p302 = scmp.eq.s32.totalorder %s28, 1
      %p303 = por %p301, %p302
      %p305 = scmp.ne.s32.totalorder %s290, %s304
      %p306 = scmp.eq.s32.totalorder %s28, 0
      %p307 = por %p305, %p306
      %s308 = ssub.s32 %s22, %s29
      %p309 = scmp.eq.s32.totalorder %s308, 0
      %s311 = sadd.s32 %s310, 1
      %s312 = scalar_select %p309, %s310, %s311
      %p315 = pneg %p309
      %p316 = scmp.eq.s32.totalorder %s22, 1
      %p317 = por %p315, %p316
      %p318 = scmp.ne.s32.totalorder %s310, %s313
      %p319 = scmp.eq.s32.totalorder %s22, 0
      %p320 = por %p318, %p319
      %p321 = scmp.ne.s32.totalorder %s310, %s313
      %p322 = scmp.eq.s32.totalorder %s27, 1
      %p323 = por %p321, %p322
      %p324 = scmp.ne.s32.totalorder %s313, %s314
      %p325 = scmp.eq.s32.totalorder %s27, 0
      %p326 = por %p324, %p325
      %p327 = scmp.ne.s32.totalorder %s313, %s314
      %p328 = scmp.eq.s32.totalorder %s28, 1
      %p329 = por %p327, %p328
      %p331 = scmp.ne.s32.totalorder %s314, %s330
      %p332 = scmp.eq.s32.totalorder %s28, 0
      %p333 = por %p331, %p332
      %p334 = scmp.le.s32.totalorder 1, %s22
      %p335 = scmp.lt.s32.totalorder %s22, 3
      %p336 = pnand %p334, %p335
      %p337 = pneg %p336
      // Predicated region
      $region9: #{tpu_custom_call.1} parent=5 // pred_check
        _
      $region10: #{tpu_custom_call.1} parent=5 // pred_check_branch
        %339 = sbr.rel (%p336) target = $region12
      $region11: #{tpu_custom_call.1} parent=5 // pred_region
        %s340 = ssub.s32 %s22, 1
        // Predicated region
        $region13: #{tpu_custom_call.1} parent=11 // pred_check
          %p341 = pneg %p69
        $region14: #{tpu_custom_call.1} parent=11 // pred_check_branch
          %343 = sbr.rel (%p341) target = $region16
        $region15: #{tpu_custom_call.1} parent=11 // pred_region
          _
        $region16: #{tpu_custom_call.1} parent=11 // pred_fallthru
          _
        // Predicated region
        $region17: #{tpu_custom_call.1} parent=11 // pred_check
          %p344 = pneg %p90
        $region18: #{tpu_custom_call.1} parent=11 // pred_check_branch
          %346 = sbr.rel (%p344) target = $region20
        $region19: #{tpu_custom_call.1} parent=11 // pred_region
          _
        $region20: #{tpu_custom_call.1} parent=11 // pred_fallthru
          _
        // Predicated region
        $region21: #{tpu_custom_call.1} parent=11 // pred_check
          %p347 = pneg %p111
        $region22: #{tpu_custom_call.1} parent=11 // pred_check_branch
          %349 = sbr.rel (%p347) target = $region24
        $region23: #{tpu_custom_call.1} parent=11 // pred_region
          _
        $region24: #{tpu_custom_call.1} parent=11 // pred_fallthru
          _
        // Predicated region
        $region25: #{tpu_custom_call.1} parent=11 // pred_check
          %p350 = pneg %p132
        $region26: #{tpu_custom_call.1} parent=11 // pred_check_branch
          %352 = sbr.rel (%p350) target = $region28
        $region27: #{tpu_custom_call.1} parent=11 // pred_region
          _
        $region28: #{tpu_custom_call.1} parent=11 // pred_fallthru
          _
        // Predicated region
        $region29: #{tpu_custom_call.1} parent=11 // pred_check
          %p353 = pneg %p153
        $region30: #{tpu_custom_call.1} parent=11 // pred_check_branch
          %355 = sbr.rel (%p353) target = $region32
        $region31: #{tpu_custom_call.1} parent=11 // pred_region
          _
        $region32: #{tpu_custom_call.1} parent=11 // pred_fallthru
          _
        // Predicated region
        $region33: #{tpu_custom_call.1} parent=11 // pred_check
          %p356 = pneg %p174
        $region34: #{tpu_custom_call.1} parent=11 // pred_check_branch
          %358 = sbr.rel (%p356) target = $region36
        $region35: #{tpu_custom_call.1} parent=11 // pred_region
          _
        $region36: #{tpu_custom_call.1} parent=11 // pred_fallthru
          _
        // Predicated region
        $region37: #{tpu_custom_call.1} parent=11 // pred_check
          %p359 = pneg %p195
        $region38: #{tpu_custom_call.1} parent=11 // pred_check_branch
          %361 = sbr.rel (%p359) target = $region40
        $region39: #{tpu_custom_call.1} parent=11 // pred_region
          _
        $region40: #{tpu_custom_call.1} parent=11 // pred_fallthru
          _
        // Predicated region
        $region41: #{tpu_custom_call.1} parent=11 // pred_check
          %p362 = pneg %p216
        $region42: #{tpu_custom_call.1} parent=11 // pred_check_branch
          %364 = sbr.rel (%p362) target = $region44
        $region43: #{tpu_custom_call.1} parent=11 // pred_region
          _
        $region44: #{tpu_custom_call.1} parent=11 // pred_fallthru
          _
        // Predicated region
        $region45: #{tpu_custom_call.1} parent=11 // pred_check
          %p365 = pneg %p237
        $region46: #{tpu_custom_call.1} parent=11 // pred_check_branch
          %367 = sbr.rel (%p365) target = $region48
        $region47: #{tpu_custom_call.1} parent=11 // pred_region
          _
        $region48: #{tpu_custom_call.1} parent=11 // pred_fallthru
          _
        // Predicated region
        $region49: #{tpu_custom_call.1} parent=11 // pred_check
          %p368 = pneg %p258
        $region50: #{tpu_custom_call.1} parent=11 // pred_check_branch
          %370 = sbr.rel (%p368) target = $region52
        $region51: #{tpu_custom_call.1} parent=11 // pred_region
          _
        $region52: #{tpu_custom_call.1} parent=11 // pred_fallthru
          _
        // Predicated region
        $region53: #{tpu_custom_call.1} parent=11 // pred_check
          %p371 = pneg %p279
        $region54: #{tpu_custom_call.1} parent=11 // pred_check_branch
          %373 = sbr.rel (%p371) target = $region56
        $region55: #{tpu_custom_call.1} parent=11 // pred_region
          _
        $region56: #{tpu_custom_call.1} parent=11 // pred_fallthru
          _
        // Predicated region
        $region57: #{tpu_custom_call.1} parent=11 // pred_check
          %p374 = pneg %p300
        $region58: #{tpu_custom_call.1} parent=11 // pred_check_branch
          %376 = sbr.rel (%p374) target = $region60
        $region59: #{tpu_custom_call.1} parent=11 // pred_region
          _
        $region60: #{tpu_custom_call.1} parent=11 // pred_fallthru
          _
      $region12: #{tpu_custom_call.1} parent=5 // pred_fallthru
        _
      %p377 = scmp.lt.s32.totalorder %s22, 2
      // Predicated region
      $region61: #{tpu_custom_call.1} parent=5 // pred_check
        %p378 = pneg %p377
      $region62: #{tpu_custom_call.1} parent=5 // pred_check_branch
        %380 = sbr.rel (%p378) target = $region64
      $region63: #{tpu_custom_call.1} parent=5 // pred_region
        // Predicated region
        $region65: #{tpu_custom_call.1} parent=63 // pred_check
          %p381 = pneg %p42
        $region66: #{tpu_custom_call.1} parent=63 // pred_check_branch
          %383 = sbr.rel (%p381) target = $region68
        $region67: #{tpu_custom_call.1} parent=63 // pred_region
          %s384 = smul.u32 4, %s22
          %p385 = scmp.lt.s32.totalorder %s384, 7
          %s386 = scalar_select %p385, %s384, 7
          %s387 = smul.addr %s386, 7
          %s388 = smul.addr %s387, 8
          %s389 = scalar_lea.vmem %s0, %s388
          %s390 = smul.u32 4, %s22
        $region68: #{tpu_custom_call.1} parent=63 // pred_fallthru
          _
      $region64: #{tpu_custom_call.1} parent=5 // pred_fallthru
        _
      %p391 = scmp.le.s32.totalorder 1, %s22
      %p392 = scmp.lt.s32.totalorder %s22, 3
      %p393 = pnand %p391, %p392
      %p394 = pneg %p393
      // Predicated region
      $region69: #{tpu_custom_call.1} parent=5 // pred_check
        _
      $region70: #{tpu_custom_call.1} parent=5 // pred_check_branch
        %396 = sbr.rel (%p393) target = $region72
      $region71: #{tpu_custom_call.1} parent=5 // pred_region
        %s397 = ssub.s32 %s22, 1
        %s398 = smul.u32 4, %s27
        %p399 = scmp.lt.s32.totalorder %s398, 7
        %s400 = scalar_select %p399, %s398, 7
        %s401 = smul.addr %s400, 7
        %s402 = smul.addr %s401, 8
        %s403 = scalar_lea.vmem %s0, %s402
        %p404 = pneg %p48
        %p405 = pneg %p45
        %p406 = pneg %p69
        %p407 = pneg %p66
        %p408 = pneg %p90
        %p409 = pneg %p87
        %p410 = pneg %p111
        %p411 = pneg %p108
        %p412 = pneg %p132
        %p413 = pneg %p129
        %p414 = pneg %p153
        %p415 = pneg %p150
        %p416 = pneg %p174
        %p417 = pneg %p171
        %p418 = pneg %p195
        %p419 = pneg %p192
        %p420 = pneg %p216
        %p421 = pneg %p213
        %p422 = pneg %p237
        %p423 = pneg %p234
        %p424 = pneg %p258
        %p425 = pneg %p255
        %p426 = pneg %p279
        %p427 = pneg %p276
        %p428 = pneg %p300
        %p429 = pneg %p297
        %p430 = pneg %p326
        %p431 = pneg %p323
        %s432 = sand.u32 %s313, 1
        %s433 = scalar_lea.sflag [#allocation3], %s432
        %s434 = sand.u32 %s313, 1
        %s435 = smul.addr %s434, 112
        %s436 = scalar_lea.vmem [#allocation2], %s435
        %s437 = smul.u32 4, %s27
        %p438 = scmp.lt.s32.totalorder %s437, 7
        %s439 = scalar_select %p438, %s437, 7
        %s440 = smul.addr %s439, 7
        %s441 = smul.addr %s440, 8
        %s442 = scalar_lea.vmem %s0, %s441
        %s443 = smul.u32 4, %s27
        %s444 = smul.u32 4, %s27
        %v446 = vld [vmem:[%s442] sm:$0xff]
        %v447 = vld [vmem:[%s442 + $0x8] sm:$0xff]
        %v448 = vld [vmem:[%s442 + $0x10] sm:$0xff]
        %v449 = vld [vmem:[%s442 + $0x18] sm:$0xff]
        %v450 = vld [vmem:[%s442 + $0x20] sm:$0xff]
        %v451 = vld [vmem:[%s442 + $0x28] sm:$0xff]
        %v452 = vld [vmem:[%s442 + $0x30] sm:$0xff]
        %v453 = vld [vmem:[%s442 + $0x38] sm:$0xff]
        %v454 = vld [vmem:[%s442 + $0x40] sm:$0xff]
        %v455 = vld [vmem:[%s442 + $0x48] sm:$0xff]
        %v456 = vld [vmem:[%s442 + $0x50] sm:$0xff]
        %v457 = vld [vmem:[%s442 + $0x58] sm:$0xff]
        %v458 = vld [vmem:[%s442 + $0x60] sm:$0xff]
        %v459 = vld [vmem:[%s442 + $0x68] sm:$0xff]
        %v460 = vld [vmem:[%s442 + $0x70] sm:$0xff]
        %v461 = vld [vmem:[%s442 + $0x78] sm:$0xff]
        %v462 = vld [vmem:[%s442 + $0x80] sm:$0xff]
        %v463 = vld [vmem:[%s442 + $0x88] sm:$0xff]
        %v464 = vld [vmem:[%s442 + $0x90] sm:$0xff]
        %v465 = vld [vmem:[%s442 + $0x98] sm:$0xff]
        %v466 = vld [vmem:[%s442 + $0xa0] sm:$0xff]
        %v467 = vld [vmem:[%s442 + $0xa8] sm:$0xff]
        %v468 = vld [vmem:[%s442 + $0xb0] sm:$0xff]
        %v469 = vld [vmem:[%s442 + $0xb8] sm:$0xff]
        %v470 = vld [vmem:[%s442 + $0xc0] sm:$0xff]
        %v471 = vld [vmem:[%s442 + $0xc8] sm:$0xff]
        %v472 = vld [vmem:[%s442 + $0xd0] sm:$0xff]
        %v473 = vld [vmem:[%s442 + $0xd8] sm:$0xff]
        %v474 = vpack.c.bf16 %v453, %v446
        %v475 = vpack.c.bf16 %v454, %v447
        %v476 = vpack.c.bf16 %v455, %v448
        %v477 = vpack.c.bf16 %v456, %v449
        %v478 = vpack.c.bf16 %v457, %v450
        %v479 = vpack.c.bf16 %v458, %v451
        %v480 = vpack.c.bf16 %v459, %v452
        %v481 = vpack.c.bf16 %v467, %v460
        %v482 = vpack.c.bf16 %v468, %v461
        %v483 = vpack.c.bf16 %v469, %v462
        %v484 = vpack.c.bf16 %v470, %v463
        %v485 = vpack.c.bf16 %v471, %v464
        %v486 = vpack.c.bf16 %v472, %v465
        %v487 = vpack.c.bf16 %v473, %v466
        %v488 = vld [vmem:[%s1] sm:$0xff]
        %v489 = vld [vmem:[%s1 + $0x8] sm:$0xff]
        %v490 = vld [vmem:[%s1 + $0x10] sm:$0xff]
        %v491 = vld [vmem:[%s1 + $0x18] sm:$0xff]
        %v492 = vld [vmem:[%s1 + $0x20] sm:$0xff]
        %v493 = vld [vmem:[%s1 + $0x28] sm:$0xff]
        %v494 = vld [vmem:[%s1 + $0x30] sm:$0xff]
        %v495 = vld [vmem:[%s1 + $0x38] sm:$0xff]
        %v496 = vld [vmem:[%s1 + $0x40] sm:$0xff]
        %v497 = vld [vmem:[%s1 + $0x48] sm:$0xff]
        %v498 = vld [vmem:[%s1 + $0x50] sm:$0xff]
        %v499 = vld [vmem:[%s1 + $0x58] sm:$0xff]
        %v500 = vld [vmem:[%s1 + $0x60] sm:$0xff]
        %v501 = vld [vmem:[%s1 + $0x68] sm:$0xff]
        %v502 = vld [vmem:[%s1 + $0x70] sm:$0xff]
        %v503 = vld [vmem:[%s1 + $0x78] sm:$0xff]
        %v504 = vld [vmem:[%s1 + $0x80] sm:$0xff]
        %v505 = vld [vmem:[%s1 + $0x88] sm:$0xff]
        %v506 = vld [vmem:[%s1 + $0x90] sm:$0xff]
        %v507 = vld [vmem:[%s1 + $0x98] sm:$0xff]
        %v508 = vld [vmem:[%s1 + $0xa0] sm:$0xff]
        %v509 = vld [vmem:[%s1 + $0xa8] sm:$0xff]
        %v510 = vld [vmem:[%s1 + $0xb0] sm:$0xff]
        %v511 = vld [vmem:[%s1 + $0xb8] sm:$0xff]
        %v512 = vld [vmem:[%s1 + $0xc0] sm:$0xff]
        %v513 = vld [vmem:[%s1 + $0xc8] sm:$0xff]
        %v514 = vld [vmem:[%s1 + $0xd0] sm:$0xff]
        %v515 = vld [vmem:[%s1 + $0xd8] sm:$0xff]
        %v516 = vld [vmem:[%s1 + $0xe0] sm:$0xff]
        %v517 = vld [vmem:[%s1 + $0xe8] sm:$0xff]
        %v518 = vld [vmem:[%s1 + $0xf0] sm:$0xff]
        %v519 = vld [vmem:[%s1 + $0xf8] sm:$0xff]
        %v520 = vld [vmem:[%s1 + $0x100] sm:$0xff]
        %v521 = vld [vmem:[%s1 + $0x108] sm:$0xff]
        %v522 = vld [vmem:[%s1 + $0x110] sm:$0xff]
        %v523 = vld [vmem:[%s1 + $0x118] sm:$0xff]
        %v524 = vld [vmem:[%s1 + $0x120] sm:$0xff]
        %v525 = vld [vmem:[%s1 + $0x128] sm:$0xff]
        %v526 = vld [vmem:[%s1 + $0x130] sm:$0xff]
        %v527 = vld [vmem:[%s1 + $0x138] sm:$0xff]
        %v528 = vld [vmem:[%s1 + $0x140] sm:$0xff]
        %v529 = vld [vmem:[%s1 + $0x148] sm:$0xff]
        %v530 = vld [vmem:[%s1 + $0x150] sm:$0xff]
        %v531 = vld [vmem:[%s1 + $0x158] sm:$0xff]
        %v532 = vld [vmem:[%s1 + $0x160] sm:$0xff]
        %v533 = vld [vmem:[%s1 + $0x168] sm:$0xff]
        %v534 = vld [vmem:[%s1 + $0x170] sm:$0xff]
        %v535 = vld [vmem:[%s1 + $0x178] sm:$0xff]
        %v536 = vld [vmem:[%s1 + $0x180] sm:$0xff]
        %v537 = vld [vmem:[%s1 + $0x188] sm:$0xff]
        %v538 = vld [vmem:[%s1 + $0x190] sm:$0xff]
        %v539 = vld [vmem:[%s1 + $0x198] sm:$0xff]
        %v540 = vld [vmem:[%s1 + $0x1a0] sm:$0xff]
        %v541 = vld [vmem:[%s1 + $0x1a8] sm:$0xff]
        %v542 = vld [vmem:[%s1 + $0x1b0] sm:$0xff]
        %v543 = vld [vmem:[%s1 + $0x1b8] sm:$0xff]
        %v544 = vld [vmem:[%s1 + $0x1c0] sm:$0xff]
        %v545 = vld [vmem:[%s1 + $0x1c8] sm:$0xff]
        %v546 = vld [vmem:[%s1 + $0x1d0] sm:$0xff]
        %v547 = vld [vmem:[%s1 + $0x1d8] sm:$0xff]
        %v548 = vld [vmem:[%s1 + $0x1e0] sm:$0xff]
        %v549 = vld [vmem:[%s1 + $0x1e8] sm:$0xff]
        %v550 = vld [vmem:[%s1 + $0x1f0] sm:$0xff]
        %v551 = vld [vmem:[%s1 + $0x1f8] sm:$0xff]
        %v552 = vld [vmem:[%s1 + $0x200] sm:$0xff]
        %v553 = vld [vmem:[%s1 + $0x208] sm:$0xff]
        %v554 = vld [vmem:[%s1 + $0x210] sm:$0xff]
        %v555 = vld [vmem:[%s1 + $0x218] sm:$0xff]
        %v556 = vld [vmem:[%s1 + $0x220] sm:$0xff]
        %v557 = vld [vmem:[%s1 + $0x228] sm:$0xff]
        %v558 = vld [vmem:[%s1 + $0x230] sm:$0xff]
        %v559 = vld [vmem:[%s1 + $0x238] sm:$0xff]
        %v560 = vld [vmem:[%s1 + $0x240] sm:$0xff]
        %v561 = vld [vmem:[%s1 + $0x248] sm:$0xff]
        %v562 = vld [vmem:[%s1 + $0x250] sm:$0xff]
        %v563 = vld [vmem:[%s1 + $0x258] sm:$0xff]
        %v564 = vld [vmem:[%s1 + $0x260] sm:$0xff]
        %v565 = vld [vmem:[%s1 + $0x268] sm:$0xff]
        %v566 = vld [vmem:[%s1 + $0x270] sm:$0xff]
        %v567 = vld [vmem:[%s1 + $0x278] sm:$0xff]
        %v568 = vld [vmem:[%s1 + $0x280] sm:$0xff]
        %v569 = vld [vmem:[%s1 + $0x288] sm:$0xff]
        %v570 = vld [vmem:[%s1 + $0x290] sm:$0xff]
        %v571 = vld [vmem:[%s1 + $0x298] sm:$0xff]
        %v572 = vld [vmem:[%s1 + $0x2a0] sm:$0xff]
        %v573 = vld [vmem:[%s1 + $0x2a8] sm:$0xff]
        %v574 = vld [vmem:[%s1 + $0x2b0] sm:$0xff]
        %v575 = vld [vmem:[%s1 + $0x2b8] sm:$0xff]
        %v576 = vld [vmem:[%s1 + $0x2c0] sm:$0xff]
        %v577 = vld [vmem:[%s1 + $0x2c8] sm:$0xff]
        %v578 = vld [vmem:[%s1 + $0x2d0] sm:$0xff]
        %v579 = vld [vmem:[%s1 + $0x2d8] sm:$0xff]
        %v580 = vld [vmem:[%s1 + $0x2e0] sm:$0xff]
        %v581 = vld [vmem:[%s1 + $0x2e8] sm:$0xff]
        %v582 = vld [vmem:[%s1 + $0x2f0] sm:$0xff]
        %v583 = vld [vmem:[%s1 + $0x2f8] sm:$0xff]
        %v584 = vld [vmem:[%s1 + $0x300] sm:$0xff]
        %v585 = vld [vmem:[%s1 + $0x308] sm:$0xff]
        %v586 = vld [vmem:[%s2] sm:$0x3]
        %v588 = vlaneseq
        %v589 = vshrl.u32 %v588, 7
        %v590 = vsub.s32 0, %v589
        %v591 = vrot.slane %v586, %v590
        %v592 = vlaneseq
        %v593 = vshrl.u32 %v592, 7
        %v594 = vsub.s32 1, %v593
        %v595 = vrot.slane %v586, %v594
        %v696 = vunpack.c.l.b16 %v488
        %v697 = vunpack.c.h.b16 %v488
        %v698 = vunpack.c.l.b16 %v489
        %v699 = vunpack.c.h.b16 %v489
        %v700 = vunpack.c.l.b16 %v490
        %v701 = vunpack.c.h.b16 %v490
        %v702 = vunpack.c.l.b16 %v491
        %v703 = vunpack.c.h.b16 %v491
        %v704 = vunpack.c.l.b16 %v492
        %v705 = vunpack.c.h.b16 %v492
        %v706 = vunpack.c.l.b16 %v493
        %v707 = vunpack.c.h.b16 %v493
        %v708 = vunpack.c.l.b16 %v494
        %v709 = vunpack.c.h.b16 %v494
        %v710 = vunpack.c.l.b16 %v495
        %v711 = vunpack.c.h.b16 %v495
        %v712 = vunpack.c.l.b16 %v496
        %v713 = vunpack.c.h.b16 %v496
        %v714 = vunpack.c.l.b16 %v497
        %v715 = vunpack.c.h.b16 %v497
        %v716 = vunpack.c.l.b16 %v498
        %v717 = vunpack.c.h.b16 %v498
        %v718 = vunpack.c.l.b16 %v499
        %v719 = vunpack.c.h.b16 %v499
        %v720 = vunpack.c.l.b16 %v500
        %v721 = vunpack.c.h.b16 %v500
        %v722 = vunpack.c.l.b16 %v501
        %v723 = vunpack.c.h.b16 %v501
        %v724 = vunpack.c.l.b16 %v502
        %v725 = vunpack.c.h.b16 %v502
        %v726 = vunpack.c.l.b16 %v503
        %v727 = vunpack.c.h.b16 %v503
        %v728 = vunpack.c.l.b16 %v504
        %v729 = vunpack.c.h.b16 %v504
        %v730 = vunpack.c.l.b16 %v505
        %v731 = vunpack.c.h.b16 %v505
        %v732 = vunpack.c.l.b16 %v506
        %v733 = vunpack.c.h.b16 %v506
        %v734 = vunpack.c.l.b16 %v507
        %v735 = vunpack.c.h.b16 %v507
        %v736 = vunpack.c.l.b16 %v508
        %v737 = vunpack.c.h.b16 %v508
        %v738 = vunpack.c.l.b16 %v509
        %v739 = vunpack.c.h.b16 %v509
        %v740 = vunpack.c.l.b16 %v510
        %v741 = vunpack.c.h.b16 %v510
        %v742 = vunpack.c.l.b16 %v511
        %v743 = vunpack.c.h.b16 %v511
        %v744 = vunpack.c.l.b16 %v512
        %v745 = vunpack.c.h.b16 %v512
        %v746 = vunpack.c.l.b16 %v513
        %v747 = vunpack.c.h.b16 %v513
        %v748 = vunpack.c.l.b16 %v514
        %v749 = vunpack.c.h.b16 %v514
        %v750 = vunpack.c.l.b16 %v515
        %v751 = vunpack.c.h.b16 %v515
        %v752 = vunpack.c.l.b16 %v516
        %v753 = vunpack.c.h.b16 %v516
        %v754 = vunpack.c.l.b16 %v517
        %v755 = vunpack.c.h.b16 %v517
        %v756 = vunpack.c.l.b16 %v518
        %v757 = vunpack.c.h.b16 %v518
        %v758 = vunpack.c.l.b16 %v519
        %v759 = vunpack.c.h.b16 %v519
        %v760 = vunpack.c.l.b16 %v520
        %v761 = vunpack.c.h.b16 %v520
        %v762 = vunpack.c.l.b16 %v521
        %v763 = vunpack.c.h.b16 %v521
        %v764 = vunpack.c.l.b16 %v522
        %v765 = vunpack.c.h.b16 %v522
        %v766 = vunpack.c.l.b16 %v523
        %v767 = vunpack.c.h.b16 %v523
        %v768 = vunpack.c.l.b16 %v524
        %v769 = vunpack.c.h.b16 %v524
        %v770 = vunpack.c.l.b16 %v525
        %v771 = vunpack.c.h.b16 %v525
        %v772 = vunpack.c.l.b16 %v526
        %v773 = vunpack.c.h.b16 %v526
        %v774 = vunpack.c.l.b16 %v527
        %v775 = vunpack.c.h.b16 %v527
        %v776 = vunpack.c.l.b16 %v528
        %v777 = vunpack.c.h.b16 %v528
        %v778 = vunpack.c.l.b16 %v529
        %v779 = vunpack.c.h.b16 %v529
        %v780 = vunpack.c.l.b16 %v530
        %v781 = vunpack.c.h.b16 %v530
        %v782 = vunpack.c.l.b16 %v531
        %v783 = vunpack.c.h.b16 %v531
        %v784 = vunpack.c.l.b16 %v532
        %v785 = vunpack.c.h.b16 %v532
        %v786 = vunpack.c.l.b16 %v533
        %v787 = vunpack.c.h.b16 %v533
        %v788 = vunpack.c.l.b16 %v534
        %v789 = vunpack.c.h.b16 %v534
        %v790 = vunpack.c.l.b16 %v535
        %v791 = vunpack.c.h.b16 %v535
        %v792 = vunpack.c.l.b16 %v536
        %v793 = vunpack.c.h.b16 %v536
        %v794 = vunpack.c.l.b16 %v537
        %v795 = vunpack.c.h.b16 %v537
        %v796 = vunpack.c.l.b16 %v538
        %v797 = vunpack.c.h.b16 %v538
        %v798 = vunpack.c.l.b16 %v539
        %v799 = vunpack.c.h.b16 %v539
        %v800 = vunpack.c.l.b16 %v540
        %v801 = vunpack.c.h.b16 %v540
        %v802 = vunpack.c.l.b16 %v541
        %v803 = vunpack.c.h.b16 %v541
        %v804 = vunpack.c.l.b16 %v542
        %v805 = vunpack.c.h.b16 %v542
        %v806 = vunpack.c.l.b16 %v543
        %v807 = vunpack.c.h.b16 %v543
        %v808 = vunpack.c.l.b16 %v544
        %v809 = vunpack.c.h.b16 %v544
        %v810 = vunpack.c.l.b16 %v545
        %v811 = vunpack.c.h.b16 %v545
        %v812 = vunpack.c.l.b16 %v546
        %v813 = vunpack.c.h.b16 %v546
        %v814 = vunpack.c.l.b16 %v547
        %v815 = vunpack.c.h.b16 %v547
        %v816 = vunpack.c.l.b16 %v548
        %v817 = vunpack.c.h.b16 %v548
        %v818 = vunpack.c.l.b16 %v549
        %v819 = vunpack.c.h.b16 %v549
        %v820 = vunpack.c.l.b16 %v550
        %v821 = vunpack.c.h.b16 %v550
        %v822 = vunpack.c.l.b16 %v551
        %v823 = vunpack.c.h.b16 %v551
        %v824 = vunpack.c.l.b16 %v552
        %v825 = vunpack.c.h.b16 %v552
        %v826 = vunpack.c.l.b16 %v553
        %v827 = vunpack.c.h.b16 %v553
        %v828 = vunpack.c.l.b16 %v554
        %v829 = vunpack.c.h.b16 %v554
        %v830 = vunpack.c.l.b16 %v555
        %v831 = vunpack.c.h.b16 %v555
        %v832 = vunpack.c.l.b16 %v556
        %v833 = vunpack.c.h.b16 %v556
        %v834 = vunpack.c.l.b16 %v557
        %v835 = vunpack.c.h.b16 %v557
        %v836 = vunpack.c.l.b16 %v558
        %v837 = vunpack.c.h.b16 %v558
        %v838 = vunpack.c.l.b16 %v559
        %v839 = vunpack.c.h.b16 %v559
        %v840 = vunpack.c.l.b16 %v560
        %v841 = vunpack.c.h.b16 %v560
        %v842 = vunpack.c.l.b16 %v561
        %v843 = vunpack.c.h.b16 %v561
        %v844 = vunpack.c.l.b16 %v562
        %v845 = vunpack.c.h.b16 %v562
        %v846 = vunpack.c.l.b16 %v563
        %v847 = vunpack.c.h.b16 %v563
        %v848 = vunpack.c.l.b16 %v564
        %v849 = vunpack.c.h.b16 %v564
        %v850 = vunpack.c.l.b16 %v565
        %v851 = vunpack.c.h.b16 %v565
        %v852 = vunpack.c.l.b16 %v566
        %v853 = vunpack.c.h.b16 %v566
        %v854 = vunpack.c.l.b16 %v567
        %v855 = vunpack.c.h.b16 %v567
        %v856 = vunpack.c.l.b16 %v568
        %v857 = vunpack.c.h.b16 %v568
        %v858 = vunpack.c.l.b16 %v569
        %v859 = vunpack.c.h.b16 %v569
        %v860 = vunpack.c.l.b16 %v570
        %v861 = vunpack.c.h.b16 %v570
        %v862 = vunpack.c.l.b16 %v571
        %v863 = vunpack.c.h.b16 %v571
        %v864 = vunpack.c.l.b16 %v572
        %v865 = vunpack.c.h.b16 %v572
        %v866 = vunpack.c.l.b16 %v573
        %v867 = vunpack.c.h.b16 %v573
        %v868 = vunpack.c.l.b16 %v574
        %v869 = vunpack.c.h.b16 %v574
        %v870 = vunpack.c.l.b16 %v575
        %v871 = vunpack.c.h.b16 %v575
        %v872 = vunpack.c.l.b16 %v576
        %v873 = vunpack.c.h.b16 %v576
        %v874 = vunpack.c.l.b16 %v577
        %v875 = vunpack.c.h.b16 %v577
        %v876 = vunpack.c.l.b16 %v578
        %v877 = vunpack.c.h.b16 %v578
        %v878 = vunpack.c.l.b16 %v579
        %v879 = vunpack.c.h.b16 %v579
        %v880 = vunpack.c.l.b16 %v580
        %v881 = vunpack.c.h.b16 %v580
        %v882 = vunpack.c.l.b16 %v581
        %v883 = vunpack.c.h.b16 %v581
        %v884 = vunpack.c.l.b16 %v582
        %v885 = vunpack.c.h.b16 %v582
        %v886 = vunpack.c.l.b16 %v583
        %v887 = vunpack.c.h.b16 %v583
        %v888 = vunpack.c.l.b16 %v584
        %v889 = vunpack.c.h.b16 %v584
        %v890 = vunpack.c.l.b16 %v585
        %v891 = vunpack.c.h.b16 %v585
        %v892 = vpack.c.b16 %v698, %v696
        %v893 = vpack.c.b16 %v699, %v697
        %v894 = vpack.c.b16 %v702, %v700
        %v895 = vpack.c.b16 %v703, %v701
        %v896 = vpack.c.b16 %v706, %v704
        %v897 = vpack.c.b16 %v707, %v705
        %v898 = vpack.c.b16 %v710, %v708
        %v899 = vpack.c.b16 %v711, %v709
        %v900 = vpack.c.b16 %v714, %v712
        %v901 = vpack.c.b16 %v715, %v713
        %v902 = vpack.c.b16 %v718, %v716
        %v903 = vpack.c.b16 %v719, %v717
        %v904 = vpack.c.b16 %v722, %v720
        %v905 = vpack.c.b16 %v723, %v721
        %v906 = vpack.c.b16 %v726, %v724
        %v907 = vpack.c.b16 %v727, %v725
        %v908 = vpack.c.b16 %v730, %v728
        %v909 = vpack.c.b16 %v731, %v729
        %v910 = vpack.c.b16 %v734, %v732
        %v911 = vpack.c.b16 %v735, %v733
        %v912 = vpack.c.b16 %v738, %v736
        %v913 = vpack.c.b16 %v739, %v737
        %v914 = vpack.c.b16 %v742, %v740
        %v915 = vpack.c.b16 %v743, %v741
        %v916 = vpack.c.b16 %v746, %v744
        %v917 = vpack.c.b16 %v747, %v745
        %v918 = vpack.c.b16 %v750, %v748
        %v919 = vpack.c.b16 %v751, %v749
        %v920 = vpack.c.b16 %v754, %v752
        %v921 = vpack.c.b16 %v755, %v753
        %v922 = vpack.c.b16 %v758, %v756
        %v923 = vpack.c.b16 %v759, %v757
        %v924 = vpack.c.b16 %v762, %v760
        %v925 = vpack.c.b16 %v763, %v761
        %v926 = vpack.c.b16 %v766, %v764
        %v927 = vpack.c.b16 %v767, %v765
        %v928 = vpack.c.b16 %v770, %v768
        %v929 = vpack.c.b16 %v771, %v769
        %v930 = vpack.c.b16 %v774, %v772
        %v931 = vpack.c.b16 %v775, %v773
        %v932 = vpack.c.b16 %v778, %v776
        %v933 = vpack.c.b16 %v779, %v777
        %v934 = vpack.c.b16 %v782, %v780
        %v935 = vpack.c.b16 %v783, %v781
        %v936 = vpack.c.b16 %v786, %v784
        %v937 = vpack.c.b16 %v787, %v785
        %v938 = vpack.c.b16 %v790, %v788
        %v939 = vpack.c.b16 %v791, %v789
        %v940 = vpack.c.b16 %v794, %v792
        %v941 = vpack.c.b16 %v795, %v793
        %v942 = vpack.c.b16 %v798, %v796
        %v943 = vpack.c.b16 %v799, %v797
        %v944 = vpack.c.b16 %v802, %v800
        %v945 = vpack.c.b16 %v803, %v801
        %v946 = vpack.c.b16 %v806, %v804
        %v947 = vpack.c.b16 %v807, %v805
        %v948 = vpack.c.b16 %v810, %v808
        %v949 = vpack.c.b16 %v811, %v809
        %v950 = vpack.c.b16 %v814, %v812
        %v951 = vpack.c.b16 %v815, %v813
        %v952 = vpack.c.b16 %v818, %v816
        %v953 = vpack.c.b16 %v819, %v817
        %v954 = vpack.c.b16 %v822, %v820
        %v955 = vpack.c.b16 %v823, %v821
        %v956 = vpack.c.b16 %v826, %v824
        %v957 = vpack.c.b16 %v827, %v825
        %v958 = vpack.c.b16 %v830, %v828
        %v959 = vpack.c.b16 %v831, %v829
        %v960 = vpack.c.b16 %v834, %v832
        %v961 = vpack.c.b16 %v835, %v833
        %v962 = vpack.c.b16 %v838, %v836
        %v963 = vpack.c.b16 %v839, %v837
        %v964 = vpack.c.b16 %v842, %v840
        %v965 = vpack.c.b16 %v843, %v841
        %v966 = vpack.c.b16 %v846, %v844
        %v967 = vpack.c.b16 %v847, %v845
        %v968 = vpack.c.b16 %v850, %v848
        %v969 = vpack.c.b16 %v851, %v849
        %v970 = vpack.c.b16 %v854, %v852
        %v971 = vpack.c.b16 %v855, %v853
        %v972 = vpack.c.b16 %v858, %v856
        %v973 = vpack.c.b16 %v859, %v857
        %v974 = vpack.c.b16 %v862, %v860
        %v975 = vpack.c.b16 %v863, %v861
        %v976 = vpack.c.b16 %v866, %v864
        %v977 = vpack.c.b16 %v867, %v865
        %v978 = vpack.c.b16 %v870, %v868
        %v979 = vpack.c.b16 %v871, %v869
        %v980 = vpack.c.b16 %v874, %v872
        %v981 = vpack.c.b16 %v875, %v873
        %v982 = vpack.c.b16 %v878, %v876
        %v983 = vpack.c.b16 %v879, %v877
        %v984 = vpack.c.b16 %v882, %v880
        %v985 = vpack.c.b16 %v883, %v881
        %v986 = vpack.c.b16 %v886, %v884
        %v987 = vpack.c.b16 %v887, %v885
        %v988 = vpack.c.b16 %v890, %v888
        %v989 = vpack.c.b16 %v891, %v889
        %vm1088 = vcmask 130048
        %v1090 = vsel %vm1088, %v480, 0
        %v1093 = vsel %vm1088, %v487, 0
        %1095 = vmatprep.subr.bf16.mxu0 %v893
        %1096 = vmatpush1.bf16.msra.mxu0 %v892
        %1097 = vmatprep.subr.bf16.mxu0 %v895
        %1098 = vmatpush1.bf16.msra.mxu0 %v894
        %1099 = vmatprep.subr.bf16.mxu0 %v897
        %1100 = vmatpush1.bf16.msra.mxu0 %v896
        %1101 = vmatprep.subr.bf16.mxu0 %v899
        %1102 = vmatpush1.bf16.msra.mxu0 %v898
        %1103 = vmatprep.subr.bf16.mxu0 %v901
        %1104 = vmatpush1.bf16.msra.mxu0 %v900
        %1105 = vmatprep.subr.bf16.mxu0 %v903
        %1106 = vmatpush1.bf16.msra.mxu0 %v902
        %1107 = vmatprep.subr.bf16.mxu0 %v905
        %1108 = vmatpush1.bf16.msra.mxu0 %v904
        %1109 = vmatprep.subr.bf16.mxu0 %v907
        %1110 = vmatpush1.bf16.msra.mxu0 %v906
        %1111 = vmatprep.subr.bf16.mxu0 %v909
        %1112 = vmatpush1.bf16.msra.mxu0 %v908
        %1113 = vmatprep.subr.bf16.mxu0 %v911
        %1114 = vmatpush1.bf16.msra.mxu0 %v910
        %1115 = vmatprep.subr.bf16.mxu0 %v913
        %1116 = vmatpush1.bf16.msra.mxu0 %v912
        %1117 = vmatprep.subr.bf16.mxu0 %v915
        %1118 = vmatpush1.bf16.msra.mxu0 %v914
        %1119 = vmatprep.subr.bf16.mxu0 %v917
        %1120 = vmatpush1.bf16.msra.mxu0 %v916
        %1121 = vmatprep.subr.bf16.mxu0 %v919
        %1122 = vmatpush1.bf16.msra.mxu0 %v918
        %1123 = vmatprep.subr.bf16.mxu0 %v921
        %1124 = vmatpush1.bf16.msra.mxu0 %v920
        %1125 = vmatprep.subr.bf16.mxu0 %v923
        %1126 = vmatpush1.bf16.msra.mxu0 %v922
        %1127 = vmatprep.mubr.bf16.mxu0 %v475
        %1128 = vmatmul.mubr.bf16.gmra.mrb[0].mxu0 %v474
        %v1129 = vpop.f32.mrb[0].mxu0
        %v1130 = vadd.f32 %v591, %v1129
        %v1131 = vpop.f32.mrb[0].mxu0
        %v1132 = vadd.f32 %v595, %v1131
        %v1133 = vpop.f32.mrb[0].mxu0
        %v1134 = vadd.f32 %v591, %v1133
        %v1135 = vpop.f32.mrb[0].mxu0
        %v1136 = vadd.f32 %v595, %v1135
        %1137 = vmatprep.mubr.bf16.mxu0 %v482
        %1138 = vmatmul.mubr.bf16.gmra.mrb[0].mxu0 %v481
        %v1139 = vpop.f32.mrb[0].mxu0
        %v1140 = vadd.f32 %v591, %v1139
        %v1141 = vpop.f32.mrb[0].mxu0
        %v1142 = vadd.f32 %v595, %v1141
        %v1143 = vpop.f32.mrb[0].mxu0
        %v1144 = vadd.f32 %v591, %v1143
        %v1145 = vpop.f32.mrb[0].mxu0
        %v1146 = vadd.f32 %v595, %v1145
        %1147 = vdwg.mxu0
        %1148 = vmatprep.subr.bf16.mxu0 %v925
        %1149 = vmatpush1.bf16.msra.mxu0 %v924
        %1150 = vmatprep.subr.bf16.mxu0 %v927
        %1151 = vmatpush1.bf16.msra.mxu0 %v926
        %1152 = vmatprep.subr.bf16.mxu0 %v929
        %1153 = vmatpush1.bf16.msra.mxu0 %v928
        %1154 = vmatprep.subr.bf16.mxu0 %v931
        %1155 = vmatpush1.bf16.msra.mxu0 %v930
        %1156 = vmatprep.subr.bf16.mxu0 %v933
        %1157 = vmatpush1.bf16.msra.mxu0 %v932
        %1158 = vmatprep.subr.bf16.mxu0 %v935
        %1159 = vmatpush1.bf16.msra.mxu0 %v934
        %1160 = vmatprep.subr.bf16.mxu0 %v937
        %1161 = vmatpush1.bf16.msra.mxu0 %v936
        %1162 = vmatprep.subr.bf16.mxu0 %v939
        %1163 = vmatpush1.bf16.msra.mxu0 %v938
        %1164 = vmatprep.subr.bf16.mxu0 %v941
        %1165 = vmatpush1.bf16.msra.mxu0 %v940
        %1166 = vmatprep.subr.bf16.mxu0 %v943
        %1167 = vmatpush1.bf16.msra.mxu0 %v942
        %1168 = vmatprep.subr.bf16.mxu0 %v945
        %1169 = vmatpush1.bf16.msra.mxu0 %v944
        %1170 = vmatprep.subr.bf16.mxu0 %v947
        %1171 = vmatpush1.bf16.msra.mxu0 %v946
        %1172 = vmatprep.subr.bf16.mxu0 %v949
        %1173 = vmatpush1.bf16.msra.mxu0 %v948
        %1174 = vmatprep.subr.bf16.mxu0 %v951
        %1175 = vmatpush1.bf16.msra.mxu0 %v950
        %1176 = vmatprep.subr.bf16.mxu0 %v953
        %1177 = vmatpush1.bf16.msra.mxu0 %v952
        %1178 = vmatprep.subr.bf16.mxu0 %v955
        %1179 = vmatpush1.bf16.msra.mxu0 %v954
        %1180 = vmatprep.mubr.bf16.mxu0 %v477
        %1181 = vmatmul.mubr.bf16.gmra.mrb[0].mxu0 %v476
        %v1182 = vpop.f32.mrb[0].mxu0
        %v1183 = vadd.f32 %v1130, %v1182
        %v1184 = vpop.f32.mrb[0].mxu0
        %v1185 = vadd.f32 %v1132, %v1184
        %v1186 = vpop.f32.mrb[0].mxu0
        %v1187 = vadd.f32 %v1134, %v1186
        %v1188 = vpop.f32.mrb[0].mxu0
        %v1189 = vadd.f32 %v1136, %v1188
        %1190 = vmatprep.mubr.bf16.mxu0 %v484
        %1191 = vmatmul.mubr.bf16.gmra.mrb[0].mxu0 %v483
        %v1192 = vpop.f32.mrb[0].mxu0
        %v1193 = vadd.f32 %v1140, %v1192
        %v1194 = vpop.f32.mrb[0].mxu0
        %v1195 = vadd.f32 %v1142, %v1194
        %v1196 = vpop.f32.mrb[0].mxu0
        %v1197 = vadd.f32 %v1144, %v1196
        %v1198 = vpop.f32.mrb[0].mxu0
        %v1199 = vadd.f32 %v1146, %v1198
        %1200 = vdwg.mxu0
        %1201 = vmatprep.subr.bf16.mxu0 %v957
        %1202 = vmatpush1.bf16.msra.mxu0 %v956
        %1203 = vmatprep.subr.bf16.mxu0 %v959
        %1204 = vmatpush1.bf16.msra.mxu0 %v958
        %1205 = vmatprep.subr.bf16.mxu0 %v961
        %1206 = vmatpush1.bf16.msra.mxu0 %v960
        %1207 = vmatprep.subr.bf16.mxu0 %v963
        %1208 = vmatpush1.bf16.msra.mxu0 %v962
        %1209 = vmatprep.subr.bf16.mxu0 %v965
        %1210 = vmatpush1.bf16.msra.mxu0 %v964
        %1211 = vmatprep.subr.bf16.mxu0 %v967
        %1212 = vmatpush1.bf16.msra.mxu0 %v966
        %1213 = vmatprep.subr.bf16.mxu0 %v969
        %1214 = vmatpush1.bf16.msra.mxu0 %v968
        %1215 = vmatprep.subr.bf16.mxu0 %v971
        %1216 = vmatpush1.bf16.msra.mxu0 %v970
        %1217 = vmatprep.subr.bf16.mxu0 %v973
        %1218 = vmatpush1.bf16.msra.mxu0 %v972
        %1219 = vmatprep.subr.bf16.mxu0 %v975
        %1220 = vmatpush1.bf16.msra.mxu0 %v974
        %1221 = vmatprep.subr.bf16.mxu0 %v977
        %1222 = vmatpush1.bf16.msra.mxu0 %v976
        %1223 = vmatprep.subr.bf16.mxu0 %v979
        %1224 = vmatpush1.bf16.msra.mxu0 %v978
        %1225 = vmatprep.subr.bf16.mxu0 %v981
        %1226 = vmatpush1.bf16.msra.mxu0 %v980
        %1227 = vmatprep.subr.bf16.mxu0 %v983
        %1228 = vmatpush1.bf16.msra.mxu0 %v982
        %1229 = vmatprep.subr.bf16.mxu0 %v985
        %1230 = vmatpush1.bf16.msra.mxu0 %v984
        %1231 = vmatprep.subr.bf16.mxu0 %v987
        %1232 = vmatpush1.bf16.msra.mxu0 %v986
        %1233 = vmatprep.mubr.bf16.mxu0 %v479
        %1234 = vmatmul.mubr.bf16.gmra.mrb[0].mxu0 %v478
        %v1235 = vpop.f32.mrb[0].mxu0
        %v1236 = vadd.f32 %v1183, %v1235
        %v1237 = vpop.f32.mrb[0].mxu0
        %v1238 = vadd.f32 %v1185, %v1237
        %v1239 = vpop.f32.mrb[0].mxu0
        %v1240 = vadd.f32 %v1187, %v1239
        %v1241 = vpop.f32.mrb[0].mxu0
        %v1242 = vadd.f32 %v1189, %v1241
        %1243 = vmatprep.mubr.bf16.mxu0 %v486
        %1244 = vmatmul.mubr.bf16.gmra.mrb[0].mxu0 %v485
        %v1245 = vpop.f32.mrb[0].mxu0
        %v1246 = vadd.f32 %v1193, %v1245
        %v1247 = vpop.f32.mrb[0].mxu0
        %v1248 = vadd.f32 %v1195, %v1247
        %v1249 = vpop.f32.mrb[0].mxu0
        %v1250 = vadd.f32 %v1197, %v1249
        %v1251 = vpop.f32.mrb[0].mxu0
        %v1252 = vadd.f32 %v1199, %v1251
        %1253 = vdwg.mxu0
        %1254 = vmatprep.subr.bf16.mxu0 %v989
        %1255 = vmatpush1.bf16.msra.mxu0 %v988
        %1256 = vmatprep.subr.bf16.mxu0 0
        %1257 = vmatpush1.bf16.msra.mxu0 0
        %1258 = vmatprep.subr.bf16.mxu0 0
        %1259 = vmatpush1.bf16.msra.mxu0 0
        %1260 = vmatprep.subr.bf16.mxu0 0
        %1261 = vmatpush1.bf16.msra.mxu0 0
        %1262 = vmatprep.subr.bf16.mxu0 0
        %1263 = vmatpush1.bf16.msra.mxu0 0
        %1264 = vmatprep.subr.bf16.mxu0 0
        %1265 = vmatpush1.bf16.msra.mxu0 0
        %1266 = vmatprep.subr.bf16.mxu0 0
        %1267 = vmatpush1.bf16.msra.mxu0 0
        %1268 = vmatprep.subr.bf16.mxu0 0
        %1269 = vmatpush1.bf16.msra.mxu0 0
        %1270 = vmatprep.subr.bf16.mxu0 0
        %1271 = vmatpush1.bf16.msra.mxu0 0
        %1272 = vmatprep.subr.bf16.mxu0 0
        %1273 = vmatpush1.bf16.msra.mxu0 0
        %1274 = vmatprep.subr.bf16.mxu0 0
        %1275 = vmatpush1.bf16.msra.mxu0 0
        %1276 = vmatprep.subr.bf16.mxu0 0
        %1277 = vmatpush1.bf16.msra.mxu0 0
        %1278 = vmatprep.subr.bf16.mxu0 0
        %1279 = vmatpush1.bf16.msra.mxu0 0
        %1280 = vmatprep.subr.bf16.mxu0 0
        %1281 = vmatpush1.bf16.msra.mxu0 0
        %1282 = vmatprep.subr.bf16.mxu0 0
        %1283 = vmatpush1.bf16.msra.mxu0 0
        %1284 = vmatprep.subr.bf16.mxu0 0
        %1285 = vmatpush1.bf16.msra.mxu0 0
        %1286 = vmatprep.mubr.bf16.mxu0 0
        %1287 = vmatmul.mubr.bf16.gmra.mrb[0].mxu0 %v1090
        %v1288 = vpop.f32.mrb[0].mxu0
        %v1289 = vadd.f32 %v1236, %v1288
        %v1290 = vpop.f32.mrb[0].mxu0
        %v1291 = vadd.f32 %v1238, %v1290
        %v1292 = vpop.f32.mrb[0].mxu0
        %v1293 = vadd.f32 %v1240, %v1292
        %v1294 = vpop.f32.mrb[0].mxu0
        %v1295 = vadd.f32 %v1242, %v1294
        %1296 = vmatprep.mubr.bf16.mxu0 0
        %1297 = vmatmul.mubr.bf16.gmra.mrb[0].mxu0 %v1093
        %v1298 = vpop.f32.mrb[0].mxu0
        %v1299 = vadd.f32 %v1246, %v1298
        %v1300 = vpop.f32.mrb[0].mxu0
        %v1301 = vadd.f32 %v1248, %v1300
        %v1302 = vpop.f32.mrb[0].mxu0
        %v1303 = vadd.f32 %v1250, %v1302
        %v1304 = vpop.f32.mrb[0].mxu0
        %v1305 = vadd.f32 %v1252, %v1304
        %1306 = vdwg.mxu0
        %v1307 = vpack.c.bf16 %v1293, %v1289
        %v1308 = vpack.c.bf16 %v1295, %v1291
        %v1309 = vpack.c.bf16 %v1303, %v1299
        %v1310 = vpack.c.bf16 %v1305, %v1301
        %v1311 = vmax.bf16 %v1307, 0
        %v1312 = vmax.bf16 %v1308, 0
        %v1313 = vmax.bf16 %v1309, 0
        %v1314 = vmax.bf16 %v1310, 0
        %v1315 = vld [vmem:[%s3] sm:$0xf]
        %v1316 = vld [vmem:[%s3 + $0x4] sm:$0xf]
        %v1317 = vld [vmem:[%s3 + $0x8] sm:$0xf]
        %v1318 = vld [vmem:[%s3 + $0xc] sm:$0xf]
        %v1319 = vld [vmem:[%s3 + $0x10] sm:$0xf]
        %v1320 = vld [vmem:[%s3 + $0x14] sm:$0xf]
        %v1321 = vld [vmem:[%s3 + $0x18] sm:$0xf]
        %v1322 = vld [vmem:[%s3 + $0x1c] sm:$0xf]
        %v1323 = vld [vmem:[%s3 + $0x20] sm:$0xf]
        %v1324 = vld [vmem:[%s3 + $0x24] sm:$0xf]
        %v1325 = vld [vmem:[%s3 + $0x28] sm:$0xf]
        %v1326 = vld [vmem:[%s3 + $0x2c] sm:$0xf]
        %v1327 = vld [vmem:[%s3 + $0x30] sm:$0xf]
        %v1328 = vld [vmem:[%s3 + $0x34] sm:$0xf]
        %v1329 = vld [vmem:[%s3 + $0x38] sm:$0xf]
        %v1330 = vld [vmem:[%s3 + $0x3c] sm:$0xf]
        %v1331 = vld [vmem:[%s3 + $0x40] sm:$0xf]
        %v1332 = vld [vmem:[%s3 + $0x44] sm:$0xf]
        %v1333 = vld [vmem:[%s3 + $0x48] sm:$0xf]
        %v1334 = vld [vmem:[%s3 + $0x4c] sm:$0xf]
        %v1335 = vld [vmem:[%s3 + $0x50] sm:$0xf]
        %v1336 = vld [vmem:[%s3 + $0x54] sm:$0xf]
        %v1337 = vld [vmem:[%s3 + $0x58] sm:$0xf]
        %v1338 = vld [vmem:[%s3 + $0x5c] sm:$0xf]
        %v1339 = vld [vmem:[%s3 + $0x60] sm:$0xf]
        %v1340 = vld [vmem:[%s3 + $0x64] sm:$0xf]
        %v1341 = vld [vmem:[%s3 + $0x68] sm:$0xf]
        %v1342 = vld [vmem:[%s3 + $0x6c] sm:$0xf]
        %v1343 = vld [vmem:[%s3 + $0x70] sm:$0xf]
        %v1344 = vld [vmem:[%s3 + $0x74] sm:$0xf]
        %v1345 = vld [vmem:[%s3 + $0x78] sm:$0xf]
        %v1346 = vld [vmem:[%s3 + $0x7c] sm:$0xf]
        %v1347 = vld [vmem:[%s4] sm:$0x1]
        %v1349 = vlaneseq
        %v1350 = vshrl.u32 %v1349, 7
        %v1351 = vsub.s32 0, %v1350
        %v1352 = vrot.slane %v1347, %v1351
        %v1386 = vunpack.c.l.b16 %v1315
        %v1387 = vunpack.c.l.b16 %v1316
        %v1388 = vunpack.c.l.b16 %v1317
        %v1389 = vunpack.c.l.b16 %v1318
        %v1390 = vunpack.c.l.b16 %v1319
        %v1391 = vunpack.c.l.b16 %v1320
        %v1392 = vunpack.c.l.b16 %v1321
        %v1393 = vunpack.c.l.b16 %v1322
        %v1394 = vunpack.c.l.b16 %v1323
        %v1395 = vunpack.c.l.b16 %v1324
        %v1396 = vunpack.c.l.b16 %v1325
        %v1397 = vunpack.c.l.b16 %v1326
        %v1398 = vunpack.c.l.b16 %v1327
        %v1399 = vunpack.c.l.b16 %v1328
        %v1400 = vunpack.c.l.b16 %v1329
        %v1401 = vunpack.c.l.b16 %v1330
        %v1402 = vunpack.c.l.b16 %v1331
        %v1403 = vunpack.c.l.b16 %v1332
        %v1404 = vunpack.c.l.b16 %v1333
        %v1405 = vunpack.c.l.b16 %v1334
        %v1406 = vunpack.c.l.b16 %v1335
        %v1407 = vunpack.c.l.b16 %v1336
        %v1408 = vunpack.c.l.b16 %v1337
        %v1409 = vunpack.c.l.b16 %v1338
        %v1410 = vunpack.c.l.b16 %v1339
        %v1411 = vunpack.c.l.b16 %v1340
        %v1412 = vunpack.c.l.b16 %v1341
        %v1413 = vunpack.c.l.b16 %v1342
        %v1414 = vunpack.c.l.b16 %v1343
        %v1415 = vunpack.c.l.b16 %v1344
        %v1416 = vunpack.c.l.b16 %v1345
        %v1417 = vunpack.c.l.b16 %v1346
        %v1418 = vpack.c.b16 %v1387, %v1386
        %v1419 = vpack.c.b16 %v1389, %v1388
        %v1420 = vpack.c.b16 %v1391, %v1390
        %v1421 = vpack.c.b16 %v1393, %v1392
        %v1422 = vpack.c.b16 %v1395, %v1394
        %v1423 = vpack.c.b16 %v1397, %v1396
        %v1424 = vpack.c.b16 %v1399, %v1398
        %v1425 = vpack.c.b16 %v1401, %v1400
        %v1426 = vpack.c.b16 %v1403, %v1402
        %v1427 = vpack.c.b16 %v1405, %v1404
        %v1428 = vpack.c.b16 %v1407, %v1406
        %v1429 = vpack.c.b16 %v1409, %v1408
        %v1430 = vpack.c.b16 %v1411, %v1410
        %v1431 = vpack.c.b16 %v1413, %v1412
        %v1432 = vpack.c.b16 %v1415, %v1414
        %v1433 = vpack.c.b16 %v1417, %v1416
        %1450 = vmatprep.subr.bf16.mxu0 0
        %1451 = vmatpush1.bf16.msra.mxu0 %v1418
        %1452 = vmatprep.subr.bf16.mxu0 0
        %1453 = vmatpush1.bf16.msra.mxu0 %v1419
        %1454 = vmatprep.subr.bf16.mxu0 0
        %1455 = vmatpush1.bf16.msra.mxu0 %v1420
        %1456 = vmatprep.subr.bf16.mxu0 0
        %1457 = vmatpush1.bf16.msra.mxu0 %v1421
        %1458 = vmatprep.subr.bf16.mxu0 0
        %1459 = vmatpush1.bf16.msra.mxu0 %v1422
        %1460 = vmatprep.subr.bf16.mxu0 0
        %1461 = vmatpush1.bf16.msra.mxu0 %v1423
        %1462 = vmatprep.subr.bf16.mxu0 0
        %1463 = vmatpush1.bf16.msra.mxu0 %v1424
        %1464 = vmatprep.subr.bf16.mxu0 0
        %1465 = vmatpush1.bf16.msra.mxu0 %v1425
        %1466 = vmatprep.subr.bf16.mxu0 0
        %1467 = vmatpush1.bf16.msra.mxu0 %v1426
        %1468 = vmatprep.subr.bf16.mxu0 0
        %1469 = vmatpush1.bf16.msra.mxu0 %v1427
        %1470 = vmatprep.subr.bf16.mxu0 0
        %1471 = vmatpush1.bf16.msra.mxu0 %v1428
        %1472 = vmatprep.subr.bf16.mxu0 0
        %1473 = vmatpush1.bf16.msra.mxu0 %v1429
        %1474 = vmatprep.subr.bf16.mxu0 0
        %1475 = vmatpush1.bf16.msra.mxu0 %v1430
        %1476 = vmatprep.subr.bf16.mxu0 0
        %1477 = vmatpush1.bf16.msra.mxu0 %v1431
        %1478 = vmatprep.subr.bf16.mxu0 0
        %1479 = vmatpush1.bf16.msra.mxu0 %v1432
        %1480 = vmatprep.subr.bf16.mxu0 0
        %1481 = vmatpush1.bf16.msra.mxu0 %v1433
        %1482 = vmatprep.mubr.bf16.mxu0 %v1312
        %1483 = vmatmul.mubr.bf16.gmra.mrb[0].mxu0 %v1311
        %v1484 = vpop.f32.mrb[0].mxu0
        %v1485 = vadd.f32 %v1352, %v1484
        %v1486 = vpop.f32.mrb[0].mxu0
        %v1487 = vpop.f32.mrb[0].mxu0
        %v1488 = vadd.f32 %v1352, %v1487
        %v1489 = vpop.f32.mrb[0].mxu0
        %1490 = vmatprep.mubr.bf16.mxu0 %v1314
        %1491 = vmatmul.mubr.bf16.gmra.mrb[0].mxu0 %v1313
        %v1492 = vpop.f32.mrb[0].mxu0
        %v1493 = vadd.f32 %v1352, %v1492
        %v1494 = vpop.f32.mrb[0].mxu0
        %v1495 = vpop.f32.mrb[0].mxu0
        %v1496 = vadd.f32 %v1352, %v1495
        %v1497 = vpop.f32.mrb[0].mxu0
        %1498 = vdwg.mxu0
        %v1499 = vpack.c.bf16 %v1488, %v1485
        %v1500 = vpack.c.bf16 %v1496, %v1493
        %v1501 = vmax.bf16 %v1499, 0
        %v1502 = vmax.bf16 %v1500, 0
        %v1503 = vld [vmem:[%s5] sm:$0xf]
        %v1504 = vld [vmem:[%s5 + $0x4] sm:$0xf]
        %v1505 = vld [vmem:[%s5 + $0x8] sm:$0xf]
        %v1506 = vld [vmem:[%s5 + $0xc] sm:$0xf]
        %v1507 = vld [vmem:[%s5 + $0x10] sm:$0xf]
        %v1508 = vld [vmem:[%s5 + $0x14] sm:$0xf]
        %v1509 = vld [vmem:[%s5 + $0x18] sm:$0xf]
        %v1510 = vld [vmem:[%s5 + $0x1c] sm:$0xf]
        %v1511 = vld [vmem:[%s5 + $0x20] sm:$0xf]
        %v1512 = vld [vmem:[%s5 + $0x24] sm:$0xf]
        %v1513 = vld [vmem:[%s5 + $0x28] sm:$0xf]
        %v1514 = vld [vmem:[%s5 + $0x2c] sm:$0xf]
        %v1515 = vld [vmem:[%s5 + $0x30] sm:$0xf]
        %v1516 = vld [vmem:[%s5 + $0x34] sm:$0xf]
        %v1517 = vld [vmem:[%s5 + $0x38] sm:$0xf]
        %v1518 = vld [vmem:[%s5 + $0x3c] sm:$0xf]
        %v1519 = vld [vmem:[%s6] sm:$0x1]
        %v1521 = vlaneseq
        %v1522 = vshrl.u32 %v1521, 7
        %v1523 = vsub.s32 0, %v1522
        %v1524 = vrot.slane %v1519, %v1523
        %v1542 = vunpack.c.l.b16 %v1503
        %v1543 = vunpack.c.l.b16 %v1504
        %v1544 = vunpack.c.l.b16 %v1505
        %v1545 = vunpack.c.l.b16 %v1506
        %v1546 = vunpack.c.l.b16 %v1507
        %v1547 = vunpack.c.l.b16 %v1508
        %v1548 = vunpack.c.l.b16 %v1509
        %v1549 = vunpack.c.l.b16 %v1510
        %v1550 = vunpack.c.l.b16 %v1511
        %v1551 = vunpack.c.l.b16 %v1512
        %v1552 = vunpack.c.l.b16 %v1513
        %v1553 = vunpack.c.l.b16 %v1514
        %v1554 = vunpack.c.l.b16 %v1515
        %v1555 = vunpack.c.l.b16 %v1516
        %v1556 = vunpack.c.l.b16 %v1517
        %v1557 = vunpack.c.l.b16 %v1518
        %v1558 = vpack.c.b16 %v1543, %v1542
        %v1559 = vpack.c.b16 %v1545, %v1544
        %v1560 = vpack.c.b16 %v1547, %v1546
        %v1561 = vpack.c.b16 %v1549, %v1548
        %v1562 = vpack.c.b16 %v1551, %v1550
        %v1563 = vpack.c.b16 %v1553, %v1552
        %v1564 = vpack.c.b16 %v1555, %v1554
        %v1565 = vpack.c.b16 %v1557, %v1556
        %1574 = vmatprep.subr.bf16.mxu0 0
        %1575 = vmatpush1.bf16.msra.mxu0 %v1558
        %1576 = vmatprep.subr.bf16.mxu0 0
        %1577 = vmatpush1.bf16.msra.mxu0 %v1559
        %1578 = vmatprep.subr.bf16.mxu0 0
        %1579 = vmatpush1.bf16.msra.mxu0 %v1560
        %1580 = vmatprep.subr.bf16.mxu0 0
        %1581 = vmatpush1.bf16.msra.mxu0 %v1561
        %1582 = vmatprep.subr.bf16.mxu0 0
        %1583 = vmatpush1.bf16.msra.mxu0 %v1562
        %1584 = vmatprep.subr.bf16.mxu0 0
        %1585 = vmatpush1.bf16.msra.mxu0 %v1563
        %1586 = vmatprep.subr.bf16.mxu0 0
        %1587 = vmatpush1.bf16.msra.mxu0 %v1564
        %1588 = vmatprep.subr.bf16.mxu0 0
        %1589 = vmatpush1.bf16.msra.mxu0 %v1565
        %1590 = vmatprep.subr.bf16.mxu0 0
        %1591 = vmatpush1.bf16.msra.mxu0 0
        %1592 = vmatprep.subr.bf16.mxu0 0
        %1593 = vmatpush1.bf16.msra.mxu0 0
        %1594 = vmatprep.subr.bf16.mxu0 0
        %1595 = vmatpush1.bf16.msra.mxu0 0
        %1596 = vmatprep.subr.bf16.mxu0 0
        %1597 = vmatpush1.bf16.msra.mxu0 0
        %1598 = vmatprep.subr.bf16.mxu0 0
        %1599 = vmatpush1.bf16.msra.mxu0 0
        %1600 = vmatprep.subr.bf16.mxu0 0
        %1601 = vmatpush1.bf16.msra.mxu0 0
        %1602 = vmatprep.subr.bf16.mxu0 0
        %1603 = vmatpush1.bf16.msra.mxu0 0
        %1604 = vmatprep.subr.bf16.mxu0 0
        %1605 = vmatpush1.bf16.msra.mxu0 0
        %1606 = vmatprep.mubr.bf16.mxu0 0
        %1607 = vmatmul.mubr.bf16.gmra.mrb[0].mxu0 %v1501
        %v1608 = vpop.f32.mrb[0].mxu0
        %v1609 = vadd.f32 %v1524, %v1608
        %v1610 = vpop.f32.mrb[0].mxu0
        %v1611 = vpop.f32.mrb[0].mxu0
        %v1612 = vadd.f32 %v1524, %v1611
        %v1613 = vpop.f32.mrb[0].mxu0
        %1614 = vmatprep.mubr.bf16.mxu0 0
        %1615 = vmatmul.mubr.bf16.gmra.mrb[0].mxu0 %v1502
        %v1616 = vpop.f32.mrb[0].mxu0
        %v1617 = vadd.f32 %v1524, %v1616
        %v1618 = vpop.f32.mrb[0].mxu0
        %v1619 = vpop.f32.mrb[0].mxu0
        %v1620 = vadd.f32 %v1524, %v1619
        %v1621 = vpop.f32.mrb[0].mxu0
        %1622 = vdwg.mxu0
        %v1623 = vpack.c.bf16 %v1612, %v1609
        %v1624 = vpack.c.bf16 %v1620, %v1617
        %v1625 = vmax.bf16 %v1623, 0
        %v1626 = vmax.bf16 %v1624, 0
        %v1627 = vld [vmem:[%s7] sm:$0xf]
        %v1628 = vld [vmem:[%s7 + $0x4] sm:$0xf]
        %v1629 = vld [vmem:[%s7 + $0x8] sm:$0xf]
        %v1630 = vld [vmem:[%s7 + $0xc] sm:$0xf]
        %v1631 = vld [vmem:[%s7 + $0x10] sm:$0xf]
        %v1632 = vld [vmem:[%s7 + $0x14] sm:$0xf]
        %v1633 = vld [vmem:[%s7 + $0x18] sm:$0xf]
        %v1634 = vld [vmem:[%s7 + $0x1c] sm:$0xf]
        %v1635 = vld [vmem:[%s7 + $0x20] sm:$0xf]
        %v1636 = vld [vmem:[%s7 + $0x24] sm:$0xf]
        %v1637 = vld [vmem:[%s7 + $0x28] sm:$0xf]
        %v1638 = vld [vmem:[%s7 + $0x2c] sm:$0xf]
        %v1639 = vld [vmem:[%s7 + $0x30] sm:$0xf]
        %v1640 = vld [vmem:[%s7 + $0x34] sm:$0xf]
        %v1641 = vld [vmem:[%s7 + $0x38] sm:$0xf]
        %v1642 = vld [vmem:[%s7 + $0x3c] sm:$0xf]
        %v1643 = vld [vmem:[%s8] sm:$0x1]
        %v1645 = vlaneseq
        %v1646 = vshrl.u32 %v1645, 7
        %v1647 = vsub.s32 0, %v1646
        %v1648 = vrot.slane %v1643, %v1647
        %v1666 = vunpack.c.l.b16 %v1627
        %v1667 = vunpack.c.l.b16 %v1628
        %v1668 = vunpack.c.l.b16 %v1629
        %v1669 = vunpack.c.l.b16 %v1630
        %v1670 = vunpack.c.l.b16 %v1631
        %v1671 = vunpack.c.l.b16 %v1632
        %v1672 = vunpack.c.l.b16 %v1633
        %v1673 = vunpack.c.l.b16 %v1634
        %v1674 = vunpack.c.l.b16 %v1635
        %v1675 = vunpack.c.l.b16 %v1636
        %v1676 = vunpack.c.l.b16 %v1637
        %v1677 = vunpack.c.l.b16 %v1638
        %v1678 = vunpack.c.l.b16 %v1639
        %v1679 = vunpack.c.l.b16 %v1640
        %v1680 = vunpack.c.l.b16 %v1641
        %v1681 = vunpack.c.l.b16 %v1642
        %v1682 = vpack.c.b16 %v1667, %v1666
        %v1683 = vpack.c.b16 %v1669, %v1668
        %v1684 = vpack.c.b16 %v1671, %v1670
        %v1685 = vpack.c.b16 %v1673, %v1672
        %v1686 = vpack.c.b16 %v1675, %v1674
        %v1687 = vpack.c.b16 %v1677, %v1676
        %v1688 = vpack.c.b16 %v1679, %v1678
        %v1689 = vpack.c.b16 %v1681, %v1680
        %1698 = vmatprep.subr.bf16.mxu0 0
        %1699 = vmatpush1.bf16.msra.mxu0 %v1682
        %1700 = vmatprep.subr.bf16.mxu0 0
        %1701 = vmatpush1.bf16.msra.mxu0 %v1683
        %1702 = vmatprep.subr.bf16.mxu0 0
        %1703 = vmatpush1.bf16.msra.mxu0 %v1684
        %1704 = vmatprep.subr.bf16.mxu0 0
        %1705 = vmatpush1.bf16.msra.mxu0 %v1685
        %1706 = vmatprep.subr.bf16.mxu0 0
        %1707 = vmatpush1.bf16.msra.mxu0 %v1686
        %1708 = vmatprep.subr.bf16.mxu0 0
        %1709 = vmatpush1.bf16.msra.mxu0 %v1687
        %1710 = vmatprep.subr.bf16.mxu0 0
        %1711 = vmatpush1.bf16.msra.mxu0 %v1688
        %1712 = vmatprep.subr.bf16.mxu0 0
        %1713 = vmatpush1.bf16.msra.mxu0 %v1689
        %1714 = vmatprep.subr.bf16.mxu0 0
        %1715 = vmatpush1.bf16.msra.mxu0 0
        %1716 = vmatprep.subr.bf16.mxu0 0
        %1717 = vmatpush1.bf16.msra.mxu0 0
        %1718 = vmatprep.subr.bf16.mxu0 0
        %1719 = vmatpush1.bf16.msra.mxu0 0
        %1720 = vmatprep.subr.bf16.mxu0 0
        %1721 = vmatpush1.bf16.msra.mxu0 0
        %1722 = vmatprep.subr.bf16.mxu0 0
        %1723 = vmatpush1.bf16.msra.mxu0 0
        %1724 = vmatprep.subr.bf16.mxu0 0
        %1725 = vmatpush1.bf16.msra.mxu0 0
        %1726 = vmatprep.subr.bf16.mxu0 0
        %1727 = vmatpush1.bf16.msra.mxu0 0
        %1728 = vmatprep.subr.bf16.mxu0 0
        %1729 = vmatpush1.bf16.msra.mxu0 0
        %1730 = vmatprep.mubr.bf16.mxu0 0
        %1731 = vmatmul.mubr.bf16.gmra.mrb[0].mxu0 %v1625
        %v1732 = vpop.f32.mrb[0].mxu0
        %v1733 = vadd.f32 %v1648, %v1732
        %v1734 = vpop.f32.mrb[0].mxu0
        %v1735 = vpop.f32.mrb[0].mxu0
        %v1736 = vadd.f32 %v1648, %v1735
        %v1737 = vpop.f32.mrb[0].mxu0
        %1738 = vmatprep.mubr.bf16.mxu0 0
        %1739 = vmatmul.mubr.bf16.gmra.mrb[0].mxu0 %v1626
        %v1740 = vpop.f32.mrb[0].mxu0
        %v1741 = vadd.f32 %v1648, %v1740
        %v1742 = vpop.f32.mrb[0].mxu0
        %v1743 = vpop.f32.mrb[0].mxu0
        %v1744 = vadd.f32 %v1648, %v1743
        %v1745 = vpop.f32.mrb[0].mxu0
        %1746 = vdwg.mxu0
        %v1747 = vpack.c.bf16 %v1736, %v1733
        %v1748 = vpack.c.bf16 %v1744, %v1741
        %v1749 = vmax.bf16 %v1747, 0
        %v1750 = vmax.bf16 %v1748, 0
        %v1751 = vld [vmem:[%s9] sm:$0xff]
        %v1752 = vld [vmem:[%s9 + $0x8] sm:$0xff]
        %v1753 = vld [vmem:[%s9 + $0x10] sm:$0xff]
        %v1754 = vld [vmem:[%s9 + $0x18] sm:$0xff]
        %v1755 = vld [vmem:[%s9 + $0x20] sm:$0xff]
        %v1756 = vld [vmem:[%s9 + $0x28] sm:$0xff]
        %v1757 = vld [vmem:[%s9 + $0x30] sm:$0xff]
        %v1758 = vld [vmem:[%s9 + $0x38] sm:$0xff]
        %v1759 = vld [vmem:[%s9 + $0x40] sm:$0xff]
        %v1760 = vld [vmem:[%s9 + $0x48] sm:$0xff]
        %v1761 = vld [vmem:[%s9 + $0x50] sm:$0xff]
        %v1762 = vld [vmem:[%s9 + $0x58] sm:$0xff]
        %v1763 = vld [vmem:[%s9 + $0x60] sm:$0xff]
        %v1764 = vld [vmem:[%s9 + $0x68] sm:$0xff]
        %v1765 = vld [vmem:[%s9 + $0x70] sm:$0xff]
        %v1766 = vld [vmem:[%s9 + $0x78] sm:$0xff]
        %v1767 = vld [vmem:[%s10] sm:$0x3]
        %v1769 = vlaneseq
        %v1770 = vshrl.u32 %v1769, 7
        %v1771 = vsub.s32 0, %v1770
        %v1772 = vrot.slane %v1767, %v1771
        %v1773 = vlaneseq
        %v1774 = vshrl.u32 %v1773, 7
        %v1775 = vsub.s32 1, %v1774
        %v1776 = vrot.slane %v1767, %v1775
        %v1795 = vunpack.c.l.b16 %v1751
        %v1796 = vunpack.c.h.b16 %v1751
        %v1797 = vunpack.c.l.b16 %v1752
        %v1798 = vunpack.c.h.b16 %v1752
        %v1799 = vunpack.c.l.b16 %v1753
        %v1800 = vunpack.c.h.b16 %v1753
        %v1801 = vunpack.c.l.b16 %v1754
        %v1802 = vunpack.c.h.b16 %v1754
        %v1803 = vunpack.c.l.b16 %v1755
        %v1804 = vunpack.c.h.b16 %v1755
        %v1805 = vunpack.c.l.b16 %v1756
        %v1806 = vunpack.c.h.b16 %v1756
        %v1807 = vunpack.c.l.b16 %v1757
        %v1808 = vunpack.c.h.b16 %v1757
        %v1809 = vunpack.c.l.b16 %v1758
        %v1810 = vunpack.c.h.b16 %v1758
        %v1811 = vunpack.c.l.b16 %v1759
        %v1812 = vunpack.c.h.b16 %v1759
        %v1813 = vunpack.c.l.b16 %v1760
        %v1814 = vunpack.c.h.b16 %v1760
        %v1815 = vunpack.c.l.b16 %v1761
        %v1816 = vunpack.c.h.b16 %v1761
        %v1817 = vunpack.c.l.b16 %v1762
        %v1818 = vunpack.c.h.b16 %v1762
        %v1819 = vunpack.c.l.b16 %v1763
        %v1820 = vunpack.c.h.b16 %v1763
        %v1821 = vunpack.c.l.b16 %v1764
        %v1822 = vunpack.c.h.b16 %v1764
        %v1823 = vunpack.c.l.b16 %v1765
        %v1824 = vunpack.c.h.b16 %v1765
        %v1825 = vunpack.c.l.b16 %v1766
        %v1826 = vunpack.c.h.b16 %v1766
        %v1827 = vpack.c.b16 %v1797, %v1795
        %v1828 = vpack.c.b16 %v1798, %v1796
        %v1829 = vpack.c.b16 %v1801, %v1799
        %v1830 = vpack.c.b16 %v1802, %v1800
        %v1831 = vpack.c.b16 %v1805, %v1803
        %v1832 = vpack.c.b16 %v1806, %v1804
        %v1833 = vpack.c.b16 %v1809, %v1807
        %v1834 = vpack.c.b16 %v1810, %v1808
        %v1835 = vpack.c.b16 %v1813, %v1811
        %v1836 = vpack.c.b16 %v1814, %v1812
        %v1837 = vpack.c.b16 %v1817, %v1815
        %v1838 = vpack.c.b16 %v1818, %v1816
        %v1839 = vpack.c.b16 %v1821, %v1819
        %v1840 = vpack.c.b16 %v1822, %v1820
        %v1841 = vpack.c.b16 %v1825, %v1823
        %v1842 = vpack.c.b16 %v1826, %v1824
        %1859 = vmatprep.subr.bf16.mxu0 %v1828
        %1860 = vmatpush1.bf16.msra.mxu0 %v1827
        %1861 = vmatprep.subr.bf16.mxu0 %v1830
        %1862 = vmatpush1.bf16.msra.mxu0 %v1829
        %1863 = vmatprep.subr.bf16.mxu0 %v1832
        %1864 = vmatpush1.bf16.msra.mxu0 %v1831
        %1865 = vmatprep.subr.bf16.mxu0 %v1834
        %1866 = vmatpush1.bf16.msra.mxu0 %v1833
        %1867 = vmatprep.subr.bf16.mxu0 %v1836
        %1868 = vmatpush1.bf16.msra.mxu0 %v1835
        %1869 = vmatprep.subr.bf16.mxu0 %v1838
        %1870 = vmatpush1.bf16.msra.mxu0 %v1837
        %1871 = vmatprep.subr.bf16.mxu0 %v1840
        %1872 = vmatpush1.bf16.msra.mxu0 %v1839
        %1873 = vmatprep.subr.bf16.mxu0 %v1842
        %1874 = vmatpush1.bf16.msra.mxu0 %v1841
        %1875 = vmatprep.subr.bf16.mxu0 0
        %1876 = vmatpush1.bf16.msra.mxu0 0
        %1877 = vmatprep.subr.bf16.mxu0 0
        %1878 = vmatpush1.bf16.msra.mxu0 0
        %1879 = vmatprep.subr.bf16.mxu0 0
        %1880 = vmatpush1.bf16.msra.mxu0 0
        %1881 = vmatprep.subr.bf16.mxu0 0
        %1882 = vmatpush1.bf16.msra.mxu0 0
        %1883 = vmatprep.subr.bf16.mxu0 0
        %1884 = vmatpush1.bf16.msra.mxu0 0
        %1885 = vmatprep.subr.bf16.mxu0 0
        %1886 = vmatpush1.bf16.msra.mxu0 0
        %1887 = vmatprep.subr.bf16.mxu0 0
        %1888 = vmatpush1.bf16.msra.mxu0 0
        %1889 = vmatprep.subr.bf16.mxu0 0
        %1890 = vmatpush1.bf16.msra.mxu0 0
        %1891 = vmatprep.mubr.bf16.mxu0 0
        %1892 = vmatmul.mubr.bf16.gmra.mrb[0].mxu0 %v1749
        %v1893 = vpop.f32.mrb[0].mxu0
        %v1894 = vadd.f32 %v1772, %v1893
        %v1895 = vpop.f32.mrb[0].mxu0
        %v1896 = vadd.f32 %v1776, %v1895
        %v1897 = vpop.f32.mrb[0].mxu0
        %v1898 = vadd.f32 %v1772, %v1897
        %v1899 = vpop.f32.mrb[0].mxu0
        %v1900 = vadd.f32 %v1776, %v1899
        %1901 = vmatprep.mubr.bf16.mxu0 0
        %1902 = vmatmul.mubr.bf16.gmra.mrb[0].mxu0 %v1750
        %v1903 = vpop.f32.mrb[0].mxu0
        %v1904 = vadd.f32 %v1772, %v1903
        %v1905 = vpop.f32.mrb[0].mxu0
        %v1906 = vadd.f32 %v1776, %v1905
        %v1907 = vpop.f32.mrb[0].mxu0
        %v1908 = vadd.f32 %v1772, %v1907
        %v1909 = vpop.f32.mrb[0].mxu0
        %v1910 = vadd.f32 %v1776, %v1909
        %1911 = vdwg.mxu0
        %v1912 = vpack.c.bf16 %v1898, %v1894
        %v1913 = vpack.c.bf16 %v1900, %v1896
        %v1914 = vpack.c.bf16 %v1908, %v1904
        %v1915 = vpack.c.bf16 %v1910, %v1906
        %v1916 = vmax.bf16 %v1912, 0
        %v1917 = vmax.bf16 %v1913, 0
        %v1918 = vmax.bf16 %v1914, 0
        %v1919 = vmax.bf16 %v1915, 0
        %v1920 = vld [vmem:[%s11] sm:$0xff]
        %v1921 = vld [vmem:[%s11 + $0x8] sm:$0xff]
        %v1922 = vld [vmem:[%s11 + $0x10] sm:$0xff]
        %v1923 = vld [vmem:[%s11 + $0x18] sm:$0xf]
        %v1924 = vld [vmem:[%s11 + $0x1c] sm:$0xff]
        %v1925 = vld [vmem:[%s11 + $0x24] sm:$0xff]
        %v1926 = vld [vmem:[%s11 + $0x2c] sm:$0xff]
        %v1927 = vld [vmem:[%s11 + $0x34] sm:$0xf]
        %v1928 = vld [vmem:[%s11 + $0x38] sm:$0xff]
        %v1929 = vld [vmem:[%s11 + $0x40] sm:$0xff]
        %v1930 = vld [vmem:[%s11 + $0x48] sm:$0xff]
        %v1931 = vld [vmem:[%s11 + $0x50] sm:$0xf]
        %v1932 = vld [vmem:[%s11 + $0x54] sm:$0xff]
        %v1933 = vld [vmem:[%s11 + $0x5c] sm:$0xff]
        %v1934 = vld [vmem:[%s11 + $0x64] sm:$0xff]
        %v1935 = vld [vmem:[%s11 + $0x6c] sm:$0xf]
        %v1936 = vld [vmem:[%s11 + $0x70] sm:$0xff]
        %v1937 = vld [vmem:[%s11 + $0x78] sm:$0xff]
        %v1938 = vld [vmem:[%s11 + $0x80] sm:$0xff]
        %v1939 = vld [vmem:[%s11 + $0x88] sm:$0xf]
        %v1940 = vld [vmem:[%s11 + $0x8c] sm:$0xff]
        %v1941 = vld [vmem:[%s11 + $0x94] sm:$0xff]
        %v1942 = vld [vmem:[%s11 + $0x9c] sm:$0xff]
        %v1943 = vld [vmem:[%s11 + $0xa4] sm:$0xf]
        %v1944 = vld [vmem:[%s11 + $0xa8] sm:$0xff]
        %v1945 = vld [vmem:[%s11 + $0xb0] sm:$0xff]
        %v1946 = vld [vmem:[%s11 + $0xb8] sm:$0xff]
        %v1947 = vld [vmem:[%s11 + $0xc0] sm:$0xf]
        %v1948 = vld [vmem:[%s11 + $0xc4] sm:$0xff]
        %v1949 = vld [vmem:[%s11 + $0xcc] sm:$0xff]
        %v1950 = vld [vmem:[%s11 + $0xd4] sm:$0xff]
        %v1951 = vld [vmem:[%s11 + $0xdc] sm:$0xf]
        %v1952 = vld [vmem:[%s11 + $0xe0] sm:$0xff]
        %v1953 = vld [vmem:[%s11 + $0xe8] sm:$0xff]
        %v1954 = vld [vmem:[%s11 + $0xf0] sm:$0xff]
        %v1955 = vld [vmem:[%s11 + $0xf8] sm:$0xf]
        %v1956 = vld [vmem:[%s11 + $0xfc] sm:$0xff]
        %v1957 = vld [vmem:[%s11 + $0x104] sm:$0xff]
        %v1958 = vld [vmem:[%s11 + $0x10c] sm:$0xff]
        %v1959 = vld [vmem:[%s11 + $0x114] sm:$0xf]
        %v1960 = vld [vmem:[%s11 + $0x118] sm:$0xff]
        %v1961 = vld [vmem:[%s11 + $0x120] sm:$0xff]
        %v1962 = vld [vmem:[%s11 + $0x128] sm:$0xff]
        %v1963 = vld [vmem:[%s11 + $0x130] sm:$0xf]
        %v1964 = vld [vmem:[%s11 + $0x134] sm:$0xff]
        %v1965 = vld [vmem:[%s11 + $0x13c] sm:$0xff]
        %v1966 = vld [vmem:[%s11 + $0x144] sm:$0xff]
        %v1967 = vld [vmem:[%s11 + $0x14c] sm:$0xf]
        %v1968 = vld [vmem:[%s11 + $0x150] sm:$0xff]
        %v1969 = vld [vmem:[%s11 + $0x158] sm:$0xff]
        %v1970 = vld [vmem:[%s11 + $0x160] sm:$0xff]
        %v1971 = vld [vmem:[%s11 + $0x168] sm:$0xf]
        %v1972 = vld [vmem:[%s11 + $0x16c] sm:$0xff]
        %v1973 = vld [vmem:[%s11 + $0x174] sm:$0xff]
        %v1974 = vld [vmem:[%s11 + $0x17c] sm:$0xff]
        %v1975 = vld [vmem:[%s11 + $0x184] sm:$0xf]
        %v1976 = vld [vmem:[%s11 + $0x188] sm:$0xff]
        %v1977 = vld [vmem:[%s11 + $0x190] sm:$0xff]
        %v1978 = vld [vmem:[%s11 + $0x198] sm:$0xff]
        %v1979 = vld [vmem:[%s11 + $0x1a0] sm:$0xf]
        %v1980 = vld [vmem:[%s11 + $0x1a4] sm:$0xff]
        %v1981 = vld [vmem:[%s11 + $0x1ac] sm:$0xff]
        %v1982 = vld [vmem:[%s11 + $0x1b4] sm:$0xff]
        %v1983 = vld [vmem:[%s11 + $0x1bc] sm:$0xf]
        %v1984 = vld [vmem:[%s11 + $0x1c0] sm:$0xff]
        %v1985 = vld [vmem:[%s11 + $0x1c8] sm:$0xff]
        %v1986 = vld [vmem:[%s11 + $0x1d0] sm:$0xff]
        %v1987 = vld [vmem:[%s11 + $0x1d8] sm:$0xf]
        %v1988 = vld [vmem:[%s11 + $0x1dc] sm:$0xff]
        %v1989 = vld [vmem:[%s11 + $0x1e4] sm:$0xff]
        %v1990 = vld [vmem:[%s11 + $0x1ec] sm:$0xff]
        %v1991 = vld [vmem:[%s11 + $0x1f4] sm:$0xf]
        %v1992 = vld [vmem:[%s11 + $0x1f8] sm:$0xff]
        %v1993 = vld [vmem:[%s11 + $0x200] sm:$0xff]
        %v1994 = vld [vmem:[%s11 + $0x208] sm:$0xff]
        %v1995 = vld [vmem:[%s11 + $0x210] sm:$0xf]
        %v1996 = vld [vmem:[%s11 + $0x214] sm:$0xff]
        %v1997 = vld [vmem:[%s11 + $0x21c] sm:$0xff]
        %v1998 = vld [vmem:[%s11 + $0x224] sm:$0xff]
        %v1999 = vld [vmem:[%s11 + $0x22c] sm:$0xf]
        %v2000 = vld [vmem:[%s11 + $0x230] sm:$0xff]
        %v2001 = vld [vmem:[%s11 + $0x238] sm:$0xff]
        %v2002 = vld [vmem:[%s11 + $0x240] sm:$0xff]
        %v2003 = vld [vmem:[%s11 + $0x248] sm:$0xf]
        %v2004 = vld [vmem:[%s11 + $0x24c] sm:$0xff]
        %v2005 = vld [vmem:[%s11 + $0x254] sm:$0xff]
        %v2006 = vld [vmem:[%s11 + $0x25c] sm:$0xff]
        %v2007 = vld [vmem:[%s11 + $0x264] sm:$0xf]
        %v2008 = vld [vmem:[%s11 + $0x268] sm:$0xff]
        %v2009 = vld [vmem:[%s11 + $0x270] sm:$0xff]
        %v2010 = vld [vmem:[%s11 + $0x278] sm:$0xff]
        %v2011 = vld [vmem:[%s11 + $0x280] sm:$0xf]
        %v2012 = vld [vmem:[%s11 + $0x284] sm:$0xff]
        %v2013 = vld [vmem:[%s11 + $0x28c] sm:$0xff]
        %v2014 = vld [vmem:[%s11 + $0x294] sm:$0xff]
        %v2015 = vld [vmem:[%s11 + $0x29c] sm:$0xf]
        %v2016 = vld [vmem:[%s11 + $0x2a0] sm:$0xff]
        %v2017 = vld [vmem:[%s11 + $0x2a8] sm:$0xff]
        %v2018 = vld [vmem:[%s11 + $0x2b0] sm:$0xff]
        %v2019 = vld [vmem:[%s11 + $0x2b8] sm:$0xf]
        %v2020 = vld [vmem:[%s11 + $0x2bc] sm:$0xff]
        %v2021 = vld [vmem:[%s11 + $0x2c4] sm:$0xff]
        %v2022 = vld [vmem:[%s11 + $0x2cc] sm:$0xff]
        %v2023 = vld [vmem:[%s11 + $0x2d4] sm:$0xf]
        %v2024 = vld [vmem:[%s11 + $0x2d8] sm:$0xff]
        %v2025 = vld [vmem:[%s11 + $0x2e0] sm:$0xff]
        %v2026 = vld [vmem:[%s11 + $0x2e8] sm:$0xff]
        %v2027 = vld [vmem:[%s11 + $0x2f0] sm:$0xf]
        %v2028 = vld [vmem:[%s11 + $0x2f4] sm:$0xff]
        %v2029 = vld [vmem:[%s11 + $0x2fc] sm:$0xff]
        %v2030 = vld [vmem:[%s11 + $0x304] sm:$0xff]
        %v2031 = vld [vmem:[%s11 + $0x30c] sm:$0xf]
        %v2032 = vld [vmem:[%s11 + $0x310] sm:$0xff]
        %v2033 = vld [vmem:[%s11 + $0x318] sm:$0xff]
        %v2034 = vld [vmem:[%s11 + $0x320] sm:$0xff]
        %v2035 = vld [vmem:[%s11 + $0x328] sm:$0xf]
        %v2036 = vld [vmem:[%s11 + $0x32c] sm:$0xff]
        %v2037 = vld [vmem:[%s11 + $0x334] sm:$0xff]
        %v2038 = vld [vmem:[%s11 + $0x33c] sm:$0xff]
        %v2039 = vld [vmem:[%s11 + $0x344] sm:$0xf]
        %v2040 = vld [vmem:[%s11 + $0x348] sm:$0xff]
        %v2041 = vld [vmem:[%s11 + $0x350] sm:$0xff]
        %v2042 = vld [vmem:[%s11 + $0x358] sm:$0xff]
        %v2043 = vld [vmem:[%s11 + $0x360] sm:$0xf]
        %v2044 = vld [vmem:[%s11 + $0x364] sm:$0xff]
        %v2045 = vld [vmem:[%s11 + $0x36c] sm:$0xff]
        %v2046 = vld [vmem:[%s11 + $0x374] sm:$0xff]
        %v2047 = vld [vmem:[%s11 + $0x37c] sm:$0xf]
        %v2048 = vld [vmem:[%s12] sm:$0x7f]
        %v2050 = vlaneseq
        %v2051 = vshrl.u32 %v2050, 7
        %v2052 = vsub.s32 0, %v2051
        %v2053 = vrot.slane %v2048, %v2052
        %v2054 = vlaneseq
        %v2055 = vshrl.u32 %v2054, 7
        %v2056 = vsub.s32 1, %v2055
        %v2057 = vrot.slane %v2048, %v2056
        %v2058 = vlaneseq
        %v2059 = vshrl.u32 %v2058, 7
        %v2060 = vsub.s32 2, %v2059
        %v2061 = vrot.slane %v2048, %v2060
        %v2062 = vlaneseq
        %v2063 = vshrl.u32 %v2062, 7
        %v2064 = vsub.s32 3, %v2063
        %v2065 = vrot.slane %v2048, %v2064
        %v2066 = vlaneseq
        %v2067 = vshrl.u32 %v2066, 7
        %v2068 = vsub.s32 4, %v2067
        %v2069 = vrot.slane %v2048, %v2068
        %v2070 = vlaneseq
        %v2071 = vshrl.u32 %v2070, 7
        %v2072 = vsub.s32 5, %v2071
        %v2073 = vrot.slane %v2048, %v2072
        %v2074 = vlaneseq
        %v2075 = vshrl.u32 %v2074, 7
        %v2076 = vsub.s32 6, %v2075
        %v2077 = vrot.slane %v2048, %v2076
        %v2213 = vunpack.c.l.b16 %v1920
        %v2214 = vunpack.c.h.b16 %v1920
        %v2215 = vunpack.c.l.b16 %v1921
        %v2216 = vunpack.c.h.b16 %v1921
        %v2217 = vunpack.c.l.b16 %v1922
        %v2218 = vunpack.c.h.b16 %v1922
        %v2219 = vunpack.c.l.b16 %v1923
        %v2220 = vunpack.c.l.b16 %v1924
        %v2221 = vunpack.c.h.b16 %v1924
        %v2222 = vunpack.c.l.b16 %v1925
        %v2223 = vunpack.c.h.b16 %v1925
        %v2224 = vunpack.c.l.b16 %v1926
        %v2225 = vunpack.c.h.b16 %v1926
        %v2226 = vunpack.c.l.b16 %v1927
        %v2227 = vunpack.c.l.b16 %v1928
        %v2228 = vunpack.c.h.b16 %v1928
        %v2229 = vunpack.c.l.b16 %v1929
        %v2230 = vunpack.c.h.b16 %v1929
        %v2231 = vunpack.c.l.b16 %v1930
        %v2232 = vunpack.c.h.b16 %v1930
        %v2233 = vunpack.c.l.b16 %v1931
        %v2234 = vunpack.c.l.b16 %v1932
        %v2235 = vunpack.c.h.b16 %v1932
        %v2236 = vunpack.c.l.b16 %v1933
        %v2237 = vunpack.c.h.b16 %v1933
        %v2238 = vunpack.c.l.b16 %v1934
        %v2239 = vunpack.c.h.b16 %v1934
        %v2240 = vunpack.c.l.b16 %v1935
        %v2241 = vunpack.c.l.b16 %v1936
        %v2242 = vunpack.c.h.b16 %v1936
        %v2243 = vunpack.c.l.b16 %v1937
        %v2244 = vunpack.c.h.b16 %v1937
        %v2245 = vunpack.c.l.b16 %v1938
        %v2246 = vunpack.c.h.b16 %v1938
        %v2247 = vunpack.c.l.b16 %v1939
        %v2248 = vunpack.c.l.b16 %v1940
        %v2249 = vunpack.c.h.b16 %v1940
        %v2250 = vunpack.c.l.b16 %v1941
        %v2251 = vunpack.c.h.b16 %v1941
        %v2252 = vunpack.c.l.b16 %v1942
        %v2253 = vunpack.c.h.b16 %v1942
        %v2254 = vunpack.c.l.b16 %v1943
        %v2255 = vunpack.c.l.b16 %v1944
        %v2256 = vunpack.c.h.b16 %v1944
        %v2257 = vunpack.c.l.b16 %v1945
        %v2258 = vunpack.c.h.b16 %v1945
        %v2259 = vunpack.c.l.b16 %v1946
        %v2260 = vunpack.c.h.b16 %v1946
        %v2261 = vunpack.c.l.b16 %v1947
        %v2262 = vunpack.c.l.b16 %v1948
        %v2263 = vunpack.c.h.b16 %v1948
        %v2264 = vunpack.c.l.b16 %v1949
        %v2265 = vunpack.c.h.b16 %v1949
        %v2266 = vunpack.c.l.b16 %v1950
        %v2267 = vunpack.c.h.b16 %v1950
        %v2268 = vunpack.c.l.b16 %v1951
        %v2269 = vunpack.c.l.b16 %v1952
        %v2270 = vunpack.c.h.b16 %v1952
        %v2271 = vunpack.c.l.b16 %v1953
        %v2272 = vunpack.c.h.b16 %v1953
        %v2273 = vunpack.c.l.b16 %v1954
        %v2274 = vunpack.c.h.b16 %v1954
        %v2275 = vunpack.c.l.b16 %v1955
        %v2276 = vunpack.c.l.b16 %v1956
        %v2277 = vunpack.c.h.b16 %v1956
        %v2278 = vunpack.c.l.b16 %v1957
        %v2279 = vunpack.c.h.b16 %v1957
        %v2280 = vunpack.c.l.b16 %v1958
        %v2281 = vunpack.c.h.b16 %v1958
        %v2282 = vunpack.c.l.b16 %v1959
        %v2283 = vunpack.c.l.b16 %v1960
        %v2284 = vunpack.c.h.b16 %v1960
        %v2285 = vunpack.c.l.b16 %v1961
        %v2286 = vunpack.c.h.b16 %v1961
        %v2287 = vunpack.c.l.b16 %v1962
        %v2288 = vunpack.c.h.b16 %v1962
        %v2289 = vunpack.c.l.b16 %v1963
        %v2290 = vunpack.c.l.b16 %v1964
        %v2291 = vunpack.c.h.b16 %v1964
        %v2292 = vunpack.c.l.b16 %v1965
        %v2293 = vunpack.c.h.b16 %v1965
        %v2294 = vunpack.c.l.b16 %v1966
        %v2295 = vunpack.c.h.b16 %v1966
        %v2296 = vunpack.c.l.b16 %v1967
        %v2297 = vunpack.c.l.b16 %v1968
        %v2298 = vunpack.c.h.b16 %v1968
        %v2299 = vunpack.c.l.b16 %v1969
        %v2300 = vunpack.c.h.b16 %v1969
        %v2301 = vunpack.c.l.b16 %v1970
        %v2302 = vunpack.c.h.b16 %v1970
        %v2303 = vunpack.c.l.b16 %v1971
        %v2304 = vunpack.c.l.b16 %v1972
        %v2305 = vunpack.c.h.b16 %v1972
        %v2306 = vunpack.c.l.b16 %v1973
        %v2307 = vunpack.c.h.b16 %v1973
        %v2308 = vunpack.c.l.b16 %v1974
        %v2309 = vunpack.c.h.b16 %v1974
        %v2310 = vunpack.c.l.b16 %v1975
        %v2311 = vunpack.c.l.b16 %v1976
        %v2312 = vunpack.c.h.b16 %v1976
        %v2313 = vunpack.c.l.b16 %v1977
        %v2314 = vunpack.c.h.b16 %v1977
        %v2315 = vunpack.c.l.b16 %v1978
        %v2316 = vunpack.c.h.b16 %v1978
        %v2317 = vunpack.c.l.b16 %v1979
        %v2318 = vunpack.c.l.b16 %v1980
        %v2319 = vunpack.c.h.b16 %v1980
        %v2320 = vunpack.c.l.b16 %v1981
        %v2321 = vunpack.c.h.b16 %v1981
        %v2322 = vunpack.c.l.b16 %v1982
        %v2323 = vunpack.c.h.b16 %v1982
        %v2324 = vunpack.c.l.b16 %v1983
        %v2325 = vunpack.c.l.b16 %v1984
        %v2326 = vunpack.c.h.b16 %v1984
        %v2327 = vunpack.c.l.b16 %v1985
        %v2328 = vunpack.c.h.b16 %v1985
        %v2329 = vunpack.c.l.b16 %v1986
        %v2330 = vunpack.c.h.b16 %v1986
        %v2331 = vunpack.c.l.b16 %v1987
        %v2332 = vunpack.c.l.b16 %v1988
        %v2333 = vunpack.c.h.b16 %v1988
        %v2334 = vunpack.c.l.b16 %v1989
        %v2335 = vunpack.c.h.b16 %v1989
        %v2336 = vunpack.c.l.b16 %v1990
        %v2337 = vunpack.c.h.b16 %v1990
        %v2338 = vunpack.c.l.b16 %v1991
        %v2339 = vunpack.c.l.b16 %v1992
        %v2340 = vunpack.c.h.b16 %v1992
        %v2341 = vunpack.c.l.b16 %v1993
        %v2342 = vunpack.c.h.b16 %v1993
        %v2343 = vunpack.c.l.b16 %v1994
        %v2344 = vunpack.c.h.b16 %v1994
        %v2345 = vunpack.c.l.b16 %v1995
        %v2346 = vunpack.c.l.b16 %v1996
        %v2347 = vunpack.c.h.b16 %v1996
        %v2348 = vunpack.c.l.b16 %v1997
        %v2349 = vunpack.c.h.b16 %v1997
        %v2350 = vunpack.c.l.b16 %v1998
        %v2351 = vunpack.c.h.b16 %v1998
        %v2352 = vunpack.c.l.b16 %v1999
        %v2353 = vunpack.c.l.b16 %v2000
        %v2354 = vunpack.c.h.b16 %v2000
        %v2355 = vunpack.c.l.b16 %v2001
        %v2356 = vunpack.c.h.b16 %v2001
        %v2357 = vunpack.c.l.b16 %v2002
        %v2358 = vunpack.c.h.b16 %v2002
        %v2359 = vunpack.c.l.b16 %v2003
        %v2360 = vunpack.c.l.b16 %v2004
        %v2361 = vunpack.c.h.b16 %v2004
        %v2362 = vunpack.c.l.b16 %v2005
        %v2363 = vunpack.c.h.b16 %v2005
        %v2364 = vunpack.c.l.b16 %v2006
        %v2365 = vunpack.c.h.b16 %v2006
        %v2366 = vunpack.c.l.b16 %v2007
        %v2367 = vunpack.c.l.b16 %v2008
        %v2368 = vunpack.c.h.b16 %v2008
        %v2369 = vunpack.c.l.b16 %v2009
        %v2370 = vunpack.c.h.b16 %v2009
        %v2371 = vunpack.c.l.b16 %v2010
        %v2372 = vunpack.c.h.b16 %v2010
        %v2373 = vunpack.c.l.b16 %v2011
        %v2374 = vunpack.c.l.b16 %v2012
        %v2375 = vunpack.c.h.b16 %v2012
        %v2376 = vunpack.c.l.b16 %v2013
        %v2377 = vunpack.c.h.b16 %v2013
        %v2378 = vunpack.c.l.b16 %v2014
        %v2379 = vunpack.c.h.b16 %v2014
        %v2380 = vunpack.c.l.b16 %v2015
        %v2381 = vunpack.c.l.b16 %v2016
        %v2382 = vunpack.c.h.b16 %v2016
        %v2383 = vunpack.c.l.b16 %v2017
        %v2384 = vunpack.c.h.b16 %v2017
        %v2385 = vunpack.c.l.b16 %v2018
        %v2386 = vunpack.c.h.b16 %v2018
        %v2387 = vunpack.c.l.b16 %v2019
        %v2388 = vunpack.c.l.b16 %v2020
        %v2389 = vunpack.c.h.b16 %v2020
        %v2390 = vunpack.c.l.b16 %v2021
        %v2391 = vunpack.c.h.b16 %v2021
        %v2392 = vunpack.c.l.b16 %v2022
        %v2393 = vunpack.c.h.b16 %v2022
        %v2394 = vunpack.c.l.b16 %v2023
        %v2395 = vunpack.c.l.b16 %v2024
        %v2396 = vunpack.c.h.b16 %v2024
        %v2397 = vunpack.c.l.b16 %v2025
        %v2398 = vunpack.c.h.b16 %v2025
        %v2399 = vunpack.c.l.b16 %v2026
        %v2400 = vunpack.c.h.b16 %v2026
        %v2401 = vunpack.c.l.b16 %v2027
        %v2402 = vunpack.c.l.b16 %v2028
        %v2403 = vunpack.c.h.b16 %v2028
        %v2404 = vunpack.c.l.b16 %v2029
        %v2405 = vunpack.c.h.b16 %v2029
        %v2406 = vunpack.c.l.b16 %v2030
        %v2407 = vunpack.c.h.b16 %v2030
        %v2408 = vunpack.c.l.b16 %v2031
        %v2409 = vunpack.c.l.b16 %v2032
        %v2410 = vunpack.c.h.b16 %v2032
        %v2411 = vunpack.c.l.b16 %v2033
        %v2412 = vunpack.c.h.b16 %v2033
        %v2413 = vunpack.c.l.b16 %v2034
        %v2414 = vunpack.c.h.b16 %v2034
        %v2415 = vunpack.c.l.b16 %v2035
        %v2416 = vunpack.c.l.b16 %v2036
        %v2417 = vunpack.c.h.b16 %v2036
        %v2418 = vunpack.c.l.b16 %v2037
        %v2419 = vunpack.c.h.b16 %v2037
        %v2420 = vunpack.c.l.b16 %v2038
        %v2421 = vunpack.c.h.b16 %v2038
        %v2422 = vunpack.c.l.b16 %v2039
        %v2423 = vunpack.c.l.b16 %v2040
        %v2424 = vunpack.c.h.b16 %v2040
        %v2425 = vunpack.c.l.b16 %v2041
        %v2426 = vunpack.c.h.b16 %v2041
        %v2427 = vunpack.c.l.b16 %v2042
        %v2428 = vunpack.c.h.b16 %v2042
        %v2429 = vunpack.c.l.b16 %v2043
        %v2430 = vunpack.c.l.b16 %v2044
        %v2431 = vunpack.c.h.b16 %v2044
        %v2432 = vunpack.c.l.b16 %v2045
        %v2433 = vunpack.c.h.b16 %v2045
        %v2434 = vunpack.c.l.b16 %v2046
        %v2435 = vunpack.c.h.b16 %v2046
        %v2436 = vunpack.c.l.b16 %v2047
        %v2437 = vpack.c.b16 %v2220, %v2213
        %v2438 = vpack.c.b16 %v2221, %v2214
        %v2439 = vpack.c.b16 %v2222, %v2215
        %v2440 = vpack.c.b16 %v2223, %v2216
        %v2441 = vpack.c.b16 %v2224, %v2217
        %v2442 = vpack.c.b16 %v2225, %v2218
        %v2443 = vpack.c.b16 %v2226, %v2219
        %v2444 = vpack.c.b16 %v2234, %v2227
        %v2445 = vpack.c.b16 %v2235, %v2228
        %v2446 = vpack.c.b16 %v2236, %v2229
        %v2447 = vpack.c.b16 %v2237, %v2230
        %v2448 = vpack.c.b16 %v2238, %v2231
        %v2449 = vpack.c.b16 %v2239, %v2232
        %v2450 = vpack.c.b16 %v2240, %v2233
        %v2451 = vpack.c.b16 %v2248, %v2241
        %v2452 = vpack.c.b16 %v2249, %v2242
        %v2453 = vpack.c.b16 %v2250, %v2243
        %v2454 = vpack.c.b16 %v2251, %v2244
        %v2455 = vpack.c.b16 %v2252, %v2245
        %v2456 = vpack.c.b16 %v2253, %v2246
        %v2457 = vpack.c.b16 %v2254, %v2247
        %v2458 = vpack.c.b16 %v2262, %v2255
        %v2459 = vpack.c.b16 %v2263, %v2256
        %v2460 = vpack.c.b16 %v2264, %v2257
        %v2461 = vpack.c.b16 %v2265, %v2258
        %v2462 = vpack.c.b16 %v2266, %v2259
        %v2463 = vpack.c.b16 %v2267, %v2260
        %v2464 = vpack.c.b16 %v2268, %v2261
        %v2465 = vpack.c.b16 %v2276, %v2269
        %v2466 = vpack.c.b16 %v2277, %v2270
        %v2467 = vpack.c.b16 %v2278, %v2271
        %v2468 = vpack.c.b16 %v2279, %v2272
        %v2469 = vpack.c.b16 %v2280, %v2273
        %v2470 = vpack.c.b16 %v2281, %v2274
        %v2471 = vpack.c.b16 %v2282, %v2275
        %v2472 = vpack.c.b16 %v2290, %v2283
        %v2473 = vpack.c.b16 %v2291, %v2284
        %v2474 = vpack.c.b16 %v2292, %v2285
        %v2475 = vpack.c.b16 %v2293, %v2286
        %v2476 = vpack.c.b16 %v2294, %v2287
        %v2477 = vpack.c.b16 %v2295, %v2288
        %v2478 = vpack.c.b16 %v2296, %v2289
        %v2479 = vpack.c.b16 %v2304, %v2297
        %v2480 = vpack.c.b16 %v2305, %v2298
        %v2481 = vpack.c.b16 %v2306, %v2299
        %v2482 = vpack.c.b16 %v2307, %v2300
        %v2483 = vpack.c.b16 %v2308, %v2301
        %v2484 = vpack.c.b16 %v2309, %v2302
        %v2485 = vpack.c.b16 %v2310, %v2303
        %v2486 = vpack.c.b16 %v2318, %v2311
        %v2487 = vpack.c.b16 %v2319, %v2312
        %v2488 = vpack.c.b16 %v2320, %v2313
        %v2489 = vpack.c.b16 %v2321, %v2314
        %v2490 = vpack.c.b16 %v2322, %v2315
        %v2491 = vpack.c.b16 %v2323, %v2316
        %v2492 = vpack.c.b16 %v2324, %v2317
        %v2493 = vpack.c.b16 %v2332, %v2325
        %v2494 = vpack.c.b16 %v2333, %v2326
        %v2495 = vpack.c.b16 %v2334, %v2327
        %v2496 = vpack.c.b16 %v2335, %v2328
        %v2497 = vpack.c.b16 %v2336, %v2329
        %v2498 = vpack.c.b16 %v2337, %v2330
        %v2499 = vpack.c.b16 %v2338, %v2331
        %v2500 = vpack.c.b16 %v2346, %v2339
        %v2501 = vpack.c.b16 %v2347, %v2340
        %v2502 = vpack.c.b16 %v2348, %v2341
        %v2503 = vpack.c.b16 %v2349, %v2342
        %v2504 = vpack.c.b16 %v2350, %v2343
        %v2505 = vpack.c.b16 %v2351, %v2344
        %v2506 = vpack.c.b16 %v2352, %v2345
        %v2507 = vpack.c.b16 %v2360, %v2353
        %v2508 = vpack.c.b16 %v2361, %v2354
        %v2509 = vpack.c.b16 %v2362, %v2355
        %v2510 = vpack.c.b16 %v2363, %v2356
        %v2511 = vpack.c.b16 %v2364, %v2357
        %v2512 = vpack.c.b16 %v2365, %v2358
        %v2513 = vpack.c.b16 %v2366, %v2359
        %v2514 = vpack.c.b16 %v2374, %v2367
        %v2515 = vpack.c.b16 %v2375, %v2368
        %v2516 = vpack.c.b16 %v2376, %v2369
        %v2517 = vpack.c.b16 %v2377, %v2370
        %v2518 = vpack.c.b16 %v2378, %v2371
        %v2519 = vpack.c.b16 %v2379, %v2372
        %v2520 = vpack.c.b16 %v2380, %v2373
        %v2521 = vpack.c.b16 %v2388, %v2381
        %v2522 = vpack.c.b16 %v2389, %v2382
        %v2523 = vpack.c.b16 %v2390, %v2383
        %v2524 = vpack.c.b16 %v2391, %v2384
        %v2525 = vpack.c.b16 %v2392, %v2385
        %v2526 = vpack.c.b16 %v2393, %v2386
        %v2527 = vpack.c.b16 %v2394, %v2387
        %v2528 = vpack.c.b16 %v2402, %v2395
        %v2529 = vpack.c.b16 %v2403, %v2396
        %v2530 = vpack.c.b16 %v2404, %v2397
        %v2531 = vpack.c.b16 %v2405, %v2398
        %v2532 = vpack.c.b16 %v2406, %v2399
        %v2533 = vpack.c.b16 %v2407, %v2400
        %v2534 = vpack.c.b16 %v2408, %v2401
        %v2535 = vpack.c.b16 %v2416, %v2409
        %v2536 = vpack.c.b16 %v2417, %v2410
        %v2537 = vpack.c.b16 %v2418, %v2411
        %v2538 = vpack.c.b16 %v2419, %v2412
        %v2539 = vpack.c.b16 %v2420, %v2413
        %v2540 = vpack.c.b16 %v2421, %v2414
        %v2541 = vpack.c.b16 %v2422, %v2415
        %v2542 = vpack.c.b16 %v2430, %v2423
        %v2543 = vpack.c.b16 %v2431, %v2424
        %v2544 = vpack.c.b16 %v2432, %v2425
        %v2545 = vpack.c.b16 %v2433, %v2426
        %v2546 = vpack.c.b16 %v2434, %v2427
        %v2547 = vpack.c.b16 %v2435, %v2428
        %v2548 = vpack.c.b16 %v2436, %v2429
        %2661 = vmatprep.subr.bf16.mxu0 %v2438
        %2662 = vmatpush1.bf16.msra.mxu0 %v2437
        %2663 = vmatprep.subr.bf16.mxu0 %v2445
        %2664 = vmatpush1.bf16.msra.mxu0 %v2444
        %2665 = vmatprep.subr.bf16.mxu0 %v2452
        %2666 = vmatpush1.bf16.msra.mxu0 %v2451
        %2667 = vmatprep.subr.bf16.mxu0 %v2459
        %2668 = vmatpush1.bf16.msra.mxu0 %v2458
        %2669 = vmatprep.subr.bf16.mxu0 %v2466
        %2670 = vmatpush1.bf16.msra.mxu0 %v2465
        %2671 = vmatprep.subr.bf16.mxu0 %v2473
        %2672 = vmatpush1.bf16.msra.mxu0 %v2472
        %2673 = vmatprep.subr.bf16.mxu0 %v2480
        %2674 = vmatpush1.bf16.msra.mxu0 %v2479
        %2675 = vmatprep.subr.bf16.mxu0 %v2487
        %2676 = vmatpush1.bf16.msra.mxu0 %v2486
        %2677 = vmatprep.subr.bf16.mxu0 %v2494
        %2678 = vmatpush1.bf16.msra.mxu0 %v2493
        %2679 = vmatprep.subr.bf16.mxu0 %v2501
        %2680 = vmatpush1.bf16.msra.mxu0 %v2500
        %2681 = vmatprep.subr.bf16.mxu0 %v2508
        %2682 = vmatpush1.bf16.msra.mxu0 %v2507
        %2683 = vmatprep.subr.bf16.mxu0 %v2515
        %2684 = vmatpush1.bf16.msra.mxu0 %v2514
        %2685 = vmatprep.subr.bf16.mxu0 %v2522
        %2686 = vmatpush1.bf16.msra.mxu0 %v2521
        %2687 = vmatprep.subr.bf16.mxu0 %v2529
        %2688 = vmatpush1.bf16.msra.mxu0 %v2528
        %2689 = vmatprep.subr.bf16.mxu0 %v2536
        %2690 = vmatpush1.bf16.msra.mxu0 %v2535
        %2691 = vmatprep.subr.bf16.mxu0 %v2543
        %2692 = vmatpush1.bf16.msra.mxu0 %v2542
        %2693 = vmatprep.mubr.bf16.mxu0 %v1917
        %2694 = vmatmul.mubr.bf16.gmra.mrb[0].mxu0 %v1916
        %v2695 = vpop.f32.mrb[0].mxu0
        %v2696 = vadd.f32 %v2053, %v2695
        %v2697 = vpop.f32.mrb[0].mxu0
        %v2698 = vadd.f32 %v2057, %v2697
        %v2699 = vpop.f32.mrb[0].mxu0
        %v2700 = vadd.f32 %v2053, %v2699
        %v2701 = vpop.f32.mrb[0].mxu0
        %v2702 = vadd.f32 %v2057, %v2701
        %2703 = vmatprep.mubr.bf16.mxu0 %v1919
        %2704 = vmatmul.mubr.bf16.gmra.mrb[0].mxu0 %v1918
        %v2705 = vpop.f32.mrb[0].mxu0
        %v2706 = vadd.f32 %v2053, %v2705
        %v2707 = vpop.f32.mrb[0].mxu0
        %v2708 = vadd.f32 %v2057, %v2707
        %v2709 = vpop.f32.mrb[0].mxu0
        %v2710 = vadd.f32 %v2053, %v2709
        %v2711 = vpop.f32.mrb[0].mxu0
        %v2712 = vadd.f32 %v2057, %v2711
        %2713 = vdwg.mxu0
        %2714 = vmatprep.subr.bf16.mxu0 %v2440
        %2715 = vmatpush1.bf16.msra.mxu0 %v2439
        %2716 = vmatprep.subr.bf16.mxu0 %v2447
        %2717 = vmatpush1.bf16.msra.mxu0 %v2446
        %2718 = vmatprep.subr.bf16.mxu0 %v2454
        %2719 = vmatpush1.bf16.msra.mxu0 %v2453
        %2720 = vmatprep.subr.bf16.mxu0 %v2461
        %2721 = vmatpush1.bf16.msra.mxu0 %v2460
        %2722 = vmatprep.subr.bf16.mxu0 %v2468
        %2723 = vmatpush1.bf16.msra.mxu0 %v2467
        %2724 = vmatprep.subr.bf16.mxu0 %v2475
        %2725 = vmatpush1.bf16.msra.mxu0 %v2474
        %2726 = vmatprep.subr.bf16.mxu0 %v2482
        %2727 = vmatpush1.bf16.msra.mxu0 %v2481
        %2728 = vmatprep.subr.bf16.mxu0 %v2489
        %2729 = vmatpush1.bf16.msra.mxu0 %v2488
        %2730 = vmatprep.subr.bf16.mxu0 %v2496
        %2731 = vmatpush1.bf16.msra.mxu0 %v2495
        %2732 = vmatprep.subr.bf16.mxu0 %v2503
        %2733 = vmatpush1.bf16.msra.mxu0 %v2502
        %2734 = vmatprep.subr.bf16.mxu0 %v2510
        %2735 = vmatpush1.bf16.msra.mxu0 %v2509
        %2736 = vmatprep.subr.bf16.mxu0 %v2517
        %2737 = vmatpush1.bf16.msra.mxu0 %v2516
        %2738 = vmatprep.subr.bf16.mxu0 %v2524
        %2739 = vmatpush1.bf16.msra.mxu0 %v2523
        %2740 = vmatprep.subr.bf16.mxu0 %v2531
        %2741 = vmatpush1.bf16.msra.mxu0 %v2530
        %2742 = vmatprep.subr.bf16.mxu0 %v2538
        %2743 = vmatpush1.bf16.msra.mxu0 %v2537
        %2744 = vmatprep.subr.bf16.mxu0 %v2545
        %2745 = vmatpush1.bf16.msra.mxu0 %v2544
        %2746 = vmatprep.mubr.bf16.mxu0 %v1917
        %2747 = vmatmul.mubr.bf16.gmra.mrb[0].mxu0 %v1916
        %v2748 = vpop.f32.mrb[0].mxu0
        %v2749 = vadd.f32 %v2061, %v2748
        %v2750 = vpop.f32.mrb[0].mxu0
        %v2751 = vadd.f32 %v2065, %v2750
        %v2752 = vpop.f32.mrb[0].mxu0
        %v2753 = vadd.f32 %v2061, %v2752
        %v2754 = vpop.f32.mrb[0].mxu0
        %v2755 = vadd.f32 %v2065, %v2754
        %2756 = vmatprep.mubr.bf16.mxu0 %v1919
        %2757 = vmatmul.mubr.bf16.gmra.mrb[0].mxu0 %v1918
        %v2758 = vpop.f32.mrb[0].mxu0
        %v2759 = vadd.f32 %v2061, %v2758
        %v2760 = vpop.f32.mrb[0].mxu0
        %v2761 = vadd.f32 %v2065, %v2760
        %v2762 = vpop.f32.mrb[0].mxu0
        %v2763 = vadd.f32 %v2061, %v2762
        %v2764 = vpop.f32.mrb[0].mxu0
        %v2765 = vadd.f32 %v2065, %v2764
        %2766 = vdwg.mxu0
        %2767 = vmatprep.subr.bf16.mxu0 %v2442
        %2768 = vmatpush1.bf16.msra.mxu0 %v2441
        %2769 = vmatprep.subr.bf16.mxu0 %v2449
        %2770 = vmatpush1.bf16.msra.mxu0 %v2448
        %2771 = vmatprep.subr.bf16.mxu0 %v2456
        %2772 = vmatpush1.bf16.msra.mxu0 %v2455
        %2773 = vmatprep.subr.bf16.mxu0 %v2463
        %2774 = vmatpush1.bf16.msra.mxu0 %v2462
        %2775 = vmatprep.subr.bf16.mxu0 %v2470
        %2776 = vmatpush1.bf16.msra.mxu0 %v2469
        %2777 = vmatprep.subr.bf16.mxu0 %v2477
        %2778 = vmatpush1.bf16.msra.mxu0 %v2476
        %2779 = vmatprep.subr.bf16.mxu0 %v2484
        %2780 = vmatpush1.bf16.msra.mxu0 %v2483
        %2781 = vmatprep.subr.bf16.mxu0 %v2491
        %2782 = vmatpush1.bf16.msra.mxu0 %v2490
        %2783 = vmatprep.subr.bf16.mxu0 %v2498
        %2784 = vmatpush1.bf16.msra.mxu0 %v2497
        %2785 = vmatprep.subr.bf16.mxu0 %v2505
        %2786 = vmatpush1.bf16.msra.mxu0 %v2504
        %2787 = vmatprep.subr.bf16.mxu0 %v2512
        %2788 = vmatpush1.bf16.msra.mxu0 %v2511
        %2789 = vmatprep.subr.bf16.mxu0 %v2519
        %2790 = vmatpush1.bf16.msra.mxu0 %v2518
        %2791 = vmatprep.subr.bf16.mxu0 %v2526
        %2792 = vmatpush1.bf16.msra.mxu0 %v2525
        %2793 = vmatprep.subr.bf16.mxu0 %v2533
        %2794 = vmatpush1.bf16.msra.mxu0 %v2532
        %2795 = vmatprep.subr.bf16.mxu0 %v2540
        %2796 = vmatpush1.bf16.msra.mxu0 %v2539
        %2797 = vmatprep.subr.bf16.mxu0 %v2547
        %2798 = vmatpush1.bf16.msra.mxu0 %v2546
        %2799 = vmatprep.mubr.bf16.mxu0 %v1917
        %2800 = vmatmul.mubr.bf16.gmra.mrb[0].mxu0 %v1916
        %v2801 = vpop.f32.mrb[0].mxu0
        %v2802 = vadd.f32 %v2069, %v2801
        %v2803 = vpop.f32.mrb[0].mxu0
        %v2804 = vadd.f32 %v2073, %v2803
        %v2805 = vpop.f32.mrb[0].mxu0
        %v2806 = vadd.f32 %v2069, %v2805
        %v2807 = vpop.f32.mrb[0].mxu0
        %v2808 = vadd.f32 %v2073, %v2807
        %2809 = vmatprep.mubr.bf16.mxu0 %v1919
        %2810 = vmatmul.mubr.bf16.gmra.mrb[0].mxu0 %v1918
        %v2811 = vpop.f32.mrb[0].mxu0
        %v2812 = vadd.f32 %v2069, %v2811
        %v2813 = vpop.f32.mrb[0].mxu0
        %v2814 = vadd.f32 %v2073, %v2813
        %v2815 = vpop.f32.mrb[0].mxu0
        %v2816 = vadd.f32 %v2069, %v2815
        %v2817 = vpop.f32.mrb[0].mxu0
        %v2818 = vadd.f32 %v2073, %v2817
        %2819 = vdwg.mxu0
        %2820 = vmatprep.subr.bf16.mxu0 0
        %2821 = vmatpush1.bf16.msra.mxu0 %v2443
        %2822 = vmatprep.subr.bf16.mxu0 0
        %2823 = vmatpush1.bf16.msra.mxu0 %v2450
        %2824 = vmatprep.subr.bf16.mxu0 0
        %2825 = vmatpush1.bf16.msra.mxu0 %v2457
        %2826 = vmatprep.subr.bf16.mxu0 0
        %2827 = vmatpush1.bf16.msra.mxu0 %v2464
        %2828 = vmatprep.subr.bf16.mxu0 0
        %2829 = vmatpush1.bf16.msra.mxu0 %v2471
        %2830 = vmatprep.subr.bf16.mxu0 0
        %2831 = vmatpush1.bf16.msra.mxu0 %v2478
        %2832 = vmatprep.subr.bf16.mxu0 0
        %2833 = vmatpush1.bf16.msra.mxu0 %v2485
        %2834 = vmatprep.subr.bf16.mxu0 0
        %2835 = vmatpush1.bf16.msra.mxu0 %v2492
        %2836 = vmatprep.subr.bf16.mxu0 0
        %2837 = vmatpush1.bf16.msra.mxu0 %v2499
        %2838 = vmatprep.subr.bf16.mxu0 0
        %2839 = vmatpush1.bf16.msra.mxu0 %v2506
        %2840 = vmatprep.subr.bf16.mxu0 0
        %2841 = vmatpush1.bf16.msra.mxu0 %v2513
        %2842 = vmatprep.subr.bf16.mxu0 0
        %2843 = vmatpush1.bf16.msra.mxu0 %v2520
        %2844 = vmatprep.subr.bf16.mxu0 0
        %2845 = vmatpush1.bf16.msra.mxu0 %v2527
        %2846 = vmatprep.subr.bf16.mxu0 0
        %2847 = vmatpush1.bf16.msra.mxu0 %v2534
        %2848 = vmatprep.subr.bf16.mxu0 0
        %2849 = vmatpush1.bf16.msra.mxu0 %v2541
        %2850 = vmatprep.subr.bf16.mxu0 0
        %2851 = vmatpush1.bf16.msra.mxu0 %v2548
        %2852 = vmatprep.mubr.bf16.mxu0 %v1917
        %2853 = vmatmul.mubr.bf16.gmra.mrb[0].mxu0 %v1916
        %v2854 = vpop.f32.mrb[0].mxu0
        %v2855 = vadd.f32 %v2077, %v2854
        %v2856 = vpop.f32.mrb[0].mxu0
        %v2857 = vpop.f32.mrb[0].mxu0
        %v2858 = vadd.f32 %v2077, %v2857
        %v2859 = vpop.f32.mrb[0].mxu0
        %2860 = vmatprep.mubr.bf16.mxu0 %v1919
        %2861 = vmatmul.mubr.bf16.gmra.mrb[0].mxu0 %v1918
        %v2862 = vpop.f32.mrb[0].mxu0
        %v2863 = vadd.f32 %v2077, %v2862
        %v2864 = vpop.f32.mrb[0].mxu0
        %v2865 = vpop.f32.mrb[0].mxu0
        %v2866 = vadd.f32 %v2077, %v2865
        %v2867 = vpop.f32.mrb[0].mxu0
        %2868 = vdwg.mxu0
        %v2869 = vpack.c.bf16 %v2700, %v2696
        %v2870 = vpack.c.bf16 %v2702, %v2698
        %v2871 = vpack.c.bf16 %v2753, %v2749
        %v2872 = vpack.c.bf16 %v2755, %v2751
        %v2873 = vpack.c.bf16 %v2806, %v2802
        %v2874 = vpack.c.bf16 %v2808, %v2804
        %v2875 = vpack.c.bf16 %v2858, %v2855
        %v2876 = vpack.c.bf16 %v2710, %v2706
        %v2877 = vpack.c.bf16 %v2712, %v2708
        %v2878 = vpack.c.bf16 %v2763, %v2759
        %v2879 = vpack.c.bf16 %v2765, %v2761
        %v2880 = vpack.c.bf16 %v2816, %v2812
        %v2881 = vpack.c.bf16 %v2818, %v2814
        %v2882 = vpack.c.bf16 %v2866, %v2863
        %v2883 = vtanh.bf16.pop %v2869
        %v2884 = vtanh.bf16.pop %v2870
        %v2885 = vtanh.bf16.pop %v2871
        %v2886 = vtanh.bf16.pop %v2872
        %v2887 = vtanh.bf16.pop %v2873
        %v2888 = vtanh.bf16.pop %v2874
        %v2889 = vtanh.bf16.pop %v2875
        %v2890 = vtanh.bf16.pop %v2876
        %v2891 = vtanh.bf16.pop %v2877
        %v2892 = vtanh.bf16.pop %v2878
        %v2893 = vtanh.bf16.pop %v2879
        %v2894 = vtanh.bf16.pop %v2880
        %v2895 = vtanh.bf16.pop %v2881
        %v2896 = vtanh.bf16.pop %v2882
        %v2911 = vunpack.c.l.b16 %v2883
        %v2912 = vunpack.c.l.b16 %v2884
        %v2913 = vunpack.c.l.b16 %v2885
        %v2914 = vunpack.c.l.b16 %v2886
        %v2915 = vunpack.c.l.b16 %v2887
        %v2916 = vunpack.c.l.b16 %v2888
        %v2917 = vunpack.c.l.b16 %v2889
        %v2918 = vunpack.c.h.b16 %v2883
        %v2919 = vunpack.c.h.b16 %v2884
        %v2920 = vunpack.c.h.b16 %v2885
        %v2921 = vunpack.c.h.b16 %v2886
        %v2922 = vunpack.c.h.b16 %v2887
        %v2923 = vunpack.c.h.b16 %v2888
        %v2924 = vunpack.c.h.b16 %v2889
        %v2925 = vunpack.c.l.b16 %v2890
        %v2926 = vunpack.c.l.b16 %v2891
        %v2927 = vunpack.c.l.b16 %v2892
        %v2928 = vunpack.c.l.b16 %v2893
        %v2929 = vunpack.c.l.b16 %v2894
        %v2930 = vunpack.c.l.b16 %v2895
        %v2931 = vunpack.c.l.b16 %v2896
        %v2932 = vunpack.c.h.b16 %v2890
        %v2933 = vunpack.c.h.b16 %v2891
        %v2934 = vunpack.c.h.b16 %v2892
        %v2935 = vunpack.c.h.b16 %v2893
        %v2936 = vunpack.c.h.b16 %v2894
        %v2937 = vunpack.c.h.b16 %v2895
        %v2938 = vunpack.c.h.b16 %v2896
        %v2939 = vpack.c.b16 %v2912, %v2911
        %v2940 = vpack.c.b16 %v2914, %v2913
        %v2941 = vpack.c.b16 %v2916, %v2915
        %v2942 = vpack.c.b16 %v2917, %v2917
        %v2943 = vpack.c.b16 %v2919, %v2918
        %v2944 = vpack.c.b16 %v2921, %v2920
        %v2945 = vpack.c.b16 %v2923, %v2922
        %v2946 = vpack.c.b16 %v2924, %v2924
        %v2947 = vpack.c.b16 %v2926, %v2925
        %v2948 = vpack.c.b16 %v2928, %v2927
        %v2949 = vpack.c.b16 %v2930, %v2929
        %v2950 = vpack.c.b16 %v2931, %v2931
        %v2951 = vpack.c.b16 %v2933, %v2932
        %v2952 = vpack.c.b16 %v2935, %v2934
        %v2953 = vpack.c.b16 %v2937, %v2936
        %v2954 = vpack.c.b16 %v2938, %v2938
        %2971 = vst [vmem:[%s436] sm:$0xff] %v2939
        %2972 = vst [vmem:[%s436 + $0x8] sm:$0xff] %v2940
        %2973 = vst [vmem:[%s436 + $0x10] sm:$0xff] %v2941
        %vm2974 = vcmask 125952
        %2975 = vst.msk [vmem:[%s436 + $0x18] sm:$0xf] %vm2974, %v2942
        %2976 = vst [vmem:[%s436 + $0x1c] sm:$0xff] %v2943
        %2977 = vst [vmem:[%s436 + $0x24] sm:$0xff] %v2944
        %2978 = vst [vmem:[%s436 + $0x2c] sm:$0xff] %v2945
        %2979 = vst.msk [vmem:[%s436 + $0x34] sm:$0xf] %vm2974, %v2946
        %2980 = vst [vmem:[%s436 + $0x38] sm:$0xff] %v2947
        %2981 = vst [vmem:[%s436 + $0x40] sm:$0xff] %v2948
        %2982 = vst [vmem:[%s436 + $0x48] sm:$0xff] %v2949
        %2983 = vst.msk [vmem:[%s436 + $0x50] sm:$0xf] %vm2974, %v2950
        %2984 = vst [vmem:[%s436 + $0x54] sm:$0xff] %v2951
        %2985 = vst [vmem:[%s436 + $0x5c] sm:$0xff] %v2952
        %2986 = vst [vmem:[%s436 + $0x64] sm:$0xff] %v2953
        %2987 = vst.msk [vmem:[%s436 + $0x6c] sm:$0xf] %vm2974, %v2954
        %s2988 = sand.u32 %s313, 1
        %s2989 = scalar_lea.sflag [#allocation3], %s2988
        %s2990 = sand.u32 %s313, 1
        %s2991 = smul.addr %s2990, 112
        %s2992 = scalar_lea.vmem [#allocation2], %s2991
        // Predicated region
        $region73: #{tpu_custom_call.1} parent=71 // pred_check
          %p2993 = pneg %p323
        $region74: #{tpu_custom_call.1} parent=71 // pred_check_branch
          %2995 = sbr.rel (%p2993) target = $region76
        $region75: #{tpu_custom_call.1} parent=71 // pred_region
          %s2996 = smul.u32 4, %s27
          %s2998 = ssub.s32 1792, 1792
          %2999 = vsyncadd %s2989, %s2998
          %s3000 = smul.addr %s2996, 7
          %s3001 = smul.addr %s3000, 64
          %s3002 = scalar_lea.hbm %s13, %s3001
          %s3003 = sshll.u32 %s2992, 4
          %s3004 = int_to_ptr.vmem [resolvable:$true] %s3003
          %3009 = dma.vmem_to_hbm [thread:$0]  %s3004, 1792, %s3002, %s2989, 448, 448, 28
        $region76: #{tpu_custom_call.1} parent=71 // pred_fallthru
          _
      $region72: #{tpu_custom_call.1} parent=5 // pred_fallthru
        _
      %p3010 = scmp.le.s32.totalorder 2, %s22
      // Predicated region
      $region77: #{tpu_custom_call.1} parent=5 // pred_check
        %p3011 = pneg %p3010
      $region78: #{tpu_custom_call.1} parent=5 // pred_check_branch
        %3013 = sbr.rel (%p3011) target = $region80
      $region79: #{tpu_custom_call.1} parent=5 // pred_region
        %s3014 = ssub.s32 %s22, 2
        // Predicated region
        $region81: #{tpu_custom_call.1} parent=79 // pred_check
          %p3015 = pneg %p329
        $region82: #{tpu_custom_call.1} parent=79 // pred_check_branch
          %3017 = sbr.rel (%p3015) target = $region84
        $region83: #{tpu_custom_call.1} parent=79 // pred_region
          %s3018 = sand.u32 %s314, 1
          %s3019 = scalar_lea.sflag [#allocation3], %s3018
          %s3020 = sand.u32 %s314, 1
          %s3021 = smul.addr %s3020, 112
          %s3022 = scalar_lea.vmem [#allocation2], %s3021
          %3023 = dma.done %s3019, 1792
        $region84: #{tpu_custom_call.1} parent=79 // pred_fallthru
          _
      $region80: #{tpu_custom_call.1} parent=5 // pred_fallthru
        _
    $region6: #{tpu_custom_call.1} parent=1 // loop_footer
      %s26 = sadd.s32 1, %s22
    $region7: #{tpu_custom_call.1} parent=1 // loop_footer_branch
      %21 = sbr.rel target = $region3
    $region8: #{tpu_custom_call.1} parent=1 // loop_exit
      _
    %3024 = vsyncpa [#allocation3], 1
    %s3025 = scalar_lea.sflag [#allocation3], 1
    %3026 = vsyncpa %s3025, 1

// kernel: tpu_custom_call.1
$region0: #{tpu_custom_call.1}
  #allocation0 [shape = 'u32[]', space=smem, size = 0x4, offset = 0x4, fixed_abs, tag = 'smem constant byte address 0x4 - core index']
  #allocation1 [shape = 'u32[144,128]{1,0:T(1,128)}', space=vmem, size = 0x12000, scoped, tag = 'internal scratch']
  %s0 = inlined_call_operand.vmem [shape: f32[64,784], index: 0, kind: input, shape index: {}]
  %s1 = inlined_call_operand.vmem [shape: bf16[784,256], index: 1, kind: input, shape index: {}]
  %s2 = inlined_call_operand.vmem [shape: f32[1,256], index: 2, kind: input, shape index: {}]
  %s3 = inlined_call_operand.vmem [shape: bf16[256,128], index: 3, kind: input, shape index: {}]
  %s4 = inlined_call_operand.vmem [shape: f32[1,128], index: 4, kind: input, shape index: {}]
  %s5 = inlined_call_operand.vmem [shape: bf16[128,128], index: 5, kind: input, shape index: {}]
  %s6 = inlined_call_operand.vmem [shape: f32[1,128], index: 6, kind: input, shape index: {}]
  %s7 = inlined_call_operand.vmem [shape: bf16[128,128], index: 7, kind: input, shape index: {}]
  %s8 = inlined_call_operand.vmem [shape: f32[1,128], index: 8, kind: input, shape index: {}]
  %s9 = inlined_call_operand.vmem [shape: bf16[128,256], index: 9, kind: input, shape index: {}]
  %s10 = inlined_call_operand.vmem [shape: f32[1,256], index: 10, kind: input, shape index: {}]
  %s11 = inlined_call_operand.vmem [shape: bf16[256,784], index: 11, kind: input, shape index: {}]
  %s12 = inlined_call_operand.vmem [shape: f32[1,784], index: 12, kind: input, shape index: {}]
  %s13 = inlined_call_operand.hbm [shape: bf16[64,784], index: 13, kind: output, shape index: {}]
  %s14 = sld [smem:[#allocation0]]
  $region85: #{tpu_custom_call.1} parent=0
    _
  %s16 = ssub.s32 1, %s14
  %s17 = scalar_select 0, %s16, %s14
  $region1: #{tpu_custom_call.1} parent=0
    #allocation2 [shape = 'u8[114688]{0}', space=vmem, size = 0x1c000, scoped, tag = 'output window, operand 0']
    #allocation3 [shape = 's32[2]{0}', space=sflag, size = 0x8, scoped, tag = 'scoped memory for tpu_custom_call.1']
    %18 = vsyncpa [#allocation3], 0
    %s19 = scalar_lea.sflag [#allocation3], 1
    %20 = vsyncpa %s19, 0
    loop: start=0, step=1, limit=4
    $region2: #{tpu_custom_call.1} parent=1 // loop_pre_header
      _
    $region3: #{tpu_custom_call.1} parent=1 // loop_header
      %s22 = sphi 0, %s26
      %p23 = scmp.ge.s32.totalorder %s22, 4
      %s32 = sphi 0, %s34
      %s35 = sphi 0, %s32
      %s36 = sphi 0, %s35
      %s52 = sphi 0, %s36
      %s56 = sphi 0, %s56
      %s58 = sphi 0, %s56
      %s59 = sphi 0, %s58
      %s73 = sphi 0, %s59
      %s77 = sphi 0, %s77
      %s79 = sphi 0, %s77
      %s80 = sphi 0, %s79
      %s94 = sphi 0, %s80
      %s98 = sphi 0, %s98
      %s100 = sphi 0, %s98
      %s101 = sphi 0, %s100
      %s115 = sphi 0, %s101
      %s119 = sphi 0, %s119
      %s121 = sphi 0, %s119
      %s122 = sphi 0, %s121
      %s136 = sphi 0, %s122
      %s140 = sphi 0, %s140
      %s142 = sphi 0, %s140
      %s143 = sphi 0, %s142
      %s157 = sphi 0, %s143
      %s161 = sphi 0, %s161
      %s163 = sphi 0, %s161
      %s164 = sphi 0, %s163
      %s178 = sphi 0, %s164
      %s182 = sphi 0, %s182
      %s184 = sphi 0, %s182
      %s185 = sphi 0, %s184
      %s199 = sphi 0, %s185
      %s203 = sphi 0, %s203
      %s205 = sphi 0, %s203
      %s206 = sphi 0, %s205
      %s220 = sphi 0, %s206
      %s224 = sphi 0, %s224
      %s226 = sphi 0, %s224
      %s227 = sphi 0, %s226
      %s241 = sphi 0, %s227
      %s245 = sphi 0, %s245
      %s247 = sphi 0, %s245
      %s248 = sphi 0, %s247
      %s262 = sphi 0, %s248
      %s266 = sphi 0, %s266
      %s268 = sphi 0, %s266
      %s269 = sphi 0, %s268
      %s283 = sphi 0, %s269
      %s287 = sphi 0, %s287
      %s289 = sphi 0, %s287
      %s290 = sphi 0, %s289
      %s304 = sphi 0, %s290
      %s310 = sphi 0, %s312
      %s313 = sphi 0, %s310
      %s314 = sphi 0, %s313
      %s330 = sphi 0, %s314
    $region4: #{tpu_custom_call.1} parent=1 // loop_header_branch
      %25 = sbr.rel (%p23) target = $region8
    $region5: #{tpu_custom_call.1} parent=1 // loop_body
      %s27 = ssub.s32 %s22, 1
      %s28 = ssub.s32 %s22, 2
      %s29 = sadd.s32 %s22, 1
      %s30 = ssub.s32 %s22, %s29
      %p31 = scmp.eq.s32.totalorder %s30, 0
      %s33 = sadd.s32 %s32, 1
      %s34 = scalar_select %p31, %s32, %s33
      %p37 = pneg %p31
      %p38 = scmp.eq.s32.totalorder %s22, 1
      %p39 = por %p37, %p38
      %p40 = scmp.ne.s32.totalorder %s32, %s35
      %p41 = scmp.eq.s32.totalorder %s22, 0
      %p42 = por %p40, %p41
      %p43 = scmp.ne.s32.totalorder %s32, %s35
      %p44 = scmp.eq.s32.totalorder %s27, 1
      %p45 = por %p43, %p44
      %p46 = scmp.ne.s32.totalorder %s35, %s36
      %p47 = scmp.eq.s32.totalorder %s27, 0
      %p48 = por %p46, %p47
      %p49 = scmp.ne.s32.totalorder %s35, %s36
      %p50 = scmp.eq.s32.totalorder %s28, 1
      %p51 = por %p49, %p50
      %p53 = scmp.ne.s32.totalorder %s36, %s52
      %p54 = scmp.eq.s32.totalorder %s28, 0
      %p55 = por %p53, %p54
      %s57 = sadd.s32 %s56, 1
      %p60 = scmp.eq.s32.totalorder %s22, 1
      %p61 = scmp.ne.s32.totalorder %s56, %s58
      %p62 = scmp.eq.s32.totalorder %s22, 0
      %p63 = por %p61, %p62
      %p64 = scmp.ne.s32.totalorder %s56, %s58
      %p65 = scmp.eq.s32.totalorder %s27, 1
      %p66 = por %p64, %p65
      %p67 = scmp.ne.s32.totalorder %s58, %s59
      %p68 = scmp.eq.s32.totalorder %s27, 0
      %p69 = por %p67, %p68
      %p70 = scmp.ne.s32.totalorder %s58, %s59
      %p71 = scmp.eq.s32.totalorder %s28, 1
      %p72 = por %p70, %p71
      %p74 = scmp.ne.s32.totalorder %s59, %s73
      %p75 = scmp.eq.s32.totalorder %s28, 0
      %p76 = por %p74, %p75
      %s78 = sadd.s32 %s77, 1
      %p81 = scmp.eq.s32.totalorder %s22, 1
      %p82 = scmp.ne.s32.totalorder %s77, %s79
      %p83 = scmp.eq.s32.totalorder %s22, 0
      %p84 = por %p82, %p83
      %p85 = scmp.ne.s32.totalorder %s77, %s79
      %p86 = scmp.eq.s32.totalorder %s27, 1
      %p87 = por %p85, %p86
      %p88 = scmp.ne.s32.totalorder %s79, %s80
      %p89 = scmp.eq.s32.totalorder %s27, 0
      %p90 = por %p88, %p89
      %p91 = scmp.ne.s32.totalorder %s79, %s80
      %p92 = scmp.eq.s32.totalorder %s28, 1
      %p93 = por %p91, %p92
      %p95 = scmp.ne.s32.totalorder %s80, %s94
      %p96 = scmp.eq.s32.totalorder %s28, 0
      %p97 = por %p95, %p96
      %s99 = sadd.s32 %s98, 1
      %p102 = scmp.eq.s32.totalorder %s22, 1
      %p103 = scmp.ne.s32.totalorder %s98, %s100
      %p104 = scmp.eq.s32.totalorder %s22, 0
      %p105 = por %p103, %p104
      %p106 = scmp.ne.s32.totalorder %s98, %s100
      %p107 = scmp.eq.s32.totalorder %s27, 1
      %p108 = por %p106, %p107
      %p109 = scmp.ne.s32.totalorder %s100, %s101
      %p110 = scmp.eq.s32.totalorder %s27, 0
      %p111 = por %p109, %p110
      %p112 = scmp.ne.s32.totalorder %s100, %s101
      %p113 = scmp.eq.s32.totalorder %s28, 1
      %p114 = por %p112, %p113
      %p116 = scmp.ne.s32.totalorder %s101, %s115
      %p117 = scmp.eq.s32.totalorder %s28, 0
      %p118 = por %p116, %p117
      %s120 = sadd.s32 %s119, 1
      %p123 = scmp.eq.s32.totalorder %s22, 1
      %p124 = scmp.ne.s32.totalorder %s119, %s121
      %p125 = scmp.eq.s32.totalorder %s22, 0
      %p126 = por %p124, %p125
      %p127 = scmp.ne.s32.totalorder %s119, %s121
      %p128 = scmp.eq.s32.totalorder %s27, 1
      %p129 = por %p127, %p128
      %p130 = scmp.ne.s32.totalorder %s121, %s122
      %p131 = scmp.eq.s32.totalorder %s27, 0
      %p132 = por %p130, %p131
      %p133 = scmp.ne.s32.totalorder %s121, %s122
      %p134 = scmp.eq.s32.totalorder %s28, 1
      %p135 = por %p133, %p134
      %p137 = scmp.ne.s32.totalorder %s122, %s136
      %p138 = scmp.eq.s32.totalorder %s28, 0
      %p139 = por %p137, %p138
      %s141 = sadd.s32 %s140, 1
      %p144 = scmp.eq.s32.totalorder %s22, 1
      %p145 = scmp.ne.s32.totalorder %s140, %s142
      %p146 = scmp.eq.s32.totalorder %s22, 0
      %p147 = por %p145, %p146
      %p148 = scmp.ne.s32.totalorder %s140, %s142
      %p149 = scmp.eq.s32.totalorder %s27, 1
      %p150 = por %p148, %p149
      %p151 = scmp.ne.s32.totalorder %s142, %s143
      %p152 = scmp.eq.s32.totalorder %s27, 0
      %p153 = por %p151, %p152
      %p154 = scmp.ne.s32.totalorder %s142, %s143
      %p155 = scmp.eq.s32.totalorder %s28, 1
      %p156 = por %p154, %p155
      %p158 = scmp.ne.s32.totalorder %s143, %s157
      %p159 = scmp.eq.s32.totalorder %s28, 0
      %p160 = por %p158, %p159
      %s162 = sadd.s32 %s161, 1
      %p165 = scmp.eq.s32.totalorder %s22, 1
      %p166 = scmp.ne.s32.totalorder %s161, %s163
      %p167 = scmp.eq.s32.totalorder %s22, 0
      %p168 = por %p166, %p167
      %p169 = scmp.ne.s32.totalorder %s161, %s163
      %p170 = scmp.eq.s32.totalorder %s27, 1
      %p171 = por %p169, %p170
      %p172 = scmp.ne.s32.totalorder %s163, %s164
      %p173 = scmp.eq.s32.totalorder %s27, 0
      %p174 = por %p172, %p173
      %p175 = scmp.ne.s32.totalorder %s163, %s164
      %p176 = scmp.eq.s32.totalorder %s28, 1
      %p177 = por %p175, %p176
      %p179 = scmp.ne.s32.totalorder %s164, %s178
      %p180 = scmp.eq.s32.totalorder %s28, 0
      %p181 = por %p179, %p180
      %s183 = sadd.s32 %s182, 1
      %p186 = scmp.eq.s32.totalorder %s22, 1
      %p187 = scmp.ne.s32.totalorder %s182, %s184
      %p188 = scmp.eq.s32.totalorder %s22, 0
      %p189 = por %p187, %p188
      %p190 = scmp.ne.s32.totalorder %s182, %s184
      %p191 = scmp.eq.s32.totalorder %s27, 1
      %p192 = por %p190, %p191
      %p193 = scmp.ne.s32.totalorder %s184, %s185
      %p194 = scmp.eq.s32.totalorder %s27, 0
      %p195 = por %p193, %p194
      %p196 = scmp.ne.s32.totalorder %s184, %s185
      %p197 = scmp.eq.s32.totalorder %s28, 1
      %p198 = por %p196, %p197
      %p200 = scmp.ne.s32.totalorder %s185, %s199
      %p201 = scmp.eq.s32.totalorder %s28, 0
      %p202 = por %p200, %p201
      %s204 = sadd.s32 %s203, 1
      %p207 = scmp.eq.s32.totalorder %s22, 1
      %p208 = scmp.ne.s32.totalorder %s203, %s205
      %p209 = scmp.eq.s32.totalorder %s22, 0
      %p210 = por %p208, %p209
      %p211 = scmp.ne.s32.totalorder %s203, %s205
      %p212 = scmp.eq.s32.totalorder %s27, 1
      %p213 = por %p211, %p212
      %p214 = scmp.ne.s32.totalorder %s205, %s206
      %p215 = scmp.eq.s32.totalorder %s27, 0
      %p216 = por %p214, %p215
      %p217 = scmp.ne.s32.totalorder %s205, %s206
      %p218 = scmp.eq.s32.totalorder %s28, 1
      %p219 = por %p217, %p218
      %p221 = scmp.ne.s32.totalorder %s206, %s220
      %p222 = scmp.eq.s32.totalorder %s28, 0
      %p223 = por %p221, %p222
      %s225 = sadd.s32 %s224, 1
      %p228 = scmp.eq.s32.totalorder %s22, 1
      %p229 = scmp.ne.s32.totalorder %s224, %s226
      %p230 = scmp.eq.s32.totalorder %s22, 0
      %p231 = por %p229, %p230
      %p232 = scmp.ne.s32.totalorder %s224, %s226
      %p233 = scmp.eq.s32.totalorder %s27, 1
      %p234 = por %p232, %p233
      %p235 = scmp.ne.s32.totalorder %s226, %s227
      %p236 = scmp.eq.s32.totalorder %s27, 0
      %p237 = por %p235, %p236
      %p238 = scmp.ne.s32.totalorder %s226, %s227
      %p239 = scmp.eq.s32.totalorder %s28, 1
      %p240 = por %p238, %p239
      %p242 = scmp.ne.s32.totalorder %s227, %s241
      %p243 = scmp.eq.s32.totalorder %s28, 0
      %p244 = por %p242, %p243
      %s246 = sadd.s32 %s245, 1
      %p249 = scmp.eq.s32.totalorder %s22, 1
      %p250 = scmp.ne.s32.totalorder %s245, %s247
      %p251 = scmp.eq.s32.totalorder %s22, 0
      %p252 = por %p250, %p251
      %p253 = scmp.ne.s32.totalorder %s245, %s247
      %p254 = scmp.eq.s32.totalorder %s27, 1
      %p255 = por %p253, %p254
      %p256 = scmp.ne.s32.totalorder %s247, %s248
      %p257 = scmp.eq.s32.totalorder %s27, 0
      %p258 = por %p256, %p257
      %p259 = scmp.ne.s32.totalorder %s247, %s248
      %p260 = scmp.eq.s32.totalorder %s28, 1
      %p261 = por %p259, %p260
      %p263 = scmp.ne.s32.totalorder %s248, %s262
      %p264 = scmp.eq.s32.totalorder %s28, 0
      %p265 = por %p263, %p264
      %s267 = sadd.s32 %s266, 1
      %p270 = scmp.eq.s32.totalorder %s22, 1
      %p271 = scmp.ne.s32.totalorder %s266, %s268
      %p272 = scmp.eq.s32.totalorder %s22, 0
      %p273 = por %p271, %p272
      %p274 = scmp.ne.s32.totalorder %s266, %s268
      %p275 = scmp.eq.s32.totalorder %s27, 1
      %p276 = por %p274, %p275
      %p277 = scmp.ne.s32.totalorder %s268, %s269
      %p278 = scmp.eq.s32.totalorder %s27, 0
      %p279 = por %p277, %p278
      %p280 = scmp.ne.s32.totalorder %s268, %s269
      %p281 = scmp.eq.s32.totalorder %s28, 1
      %p282 = por %p280, %p281
      %p284 = scmp.ne.s32.totalorder %s269, %s283
      %p285 = scmp.eq.s32.totalorder %s28, 0
      %p286 = por %p284, %p285
      %s288 = sadd.s32 %s287, 1
      %p291 = scmp.eq.s32.totalorder %s22, 1
      %p292 = scmp.ne.s32.totalorder %s287, %s289
      %p293 = scmp.eq.s32.totalorder %s22, 0
      %p294 = por %p292, %p293
      %p295 = scmp.ne.s32.totalorder %s287, %s289
      %p296 = scmp.eq.s32.totalorder %s27, 1
      %p297 = por %p295, %p296
      %p298 = scmp.ne.s32.totalorder %s289, %s290
      %p299 = scmp.eq.s32.totalorder %s27, 0
      %p300 = por %p298, %p299
      %p301 = scmp.ne.s32.totalorder %s289, %s290
      %p302 = scmp.eq.s32.totalorder %s28, 1
      %p303 = por %p301, %p302
      %p305 = scmp.ne.s32.totalorder %s290, %s304
      %p306 = scmp.eq.s32.totalorder %s28, 0
      %p307 = por %p305, %p306
      %s308 = ssub.s32 %s22, %s29
      %p309 = scmp.eq.s32.totalorder %s308, 0
      %s311 = sadd.s32 %s310, 1
      %s312 = scalar_select %p309, %s310, %s311
      %p315 = pneg %p309
      %p316 = scmp.eq.s32.totalorder %s22, 1
      %p317 = por %p315, %p316
      %p318 = scmp.ne.s32.totalorder %s310, %s313
      %p319 = scmp.eq.s32.totalorder %s22, 0
      %p320 = por %p318, %p319
      %p321 = scmp.ne.s32.totalorder %s310, %s313
      %p322 = scmp.eq.s32.totalorder %s27, 1
      %p323 = por %p321, %p322
      %p324 = scmp.ne.s32.totalorder %s313, %s314
      %p325 = scmp.eq.s32.totalorder %s27, 0
      %p326 = por %p324, %p325
      %p327 = scmp.ne.s32.totalorder %s313, %s314
      %p328 = scmp.eq.s32.totalorder %s28, 1
      %p329 = por %p327, %p328
      %p331 = scmp.ne.s32.totalorder %s314, %s330
      %p332 = scmp.eq.s32.totalorder %s28, 0
      %p333 = por %p331, %p332
      %p334 = scmp.le.s32.totalorder 1, %s22
      %p335 = scmp.lt.s32.totalorder %s22, 3
      %p336 = pnand %p334, %p335
      %p337 = pneg %p336
      // Predicated region
      $region9: #{tpu_custom_call.1} parent=5 // pred_check
        _
      $region10: #{tpu_custom_call.1} parent=5 // pred_check_branch
        %339 = sbr.rel (%p336) target = $region12
      $region11: #{tpu_custom_call.1} parent=5 // pred_region
        %s340 = ssub.s32 %s22, 1
        // Predicated region
        $region13: #{tpu_custom_call.1} parent=11 // pred_check
          %p341 = pneg %p69
        $region14: #{tpu_custom_call.1} parent=11 // pred_check_branch
          %343 = sbr.rel (%p341) target = $region16
        $region15: #{tpu_custom_call.1} parent=11 // pred_region
          _
        $region16: #{tpu_custom_call.1} parent=11 // pred_fallthru
          _
        // Predicated region
        $region17: #{tpu_custom_call.1} parent=11 // pred_check
          %p344 = pneg %p90
        $region18: #{tpu_custom_call.1} parent=11 // pred_check_branch
          %346 = sbr.rel (%p344) target = $region20
        $region19: #{tpu_custom_call.1} parent=11 // pred_region
          _
        $region20: #{tpu_custom_call.1} parent=11 // pred_fallthru
          _
        // Predicated region
        $region21: #{tpu_custom_call.1} parent=11 // pred_check
          %p347 = pneg %p111
        $region22: #{tpu_custom_call.1} parent=11 // pred_check_branch
          %349 = sbr.rel (%p347) target = $region24
        $region23: #{tpu_custom_call.1} parent=11 // pred_region
          _
        $region24: #{tpu_custom_call.1} parent=11 // pred_fallthru
          _
        // Predicated region
        $region25: #{tpu_custom_call.1} parent=11 // pred_check
          %p350 = pneg %p132
        $region26: #{tpu_custom_call.1} parent=11 // pred_check_branch
          %352 = sbr.rel (%p350) target = $region28
        $region27: #{tpu_custom_call.1} parent=11 // pred_region
          _
        $region28: #{tpu_custom_call.1} parent=11 // pred_fallthru
          _
        // Predicated region
        $region29: #{tpu_custom_call.1} parent=11 // pred_check
          %p353 = pneg %p153
        $region30: #{tpu_custom_call.1} parent=11 // pred_check_branch
          %355 = sbr.rel (%p353) target = $region32
        $region31: #{tpu_custom_call.1} parent=11 // pred_region
          _
        $region32: #{tpu_custom_call.1} parent=11 // pred_fallthru
          _
        // Predicated region
        $region33: #{tpu_custom_call.1} parent=11 // pred_check
          %p356 = pneg %p174
        $region34: #{tpu_custom_call.1} parent=11 // pred_check_branch
          %358 = sbr.rel (%p356) target = $region36
        $region35: #{tpu_custom_call.1} parent=11 // pred_region
          _
        $region36: #{tpu_custom_call.1} parent=11 // pred_fallthru
          _
        // Predicated region
        $region37: #{tpu_custom_call.1} parent=11 // pred_check
          %p359 = pneg %p195
        $region38: #{tpu_custom_call.1} parent=11 // pred_check_branch
          %361 = sbr.rel (%p359) target = $region40
        $region39: #{tpu_custom_call.1} parent=11 // pred_region
          _
        $region40: #{tpu_custom_call.1} parent=11 // pred_fallthru
          _
        // Predicated region
        $region41: #{tpu_custom_call.1} parent=11 // pred_check
          %p362 = pneg %p216
        $region42: #{tpu_custom_call.1} parent=11 // pred_check_branch
          %364 = sbr.rel (%p362) target = $region44
        $region43: #{tpu_custom_call.1} parent=11 // pred_region
          _
        $region44: #{tpu_custom_call.1} parent=11 // pred_fallthru
          _
        // Predicated region
        $region45: #{tpu_custom_call.1} parent=11 // pred_check
          %p365 = pneg %p237
        $region46: #{tpu_custom_call.1} parent=11 // pred_check_branch
          %367 = sbr.rel (%p365) target = $region48
        $region47: #{tpu_custom_call.1} parent=11 // pred_region
          _
        $region48: #{tpu_custom_call.1} parent=11 // pred_fallthru
          _
        // Predicated region
        $region49: #{tpu_custom_call.1} parent=11 // pred_check
          %p368 = pneg %p258
        $region50: #{tpu_custom_call.1} parent=11 // pred_check_branch
          %370 = sbr.rel (%p368) target = $region52
        $region51: #{tpu_custom_call.1} parent=11 // pred_region
          _
        $region52: #{tpu_custom_call.1} parent=11 // pred_fallthru
          _
        // Predicated region
        $region53: #{tpu_custom_call.1} parent=11 // pred_check
          %p371 = pneg %p279
        $region54: #{tpu_custom_call.1} parent=11 // pred_check_branch
          %373 = sbr.rel (%p371) target = $region56
        $region55: #{tpu_custom_call.1} parent=11 // pred_region
          _
        $region56: #{tpu_custom_call.1} parent=11 // pred_fallthru
          _
        // Predicated region
        $region57: #{tpu_custom_call.1} parent=11 // pred_check
          %p374 = pneg %p300
        $region58: #{tpu_custom_call.1} parent=11 // pred_check_branch
          %376 = sbr.rel (%p374) target = $region60
        $region59: #{tpu_custom_call.1} parent=11 // pred_region
          _
        $region60: #{tpu_custom_call.1} parent=11 // pred_fallthru
          _
      $region12: #{tpu_custom_call.1} parent=5 // pred_fallthru
        _
      %p377 = scmp.lt.s32.totalorder %s22, 2
      // Predicated region
      $region61: #{tpu_custom_call.1} parent=5 // pred_check
        %p378 = pneg %p377
      $region62: #{tpu_custom_call.1} parent=5 // pred_check_branch
        %380 = sbr.rel (%p378) target = $region64
      $region63: #{tpu_custom_call.1} parent=5 // pred_region
        // Predicated region
        $region65: #{tpu_custom_call.1} parent=63 // pred_check
          %p381 = pneg %p42
        $region66: #{tpu_custom_call.1} parent=63 // pred_check_branch
          %383 = sbr.rel (%p381) target = $region68
        $region67: #{tpu_custom_call.1} parent=63 // pred_region
          %s384 = smul.u32 4, %s22
          %p385 = scmp.lt.s32.totalorder %s384, 7
          %s386 = scalar_select %p385, %s384, 7
          %s387 = smul.addr %s386, 7
          %s388 = smul.addr %s387, 8
          %s389 = scalar_lea.vmem %s0, %s388
          %s390 = smul.u32 4, %s22
        $region68: #{tpu_custom_call.1} parent=63 // pred_fallthru
          _
      $region64: #{tpu_custom_call.1} parent=5 // pred_fallthru
        _
      %p391 = scmp.le.s32.totalorder 1, %s22
      %p392 = scmp.lt.s32.totalorder %s22, 3
      %p393 = pnand %p391, %p392
      %p394 = pneg %p393
      // Predicated region
      $region69: #{tpu_custom_call.1} parent=5 // pred_check
        _
      $region70: #{tpu_custom_call.1} parent=5 // pred_check_branch
        %396 = sbr.rel (%p393) target = $region72
      $region71: #{tpu_custom_call.1} parent=5 // pred_region
        %s397 = ssub.s32 %s22, 1
        %s398 = smul.u32 4, %s27
        %p399 = scmp.lt.s32.totalorder %s398, 7
        %s400 = scalar_select %p399, %s398, 7
        %s401 = smul.addr %s400, 7
        %s402 = smul.addr %s401, 8
        %s403 = scalar_lea.vmem %s0, %s402
        %p404 = pneg %p48
        %p405 = pneg %p45
        %p406 = pneg %p69
        %p407 = pneg %p66
        %p408 = pneg %p90
        %p409 = pneg %p87
        %p410 = pneg %p111
        %p411 = pneg %p108
        %p412 = pneg %p132
        %p413 = pneg %p129
        %p414 = pneg %p153
        %p415 = pneg %p150
        %p416 = pneg %p174
        %p417 = pneg %p171
        %p418 = pneg %p195
        %p419 = pneg %p192
        %p420 = pneg %p216
        %p421 = pneg %p213
        %p422 = pneg %p237
        %p423 = pneg %p234
        %p424 = pneg %p258
        %p425 = pneg %p255
        %p426 = pneg %p279
        %p427 = pneg %p276
        %p428 = pneg %p300
        %p429 = pneg %p297
        %p430 = pneg %p326
        %p431 = pneg %p323
        %s432 = sand.u32 %s313, 1
        %s433 = scalar_lea.sflag [#allocation3], %s432
        %s434 = sand.u32 %s313, 1
        %s435 = smul.addr %s434, 112
        %s436 = scalar_lea.vmem [#allocation2], %s435
        %s437 = smul.u32 4, %s27
        %p438 = scmp.lt.s32.totalorder %s437, 7
        %s439 = scalar_select %p438, %s437, 7
        %s440 = smul.addr %s439, 7
        %s441 = smul.addr %s440, 8
        %s442 = scalar_lea.vmem %s0, %s441
        %s443 = smul.u32 4, %s27
        %s444 = smul.u32 4, %s27
        %v446 = vld [vmem:[%s442] sm:$0xff]
        %v447 = vld [vmem:[%s442 + $0x8] sm:$0xff]
        %v448 = vld [vmem:[%s442 + $0x10] sm:$0xff]
        %v449 = vld [vmem:[%s442 + $0x18] sm:$0xff]
        %v450 = vld [vmem:[%s442 + $0x20] sm:$0xff]
        %v451 = vld [vmem:[%s442 + $0x28] sm:$0xff]
        %v452 = vld [vmem:[%s442 + $0x30] sm:$0xff]
        %v453 = vld [vmem:[%s442 + $0x38] sm:$0xff]
        %v454 = vld [vmem:[%s442 + $0x40] sm:$0xff]
        %v455 = vld [vmem:[%s442 + $0x48] sm:$0xff]
        %v456 = vld [vmem:[%s442 + $0x50] sm:$0xff]
        %v457 = vld [vmem:[%s442 + $0x58] sm:$0xff]
        %v458 = vld [vmem:[%s442 + $0x60] sm:$0xff]
        %v459 = vld [vmem:[%s442 + $0x68] sm:$0xff]
        %v460 = vld [vmem:[%s442 + $0x70] sm:$0xff]
        %v461 = vld [vmem:[%s442 + $0x78] sm:$0xff]
        %v462 = vld [vmem:[%s442 + $0x80] sm:$0xff]
        %v463 = vld [vmem:[%s442 + $0x88] sm:$0xff]
        %v464 = vld [vmem:[%s442 + $0x90] sm:$0xff]
        %v465 = vld [vmem:[%s442 + $0x98] sm:$0xff]
        %v466 = vld [vmem:[%s442 + $0xa0] sm:$0xff]
        %v467 = vld [vmem:[%s442 + $0xa8] sm:$0xff]
        %v468 = vld [vmem:[%s442 + $0xb0] sm:$0xff]
        %v469 = vld [vmem:[%s442 + $0xb8] sm:$0xff]
        %v470 = vld [vmem:[%s442 + $0xc0] sm:$0xff]
        %v471 = vld [vmem:[%s442 + $0xc8] sm:$0xff]
        %v472 = vld [vmem:[%s442 + $0xd0] sm:$0xff]
        %v473 = vld [vmem:[%s442 + $0xd8] sm:$0xff]
        %v474 = vpack.c.bf16 %v453, %v446
        %v475 = vpack.c.bf16 %v454, %v447
        %v476 = vpack.c.bf16 %v455, %v448
        %v477 = vpack.c.bf16 %v456, %v449
        %v478 = vpack.c.bf16 %v457, %v450
        %v479 = vpack.c.bf16 %v458, %v451
        %v480 = vpack.c.bf16 %v459, %v452
        %v481 = vpack.c.bf16 %v467, %v460
        %v482 = vpack.c.bf16 %v468, %v461
        %v483 = vpack.c.bf16 %v469, %v462
        %v484 = vpack.c.bf16 %v470, %v463
        %v485 = vpack.c.bf16 %v471, %v464
        %v486 = vpack.c.bf16 %v472, %v465
        %v487 = vpack.c.bf16 %v473, %v466
        %v488 = vld [vmem:[%s1] sm:$0xff]
        %v489 = vld [vmem:[%s1 + $0x8] sm:$0xff]
        %v490 = vld [vmem:[%s1 + $0x10] sm:$0xff]
        %v491 = vld [vmem:[%s1 + $0x18] sm:$0xff]
        %v492 = vld [vmem:[%s1 + $0x20] sm:$0xff]
        %v493 = vld [vmem:[%s1 + $0x28] sm:$0xff]
        %v494 = vld [vmem:[%s1 + $0x30] sm:$0xff]
        %v495 = vld [vmem:[%s1 + $0x38] sm:$0xff]
        %v496 = vld [vmem:[%s1 + $0x40] sm:$0xff]
        %v497 = vld [vmem:[%s1 + $0x48] sm:$0xff]
        %v498 = vld [vmem:[%s1 + $0x50] sm:$0xff]
        %v499 = vld [vmem:[%s1 + $0x58] sm:$0xff]
        %v500 = vld [vmem:[%s1 + $0x60] sm:$0xff]
        %v501 = vld [vmem:[%s1 + $0x68] sm:$0xff]
        %v502 = vld [vmem:[%s1 + $0x70] sm:$0xff]
        %v503 = vld [vmem:[%s1 + $0x78] sm:$0xff]
        %v504 = vld [vmem:[%s1 + $0x80] sm:$0xff]
        %v505 = vld [vmem:[%s1 + $0x88] sm:$0xff]
        %v506 = vld [vmem:[%s1 + $0x90] sm:$0xff]
        %v507 = vld [vmem:[%s1 + $0x98] sm:$0xff]
        %v508 = vld [vmem:[%s1 + $0xa0] sm:$0xff]
        %v509 = vld [vmem:[%s1 + $0xa8] sm:$0xff]
        %v510 = vld [vmem:[%s1 + $0xb0] sm:$0xff]
        %v511 = vld [vmem:[%s1 + $0xb8] sm:$0xff]
        %v512 = vld [vmem:[%s1 + $0xc0] sm:$0xff]
        %v513 = vld [vmem:[%s1 + $0xc8] sm:$0xff]
        %v514 = vld [vmem:[%s1 + $0xd0] sm:$0xff]
        %v515 = vld [vmem:[%s1 + $0xd8] sm:$0xff]
        %v516 = vld [vmem:[%s1 + $0xe0] sm:$0xff]
        %v517 = vld [vmem:[%s1 + $0xe8] sm:$0xff]
        %v518 = vld [vmem:[%s1 + $0xf0] sm:$0xff]
        %v519 = vld [vmem:[%s1 + $0xf8] sm:$0xff]
        %v520 = vld [vmem:[%s1 + $0x100] sm:$0xff]
        %v521 = vld [vmem:[%s1 + $0x108] sm:$0xff]
        %v522 = vld [vmem:[%s1 + $0x110] sm:$0xff]
        %v523 = vld [vmem:[%s1 + $0x118] sm:$0xff]
        %v524 = vld [vmem:[%s1 + $0x120] sm:$0xff]
        %v525 = vld [vmem:[%s1 + $0x128] sm:$0xff]
        %v526 = vld [vmem:[%s1 + $0x130] sm:$0xff]
        %v527 = vld [vmem:[%s1 + $0x138] sm:$0xff]
        %v528 = vld [vmem:[%s1 + $0x140] sm:$0xff]
        %v529 = vld [vmem:[%s1 + $0x148] sm:$0xff]
        %v530 = vld [vmem:[%s1 + $0x150] sm:$0xff]
        %v531 = vld [vmem:[%s1 + $0x158] sm:$0xff]
        %v532 = vld [vmem:[%s1 + $0x160] sm:$0xff]
        %v533 = vld [vmem:[%s1 + $0x168] sm:$0xff]
        %v534 = vld [vmem:[%s1 + $0x170] sm:$0xff]
        %v535 = vld [vmem:[%s1 + $0x178] sm:$0xff]
        %v536 = vld [vmem:[%s1 + $0x180] sm:$0xff]
        %v537 = vld [vmem:[%s1 + $0x188] sm:$0xff]
        %v538 = vld [vmem:[%s1 + $0x190] sm:$0xff]
        %v539 = vld [vmem:[%s1 + $0x198] sm:$0xff]
        %v540 = vld [vmem:[%s1 + $0x1a0] sm:$0xff]
        %v541 = vld [vmem:[%s1 + $0x1a8] sm:$0xff]
        %v542 = vld [vmem:[%s1 + $0x1b0] sm:$0xff]
        %v543 = vld [vmem:[%s1 + $0x1b8] sm:$0xff]
        %v544 = vld [vmem:[%s1 + $0x1c0] sm:$0xff]
        %v545 = vld [vmem:[%s1 + $0x1c8] sm:$0xff]
        %v546 = vld [vmem:[%s1 + $0x1d0] sm:$0xff]
        %v547 = vld [vmem:[%s1 + $0x1d8] sm:$0xff]
        %v548 = vld [vmem:[%s1 + $0x1e0] sm:$0xff]
        %v549 = vld [vmem:[%s1 + $0x1e8] sm:$0xff]
        %v550 = vld [vmem:[%s1 + $0x1f0] sm:$0xff]
        %v551 = vld [vmem:[%s1 + $0x1f8] sm:$0xff]
        %v552 = vld [vmem:[%s1 + $0x200] sm:$0xff]
        %v553 = vld [vmem:[%s1 + $0x208] sm:$0xff]
        %v554 = vld [vmem:[%s1 + $0x210] sm:$0xff]
        %v555 = vld [vmem:[%s1 + $0x218] sm:$0xff]
        %v556 = vld [vmem:[%s1 + $0x220] sm:$0xff]
        %v557 = vld [vmem:[%s1 + $0x228] sm:$0xff]
        %v558 = vld [vmem:[%s1 + $0x230] sm:$0xff]
        %v559 = vld [vmem:[%s1 + $0x238] sm:$0xff]
        %v560 = vld [vmem:[%s1 + $0x240] sm:$0xff]
        %v561 = vld [vmem:[%s1 + $0x248] sm:$0xff]
        %v562 = vld [vmem:[%s1 + $0x250] sm:$0xff]
        %v563 = vld [vmem:[%s1 + $0x258] sm:$0xff]
        %v564 = vld [vmem:[%s1 + $0x260] sm:$0xff]
        %v565 = vld [vmem:[%s1 + $0x268] sm:$0xff]
        %v566 = vld [vmem:[%s1 + $0x270] sm:$0xff]
        %v567 = vld [vmem:[%s1 + $0x278] sm:$0xff]
        %v568 = vld [vmem:[%s1 + $0x280] sm:$0xff]
        %v569 = vld [vmem:[%s1 + $0x288] sm:$0xff]
        %v570 = vld [vmem:[%s1 + $0x290] sm:$0xff]
        %v571 = vld [vmem:[%s1 + $0x298] sm:$0xff]
        %v572 = vld [vmem:[%s1 + $0x2a0] sm:$0xff]
        %v573 = vld [vmem:[%s1 + $0x2a8] sm:$0xff]
        %v574 = vld [vmem:[%s1 + $0x2b0] sm:$0xff]
        %v575 = vld [vmem:[%s1 + $0x2b8] sm:$0xff]
        %v576 = vld [vmem:[%s1 + $0x2c0] sm:$0xff]
        %v577 = vld [vmem:[%s1 + $0x2c8] sm:$0xff]
        %v578 = vld [vmem:[%s1 + $0x2d0] sm:$0xff]
        %v579 = vld [vmem:[%s1 + $0x2d8] sm:$0xff]
        %v580 = vld [vmem:[%s1 + $0x2e0] sm:$0xff]
        %v581 = vld [vmem:[%s1 + $0x2e8] sm:$0xff]
        %v582 = vld [vmem:[%s1 + $0x2f0] sm:$0xff]
        %v583 = vld [vmem:[%s1 + $0x2f8] sm:$0xff]
        %v584 = vld [vmem:[%s1 + $0x300] sm:$0xff]
        %v585 = vld [vmem:[%s1 + $0x308] sm:$0xff]
        %v586 = vld [vmem:[%s2] sm:$0x3]
        %v588 = vlaneseq
        %v589 = vshrl.u32 %v588, 7
        %v590 = vsub.s32 0, %v589
        %v591 = vrot.slane %v586, %v590
        %v592 = vlaneseq
        %v593 = vshrl.u32 %v592, 7
        %v594 = vsub.s32 1, %v593
        %v595 = vrot.slane %v586, %v594
        %v696 = vunpack.c.l.b16 %v488
        %v697 = vunpack.c.h.b16 %v488
        %v698 = vunpack.c.l.b16 %v489
        %v699 = vunpack.c.h.b16 %v489
        %v700 = vunpack.c.l.b16 %v490
        %v701 = vunpack.c.h.b16 %v490
        %v702 = vunpack.c.l.b16 %v491
        %v703 = vunpack.c.h.b16 %v491
        %v704 = vunpack.c.l.b16 %v492
        %v705 = vunpack.c.h.b16 %v492
        %v706 = vunpack.c.l.b16 %v493
        %v707 = vunpack.c.h.b16 %v493
        %v708 = vunpack.c.l.b16 %v494
        %v709 = vunpack.c.h.b16 %v494
        %v710 = vunpack.c.l.b16 %v495
        %v711 = vunpack.c.h.b16 %v495
        %v712 = vunpack.c.l.b16 %v496
        %v713 = vunpack.c.h.b16 %v496
        %v714 = vunpack.c.l.b16 %v497
        %v715 = vunpack.c.h.b16 %v497
        %v716 = vunpack.c.l.b16 %v498
        %v717 = vunpack.c.h.b16 %v498
        %v718 = vunpack.c.l.b16 %v499
        %v719 = vunpack.c.h.b16 %v499
        %v720 = vunpack.c.l.b16 %v500
        %v721 = vunpack.c.h.b16 %v500
        %v722 = vunpack.c.l.b16 %v501
        %v723 = vunpack.c.h.b16 %v501
        %v724 = vunpack.c.l.b16 %v502
        %v725 = vunpack.c.h.b16 %v502
        %v726 = vunpack.c.l.b16 %v503
        %v727 = vunpack.c.h.b16 %v503
        %v728 = vunpack.c.l.b16 %v504
        %v729 = vunpack.c.h.b16 %v504
        %v730 = vunpack.c.l.b16 %v505
        %v731 = vunpack.c.h.b16 %v505
        %v732 = vunpack.c.l.b16 %v506
        %v733 = vunpack.c.h.b16 %v506
        %v734 = vunpack.c.l.b16 %v507
        %v735 = vunpack.c.h.b16 %v507
        %v736 = vunpack.c.l.b16 %v508
        %v737 = vunpack.c.h.b16 %v508
        %v738 = vunpack.c.l.b16 %v509
        %v739 = vunpack.c.h.b16 %v509
        %v740 = vunpack.c.l.b16 %v510
        %v741 = vunpack.c.h.b16 %v510
        %v742 = vunpack.c.l.b16 %v511
        %v743 = vunpack.c.h.b16 %v511
        %v744 = vunpack.c.l.b16 %v512
        %v745 = vunpack.c.h.b16 %v512
        %v746 = vunpack.c.l.b16 %v513
        %v747 = vunpack.c.h.b16 %v513
        %v748 = vunpack.c.l.b16 %v514
        %v749 = vunpack.c.h.b16 %v514
        %v750 = vunpack.c.l.b16 %v515
        %v751 = vunpack.c.h.b16 %v515
        %v752 = vunpack.c.l.b16 %v516
        %v753 = vunpack.c.h.b16 %v516
        %v754 = vunpack.c.l.b16 %v517
        %v755 = vunpack.c.h.b16 %v517
        %v756 = vunpack.c.l.b16 %v518
        %v757 = vunpack.c.h.b16 %v518
        %v758 = vunpack.c.l.b16 %v519
        %v759 = vunpack.c.h.b16 %v519
        %v760 = vunpack.c.l.b16 %v520
        %v761 = vunpack.c.h.b16 %v520
        %v762 = vunpack.c.l.b16 %v521
        %v763 = vunpack.c.h.b16 %v521
        %v764 = vunpack.c.l.b16 %v522
        %v765 = vunpack.c.h.b16 %v522
        %v766 = vunpack.c.l.b16 %v523
        %v767 = vunpack.c.h.b16 %v523
        %v768 = vunpack.c.l.b16 %v524
        %v769 = vunpack.c.h.b16 %v524
        %v770 = vunpack.c.l.b16 %v525
        %v771 = vunpack.c.h.b16 %v525
        %v772 = vunpack.c.l.b16 %v526
        %v773 = vunpack.c.h.b16 %v526
        %v774 = vunpack.c.l.b16 %v527
        %v775 = vunpack.c.h.b16 %v527
        %v776 = vunpack.c.l.b16 %v528
        %v777 = vunpack.c.h.b16 %v528
        %v778 = vunpack.c.l.b16 %v529
        %v779 = vunpack.c.h.b16 %v529
        %v780 = vunpack.c.l.b16 %v530
        %v781 = vunpack.c.h.b16 %v530
        %v782 = vunpack.c.l.b16 %v531
        %v783 = vunpack.c.h.b16 %v531
        %v784 = vunpack.c.l.b16 %v532
        %v785 = vunpack.c.h.b16 %v532
        %v786 = vunpack.c.l.b16 %v533
        %v787 = vunpack.c.h.b16 %v533
        %v788 = vunpack.c.l.b16 %v534
        %v789 = vunpack.c.h.b16 %v534
        %v790 = vunpack.c.l.b16 %v535
        %v791 = vunpack.c.h.b16 %v535
        %v792 = vunpack.c.l.b16 %v536
        %v793 = vunpack.c.h.b16 %v536
        %v794 = vunpack.c.l.b16 %v537
        %v795 = vunpack.c.h.b16 %v537
        %v796 = vunpack.c.l.b16 %v538
        %v797 = vunpack.c.h.b16 %v538
        %v798 = vunpack.c.l.b16 %v539
        %v799 = vunpack.c.h.b16 %v539
        %v800 = vunpack.c.l.b16 %v540
        %v801 = vunpack.c.h.b16 %v540
        %v802 = vunpack.c.l.b16 %v541
        %v803 = vunpack.c.h.b16 %v541
        %v804 = vunpack.c.l.b16 %v542
        %v805 = vunpack.c.h.b16 %v542
        %v806 = vunpack.c.l.b16 %v543
        %v807 = vunpack.c.h.b16 %v543
        %v808 = vunpack.c.l.b16 %v544
        %v809 = vunpack.c.h.b16 %v544
        %v810 = vunpack.c.l.b16 %v545
        %v811 = vunpack.c.h.b16 %v545
        %v812 = vunpack.c.l.b16 %v546
        %v813 = vunpack.c.h.b16 %v546
        %v814 = vunpack.c.l.b16 %v547
        %v815 = vunpack.c.h.b16 %v547
        %v816 = vunpack.c.l.b16 %v548
        %v817 = vunpack.c.h.b16 %v548
        %v818 = vunpack.c.l.b16 %v549
        %v819 = vunpack.c.h.b16 %v549
        %v820 = vunpack.c.l.b16 %v550
        %v821 = vunpack.c.h.b16 %v550
        %v822 = vunpack.c.l.b16 %v551
        %v823 = vunpack.c.h.b16 %v551
        %v824 = vunpack.c.l.b16 %v552
        %v825 = vunpack.c.h.b16 %v552
        %v826 = vunpack.c.l.b16 %v553
        %v827 = vunpack.c.h.b16 %v553
        %v828 = vunpack.c.l.b16 %v554
        %v829 = vunpack.c.h.b16 %v554
        %v830 = vunpack.c.l.b16 %v555
        %v831 = vunpack.c.h.b16 %v555
        %v832 = vunpack.c.l.b16 %v556
        %v833 = vunpack.c.h.b16 %v556
        %v834 = vunpack.c.l.b16 %v557
        %v835 = vunpack.c.h.b16 %v557
        %v836 = vunpack.c.l.b16 %v558
        %v837 = vunpack.c.h.b16 %v558
        %v838 = vunpack.c.l.b16 %v559
        %v839 = vunpack.c.h.b16 %v559
        %v840 = vunpack.c.l.b16 %v560
        %v841 = vunpack.c.h.b16 %v560
        %v842 = vunpack.c.l.b16 %v561
        %v843 = vunpack.c.h.b16 %v561
        %v844 = vunpack.c.l.b16 %v562
        %v845 = vunpack.c.h.b16 %v562
        %v846 = vunpack.c.l.b16 %v563
        %v847 = vunpack.c.h.b16 %v563
        %v848 = vunpack.c.l.b16 %v564
        %v849 = vunpack.c.h.b16 %v564
        %v850 = vunpack.c.l.b16 %v565
        %v851 = vunpack.c.h.b16 %v565
        %v852 = vunpack.c.l.b16 %v566
        %v853 = vunpack.c.h.b16 %v566
        %v854 = vunpack.c.l.b16 %v567
        %v855 = vunpack.c.h.b16 %v567
        %v856 = vunpack.c.l.b16 %v568
        %v857 = vunpack.c.h.b16 %v568
        %v858 = vunpack.c.l.b16 %v569
        %v859 = vunpack.c.h.b16 %v569
        %v860 = vunpack.c.l.b16 %v570
        %v861 = vunpack.c.h.b16 %v570
        %v862 = vunpack.c.l.b16 %v571
        %v863 = vunpack.c.h.b16 %v571
        %v864 = vunpack.c.l.b16 %v572
        %v865 = vunpack.c.h.b16 %v572
        %v866 = vunpack.c.l.b16 %v573
        %v867 = vunpack.c.h.b16 %v573
        %v868 = vunpack.c.l.b16 %v574
        %v869 = vunpack.c.h.b16 %v574
        %v870 = vunpack.c.l.b16 %v575
        %v871 = vunpack.c.h.b16 %v575
        %v872 = vunpack.c.l.b16 %v576
        %v873 = vunpack.c.h.b16 %v576
        %v874 = vunpack.c.l.b16 %v577
        %v875 = vunpack.c.h.b16 %v577
        %v876 = vunpack.c.l.b16 %v578
        %v877 = vunpack.c.h.b16 %v578
        %v878 = vunpack.c.l.b16 %v579
        %v879 = vunpack.c.h.b16 %v579
        %v880 = vunpack.c.l.b16 %v580
        %v881 = vunpack.c.h.b16 %v580
        %v882 = vunpack.c.l.b16 %v581
        %v883 = vunpack.c.h.b16 %v581
        %v884 = vunpack.c.l.b16 %v582
        %v885 = vunpack.c.h.b16 %v582
        %v886 = vunpack.c.l.b16 %v583
        %v887 = vunpack.c.h.b16 %v583
        %v888 = vunpack.c.l.b16 %v584
        %v889 = vunpack.c.h.b16 %v584
        %v890 = vunpack.c.l.b16 %v585
        %v891 = vunpack.c.h.b16 %v585
        %v892 = vpack.c.b16 %v698, %v696
        %v893 = vpack.c.b16 %v699, %v697
        %v894 = vpack.c.b16 %v702, %v700
        %v895 = vpack.c.b16 %v703, %v701
        %v896 = vpack.c.b16 %v706, %v704
        %v897 = vpack.c.b16 %v707, %v705
        %v898 = vpack.c.b16 %v710, %v708
        %v899 = vpack.c.b16 %v711, %v709
        %v900 = vpack.c.b16 %v714, %v712
        %v901 = vpack.c.b16 %v715, %v713
        %v902 = vpack.c.b16 %v718, %v716
        %v903 = vpack.c.b16 %v719, %v717
        %v904 = vpack.c.b16 %v722, %v720
        %v905 = vpack.c.b16 %v723, %v721
        %v906 = vpack.c.b16 %v726, %v724
        %v907 = vpack.c.b16 %v727, %v725
        %v908 = vpack.c.b16 %v730, %v728
        %v909 = vpack.c.b16 %v731, %v729
        %v910 = vpack.c.b16 %v734, %v732
        %v911 = vpack.c.b16 %v735, %v733
        %v912 = vpack.c.b16 %v738, %v736
        %v913 = vpack.c.b16 %v739, %v737
        %v914 = vpack.c.b16 %v742, %v740
        %v915 = vpack.c.b16 %v743, %v741
        %v916 = vpack.c.b16 %v746, %v744
        %v917 = vpack.c.b16 %v747, %v745
        %v918 = vpack.c.b16 %v750, %v748
        %v919 = vpack.c.b16 %v751, %v749
        %v920 = vpack.c.b16 %v754, %v752
        %v921 = vpack.c.b16 %v755, %v753
        %v922 = vpack.c.b16 %v758, %v756
        %v923 = vpack.c.b16 %v759, %v757
        %v924 = vpack.c.b16 %v762, %v760
        %v925 = vpack.c.b16 %v763, %v761
        %v926 = vpack.c.b16 %v766, %v764
        %v927 = vpack.c.b16 %v767, %v765
        %v928 = vpack.c.b16 %v770, %v768
        %v929 = vpack.c.b16 %v771, %v769
        %v930 = vpack.c.b16 %v774, %v772
        %v931 = vpack.c.b16 %v775, %v773
        %v932 = vpack.c.b16 %v778, %v776
        %v933 = vpack.c.b16 %v779, %v777
        %v934 = vpack.c.b16 %v782, %v780
        %v935 = vpack.c.b16 %v783, %v781
        %v936 = vpack.c.b16 %v786, %v784
        %v937 = vpack.c.b16 %v787, %v785
        %v938 = vpack.c.b16 %v790, %v788
        %v939 = vpack.c.b16 %v791, %v789
        %v940 = vpack.c.b16 %v794, %v792
        %v941 = vpack.c.b16 %v795, %v793
        %v942 = vpack.c.b16 %v798, %v796
        %v943 = vpack.c.b16 %v799, %v797
        %v944 = vpack.c.b16 %v802, %v800
        %v945 = vpack.c.b16 %v803, %v801
        %v946 = vpack.c.b16 %v806, %v804
        %v947 = vpack.c.b16 %v807, %v805
        %v948 = vpack.c.b16 %v810, %v808
        %v949 = vpack.c.b16 %v811, %v809
        %v950 = vpack.c.b16 %v814, %v812
        %v951 = vpack.c.b16 %v815, %v813
        %v952 = vpack.c.b16 %v818, %v816
        %v953 = vpack.c.b16 %v819, %v817
        %v954 = vpack.c.b16 %v822, %v820
        %v955 = vpack.c.b16 %v823, %v821
        %v956 = vpack.c.b16 %v826, %v824
        %v957 = vpack.c.b16 %v827, %v825
        %v958 = vpack.c.b16 %v830, %v828
        %v959 = vpack.c.b16 %v831, %v829
        %v960 = vpack.c.b16 %v834, %v832
        %v961 = vpack.c.b16 %v835, %v833
        %v962 = vpack.c.b16 %v838, %v836
        %v963 = vpack.c.b16 %v839, %v837
        %v964 = vpack.c.b16 %v842, %v840
        %v965 = vpack.c.b16 %v843, %v841
        %v966 = vpack.c.b16 %v846, %v844
        %v967 = vpack.c.b16 %v847, %v845
        %v968 = vpack.c.b16 %v850, %v848
        %v969 = vpack.c.b16 %v851, %v849
        %v970 = vpack.c.b16 %v854, %v852
        %v971 = vpack.c.b16 %v855, %v853
        %v972 = vpack.c.b16 %v858, %v856
        %v973 = vpack.c.b16 %v859, %v857
        %v974 = vpack.c.b16 %v862, %v860
        %v975 = vpack.c.b16 %v863, %v861
        %v976 = vpack.c.b16 %v866, %v864
        %v977 = vpack.c.b16 %v867, %v865
        %v978 = vpack.c.b16 %v870, %v868
        %v979 = vpack.c.b16 %v871, %v869
        %v980 = vpack.c.b16 %v874, %v872
        %v981 = vpack.c.b16 %v875, %v873
        %v982 = vpack.c.b16 %v878, %v876
        %v983 = vpack.c.b16 %v879, %v877
        %v984 = vpack.c.b16 %v882, %v880
        %v985 = vpack.c.b16 %v883, %v881
        %v986 = vpack.c.b16 %v886, %v884
        %v987 = vpack.c.b16 %v887, %v885
        %v988 = vpack.c.b16 %v890, %v888
        %v989 = vpack.c.b16 %v891, %v889
        %vm1088 = vcmask 130048
        %v1090 = vsel %vm1088, %v480, 0
        %v1093 = vsel %vm1088, %v487, 0
        %1095 = vmatprep.subr.bf16.mxu0 %v893
        %1096 = vmatpush1.bf16.msra.mxu0 %v892
        %1097 = vmatprep.subr.bf16.mxu0 %v895
        %1098 = vmatpush1.bf16.msra.mxu0 %v894
        %1099 = vmatprep.subr.bf16.mxu0 %v897
        %1100 = vmatpush1.bf16.msra.mxu0 %v896
        %1101 = vmatprep.subr.bf16.mxu0 %v899
        %1102 = vmatpush1.bf16.msra.mxu0 %v898
        %1103 = vmatprep.subr.bf16.mxu0 %v901
        %1104 = vmatpush1.bf16.msra.mxu0 %v900
        %1105 = vmatprep.subr.bf16.mxu0 %v903
        %1106 = vmatpush1.bf16.msra.mxu0 %v902
        %1107 = vmatprep.subr.bf16.mxu0 %v905
        %1108 = vmatpush1.bf16.msra.mxu0 %v904
        %1109 = vmatprep.subr.bf16.mxu0 %v907
        %1110 = vmatpush1.bf16.msra.mxu0 %v906
        %1111 = vmatprep.subr.bf16.mxu0 %v909
        %1112 = vmatpush1.bf16.msra.mxu0 %v908
        %1113 = vmatprep.subr.bf16.mxu0 %v911
        %1114 = vmatpush1.bf16.msra.mxu0 %v910
        %1115 = vmatprep.subr.bf16.mxu0 %v913
        %1116 = vmatpush1.bf16.msra.mxu0 %v912
        %1117 = vmatprep.subr.bf16.mxu0 %v915
        %1118 = vmatpush1.bf16.msra.mxu0 %v914
        %1119 = vmatprep.subr.bf16.mxu0 %v917
        %1120 = vmatpush1.bf16.msra.mxu0 %v916
        %1121 = vmatprep.subr.bf16.mxu0 %v919
        %1122 = vmatpush1.bf16.msra.mxu0 %v918
        %1123 = vmatprep.subr.bf16.mxu0 %v921
        %1124 = vmatpush1.bf16.msra.mxu0 %v920
        %1125 = vmatprep.subr.bf16.mxu0 %v923
        %1126 = vmatpush1.bf16.msra.mxu0 %v922
        %1127 = vmatprep.mubr.bf16.mxu0 %v475
        %1128 = vmatmul.mubr.bf16.gmra.mrb[0].mxu0 %v474
        %v1129 = vpop.f32.mrb[0].mxu0
        %v1130 = vadd.f32 %v591, %v1129
        %v1131 = vpop.f32.mrb[0].mxu0
        %v1132 = vadd.f32 %v595, %v1131
        %v1133 = vpop.f32.mrb[0].mxu0
        %v1134 = vadd.f32 %v591, %v1133
        %v1135 = vpop.f32.mrb[0].mxu0
        %v1136 = vadd.f32 %v595, %v1135
        %1137 = vmatprep.mubr.bf16.mxu0 %v482
        %1138 = vmatmul.mubr.bf16.gmra.mrb[0].mxu0 %v481
        %v1139 = vpop.f32.mrb[0].mxu0
        %v1140 = vadd.f32 %v591, %v1139
        %v1141 = vpop.f32.mrb[0].mxu0
        %v1142 = vadd.f32 %v595, %v1141
        %v1143 = vpop.f32.mrb[0].mxu0
        %v1144 = vadd.f32 %v591, %v1143
        %v1145 = vpop.f32.mrb[0].mxu0
        %v1146 = vadd.f32 %v595, %v1145
        %1147 = vdwg.mxu0
        %1148 = vmatprep.subr.bf16.mxu0 %v925
        %1149 = vmatpush1.bf16.msra.mxu0 %v924
        %1150 = vmatprep.subr.bf16.mxu0 %v927
        %1151 = vmatpush1.bf16.msra.mxu0 %v926
        %1152 = vmatprep.subr.bf16.mxu0 %v929
        %1153 = vmatpush1.bf16.msra.mxu0 %v928
        %1154 = vmatprep.subr.bf16.mxu0 %v931
        %1155 = vmatpush1.bf16.msra.mxu0 %v930
        %1156 = vmatprep.subr.bf16.mxu0 %v933
        %1157 = vmatpush1.bf16.msra.mxu0 %v932
        %1158 = vmatprep.subr.bf16.mxu0 %v935
        %1159 = vmatpush1.bf16.msra.mxu0 %v934
        %1160 = vmatprep.subr.bf16.mxu0 %v937
        %1161 = vmatpush1.bf16.msra.mxu0 %v936
        %1162 = vmatprep.subr.bf16.mxu0 %v939
        %1163 = vmatpush1.bf16.msra.mxu0 %v938
        %1164 = vmatprep.subr.bf16.mxu0 %v941
        %1165 = vmatpush1.bf16.msra.mxu0 %v940
        %1166 = vmatprep.subr.bf16.mxu0 %v943
        %1167 = vmatpush1.bf16.msra.mxu0 %v942
        %1168 = vmatprep.subr.bf16.mxu0 %v945
        %1169 = vmatpush1.bf16.msra.mxu0 %v944
        %1170 = vmatprep.subr.bf16.mxu0 %v947
        %1171 = vmatpush1.bf16.msra.mxu0 %v946
        %1172 = vmatprep.subr.bf16.mxu0 %v949
        %1173 = vmatpush1.bf16.msra.mxu0 %v948
        %1174 = vmatprep.subr.bf16.mxu0 %v951
        %1175 = vmatpush1.bf16.msra.mxu0 %v950
        %1176 = vmatprep.subr.bf16.mxu0 %v953
        %1177 = vmatpush1.bf16.msra.mxu0 %v952
        %1178 = vmatprep.subr.bf16.mxu0 %v955
        %1179 = vmatpush1.bf16.msra.mxu0 %v954
        %1180 = vmatprep.mubr.bf16.mxu0 %v477
        %1181 = vmatmul.mubr.bf16.gmra.mrb[0].mxu0 %v476
        %v1182 = vpop.f32.mrb[0].mxu0
        %v1183 = vadd.f32 %v1130, %v1182
        %v1184 = vpop.f32.mrb[0].mxu0
        %v1185 = vadd.f32 %v1132, %v1184
        %v1186 = vpop.f32.mrb[0].mxu0
        %v1187 = vadd.f32 %v1134, %v1186
        %v1188 = vpop.f32.mrb[0].mxu0
        %v1189 = vadd.f32 %v1136, %v1188
        %1190 = vmatprep.mubr.bf16.mxu0 %v484
        %1191 = vmatmul.mubr.bf16.gmra.mrb[0].mxu0 %v483
        %v1192 = vpop.f32.mrb[0].mxu0
        %v1193 = vadd.f32 %v1140, %v1192
        %v1194 = vpop.f32.mrb[0].mxu0
        %v1195 = vadd.f32 %v1142, %v1194
        %v1196 = vpop.f32.mrb[0].mxu0
        %v1197 = vadd.f32 %v1144, %v1196
        %v1198 = vpop.f32.mrb[0].mxu0
        %v1199 = vadd.f32 %v1146, %v1198
        %1200 = vdwg.mxu0
        %1201 = vmatprep.subr.bf16.mxu0 %v957
        %1202 = vmatpush1.bf16.msra.mxu0 %v956
        %1203 = vmatprep.subr.bf16.mxu0 %v959
        %1204 = vmatpush1.bf16.msra.mxu0 %v958
        %1205 = vmatprep.subr.bf16.mxu0 %v961
        %1206 = vmatpush1.bf16.msra.mxu0 %v960
        %1207 = vmatprep.subr.bf16.mxu0 %v963
        %1208 = vmatpush1.bf16.msra.mxu0 %v962
        %1209 = vmatprep.subr.bf16.mxu0 %v965
        %1210 = vmatpush1.bf16.msra.mxu0 %v964
        %1211 = vmatprep.subr.bf16.mxu0 %v967
        %1212 = vmatpush1.bf16.msra.mxu0 %v966
        %1213 = vmatprep.subr.bf16.mxu0 %v969
        %1214 = vmatpush1.bf16.msra.mxu0 %v968
        %1215 = vmatprep.subr.bf16.mxu0 %v971
        %1216 = vmatpush1.bf16.msra.mxu0 %v970
        %1217 = vmatprep.subr.bf16.mxu0 %v973
        %1218 = vmatpush1.bf16.msra.mxu0 %v972
        %1219 = vmatprep.subr.bf16.mxu0 %v975
        %1220 = vmatpush1.bf16.msra.mxu0 %v974
        %1221 = vmatprep.subr.bf16.mxu0 %v977
        %1222 = vmatpush1.bf16.msra.mxu0 %v976
        %1223 = vmatprep.subr.bf16.mxu0 %v979
        %1224 = vmatpush1.bf16.msra.mxu0 %v978
        %1225 = vmatprep.subr.bf16.mxu0 %v981
        %1226 = vmatpush1.bf16.msra.mxu0 %v980
        %1227 = vmatprep.subr.bf16.mxu0 %v983
        %1228 = vmatpush1.bf16.msra.mxu0 %v982
        %1229 = vmatprep.subr.bf16.mxu0 %v985
        %1230 = vmatpush1.bf16.msra.mxu0 %v984
        %1231 = vmatprep.subr.bf16.mxu0 %v987
        %1232 = vmatpush1.bf16.msra.mxu0 %v986
        %1233 = vmatprep.mubr.bf16.mxu0 %v479
        %1234 = vmatmul.mubr.bf16.gmra.mrb[0].mxu0 %v478
        %v1235 = vpop.f32.mrb[0].mxu0
        %v1236 = vadd.f32 %v1183, %v1235
        %v1237 = vpop.f32.mrb[0].mxu0
        %v1238 = vadd.f32 %v1185, %v1237
        %v1239 = vpop.f32.mrb[0].mxu0
        %v1240 = vadd.f32 %v1187, %v1239
        %v1241 = vpop.f32.mrb[0].mxu0
        %v1242 = vadd.f32 %v1189, %v1241
        %1243 = vmatprep.mubr.bf16.mxu0 %v486
        %1244 = vmatmul.mubr.bf16.gmra.mrb[0].mxu0 %v485
        %v1245 = vpop.f32.mrb[0].mxu0
        %v1246 = vadd.f32 %v1193, %v1245
        %v1247 = vpop.f32.mrb[0].mxu0
        %v1248 = vadd.f32 %v1195, %v1247
        %v1249 = vpop.f32.mrb[0].mxu0
        %v1250 = vadd.f32 %v1197, %v1249
        %v1251 = vpop.f32.mrb[0].mxu0
        %v1252 = vadd.f32 %v1199, %v1251
        %1253 = vdwg.mxu0
        %1254 = vmatprep.subr.bf16.mxu0 %v989
        %1255 = vmatpush1.bf16.msra.mxu0 %v988
        %1256 = vmatprep.subr.bf16.mxu0 0
        %1257 = vmatpush1.bf16.msra.mxu0 0
        %1258 = vmatprep.subr.bf16.mxu0 0
        %1259 = vmatpush1.bf16.msra.mxu0 0
        %1260 = vmatprep.subr.bf16.mxu0 0
        %1261 = vmatpush1.bf16.msra.mxu0 0
        %1262 = vmatprep.subr.bf16.mxu0 0
        %1263 = vmatpush1.bf16.msra.mxu0 0
        %1264 = vmatprep.subr.bf16.mxu0 0
        %1265 = vmatpush1.bf16.msra.mxu0 0
        %1266 = vmatprep.subr.bf16.mxu0 0
        %1267 = vmatpush1.bf16.msra.mxu0 0
        %1268 = vmatprep.subr.bf16.mxu0 0
        %1269 = vmatpush1.bf16.msra.mxu0 0
        %1270 = vmatprep.subr.bf16.mxu0 0
        %1271 = vmatpush1.bf16.msra.mxu0 0
        %1272 = vmatprep.subr.bf16.mxu0 0
        %1273 = vmatpush1.bf16.msra.mxu0 0
        %1274 = vmatprep.subr.bf16.mxu0 0
        %1275 = vmatpush1.bf16.msra.mxu0 0
        %1276 = vmatprep.subr.bf16.mxu0 0
        %1277 = vmatpush1.bf16.msra.mxu0 0
        %1278 = vmatprep.subr.bf16.mxu0 0
        %1279 = vmatpush1.bf16.msra.mxu0 0
        %1280 = vmatprep.subr.bf16.mxu0 0
        %1281 = vmatpush1.bf16.msra.mxu0 0
        %1282 = vmatprep.subr.bf16.mxu0 0
        %1283 = vmatpush1.bf16.msra.mxu0 0
        %1284 = vmatprep.subr.bf16.mxu0 0
        %1285 = vmatpush1.bf16.msra.mxu0 0
        %1286 = vmatprep.mubr.bf16.mxu0 0
        %1287 = vmatmul.mubr.bf16.gmra.mrb[0].mxu0 %v1090
        %v1288 = vpop.f32.mrb[0].mxu0
        %v1289 = vadd.f32 %v1236, %v1288
        %v1290 = vpop.f32.mrb[0].mxu0
        %v1291 = vadd.f32 %v1238, %v1290
        %v1292 = vpop.f32.mrb[0].mxu0
        %v1293 = vadd.f32 %v1240, %v1292
        %v1294 = vpop.f32.mrb[0].mxu0
        %v1295 = vadd.f32 %v1242, %v1294
        %1296 = vmatprep.mubr.bf16.mxu0 0
        %1297 = vmatmul.mubr.bf16.gmra.mrb[0].mxu0 %v1093
        %v1298 = vpop.f32.mrb[0].mxu0
        %v1299 = vadd.f32 %v1246, %v1298
        %v1300 = vpop.f32.mrb[0].mxu0
        %v1301 = vadd.f32 %v1248, %v1300
        %v1302 = vpop.f32.mrb[0].mxu0
        %v1303 = vadd.f32 %v1250, %v1302
        %v1304 = vpop.f32.mrb[0].mxu0
        %v1305 = vadd.f32 %v1252, %v1304
        %1306 = vdwg.mxu0
        %v1307 = vpack.c.bf16 %v1293, %v1289
        %v1308 = vpack.c.bf16 %v1295, %v1291
        %v1309 = vpack.c.bf16 %v1303, %v1299
        %v1310 = vpack.c.bf16 %v1305, %v1301
        %v1311 = vmax.bf16 %v1307, 0
        %v1312 = vmax.bf16 %v1308, 0
        %v1313 = vmax.bf16 %v1309, 0
        %v1314 = vmax.bf16 %v1310, 0
        %v1315 = vld [vmem:[%s3] sm:$0xf]
        %v1316 = vld [vmem:[%s3 + $0x4] sm:$0xf]
        %v1317 = vld [vmem:[%s3 + $0x8] sm:$0xf]
        %v1318 = vld [vmem:[%s3 + $0xc] sm:$0xf]
        %v1319 = vld [vmem:[%s3 + $0x10] sm:$0xf]
        %v1320 = vld [vmem:[%s3 + $0x14] sm:$0xf]
        %v1321 = vld [vmem:[%s3 + $0x18] sm:$0xf]
        %v1322 = vld [vmem:[%s3 + $0x1c] sm:$0xf]
        %v1323 = vld [vmem:[%s3 + $0x20] sm:$0xf]
        %v1324 = vld [vmem:[%s3 + $0x24] sm:$0xf]
        %v1325 = vld [vmem:[%s3 + $0x28] sm:$0xf]
        %v1326 = vld [vmem:[%s3 + $0x2c] sm:$0xf]
        %v1327 = vld [vmem:[%s3 + $0x30] sm:$0xf]
        %v1328 = vld [vmem:[%s3 + $0x34] sm:$0xf]
        %v1329 = vld [vmem:[%s3 + $0x38] sm:$0xf]
        %v1330 = vld [vmem:[%s3 + $0x3c] sm:$0xf]
        %v1331 = vld [vmem:[%s3 + $0x40] sm:$0xf]
        %v1332 = vld [vmem:[%s3 + $0x44] sm:$0xf]
        %v1333 = vld [vmem:[%s3 + $0x48] sm:$0xf]
        %v1334 = vld [vmem:[%s3 + $0x4c] sm:$0xf]
        %v1335 = vld [vmem:[%s3 + $0x50] sm:$0xf]
        %v1336 = vld [vmem:[%s3 + $0x54] sm:$0xf]
        %v1337 = vld [vmem:[%s3 + $0x58] sm:$0xf]
        %v1338 = vld [vmem:[%s3 + $0x5c] sm:$0xf]
        %v1339 = vld [vmem:[%s3 + $0x60] sm:$0xf]
        %v1340 = vld [vmem:[%s3 + $0x64] sm:$0xf]
        %v1341 = vld [vmem:[%s3 + $0x68] sm:$0xf]
        %v1342 = vld [vmem:[%s3 + $0x6c] sm:$0xf]
        %v1343 = vld [vmem:[%s3 + $0x70] sm:$0xf]
        %v1344 = vld [vmem:[%s3 + $0x74] sm:$0xf]
        %v1345 = vld [vmem:[%s3 + $0x78] sm:$0xf]
        %v1346 = vld [vmem:[%s3 + $0x7c] sm:$0xf]
        %v1347 = vld [vmem:[%s4] sm:$0x1]
        %v1349 = vlaneseq
        %v1350 = vshrl.u32 %v1349, 7
        %v1351 = vsub.s32 0, %v1350
        %v1352 = vrot.slane %v1347, %v1351
        %v1386 = vunpack.c.l.b16 %v1315
        %v1387 = vunpack.c.l.b16 %v1316
        %v1388 = vunpack.c.l.b16 %v1317
        %v1389 = vunpack.c.l.b16 %v1318
        %v1390 = vunpack.c.l.b16 %v1319
        %v1391 = vunpack.c.l.b16 %v1320
        %v1392 = vunpack.c.l.b16 %v1321
        %v1393 = vunpack.c.l.b16 %v1322
        %v1394 = vunpack.c.l.b16 %v1323
        %v1395 = vunpack.c.l.b16 %v1324
        %v1396 = vunpack.c.l.b16 %v1325
        %v1397 = vunpack.c.l.b16 %v1326
        %v1398 = vunpack.c.l.b16 %v1327
        %v1399 = vunpack.c.l.b16 %v1328
        %v1400 = vunpack.c.l.b16 %v1329
        %v1401 = vunpack.c.l.b16 %v1330
        %v1402 = vunpack.c.l.b16 %v1331
        %v1403 = vunpack.c.l.b16 %v1332
        %v1404 = vunpack.c.l.b16 %v1333
        %v1405 = vunpack.c.l.b16 %v1334
        %v1406 = vunpack.c.l.b16 %v1335
        %v1407 = vunpack.c.l.b16 %v1336
        %v1408 = vunpack.c.l.b16 %v1337
        %v1409 = vunpack.c.l.b16 %v1338
        %v1410 = vunpack.c.l.b16 %v1339
        %v1411 = vunpack.c.l.b16 %v1340
        %v1412 = vunpack.c.l.b16 %v1341
        %v1413 = vunpack.c.l.b16 %v1342
        %v1414 = vunpack.c.l.b16 %v1343
        %v1415 = vunpack.c.l.b16 %v1344
        %v1416 = vunpack.c.l.b16 %v1345
        %v1417 = vunpack.c.l.b16 %v1346
        %v1418 = vpack.c.b16 %v1387, %v1386
        %v1419 = vpack.c.b16 %v1389, %v1388
        %v1420 = vpack.c.b16 %v1391, %v1390
        %v1421 = vpack.c.b16 %v1393, %v1392
        %v1422 = vpack.c.b16 %v1395, %v1394
        %v1423 = vpack.c.b16 %v1397, %v1396
        %v1424 = vpack.c.b16 %v1399, %v1398
        %v1425 = vpack.c.b16 %v1401, %v1400
        %v1426 = vpack.c.b16 %v1403, %v1402
        %v1427 = vpack.c.b16 %v1405, %v1404
        %v1428 = vpack.c.b16 %v1407, %v1406
        %v1429 = vpack.c.b16 %v1409, %v1408
        %v1430 = vpack.c.b16 %v1411, %v1410
        %v1431 = vpack.c.b16 %v1413, %v1412
        %v1432 = vpack.c.b16 %v1415, %v1414
        %v1433 = vpack.c.b16 %v1417, %v1416
        %1450 = vmatprep.subr.bf16.mxu0 0
        %1451 = vmatpush1.bf16.msra.mxu0 %v1418
        %1452 = vmatprep.subr.bf16.mxu0 0
        %1453 = vmatpush1.bf16.msra.mxu0 %v1419
        %1454 = vmatprep.subr.bf16.mxu0 0
        %1455 = vmatpush1.bf16.msra.mxu0 %v1420
        %1456 = vmatprep.subr.bf16.mxu0 0
        %1457 = vmatpush1.bf16.msra.mxu0 %v1421
        %1458 = vmatprep.subr.bf16.mxu0 0
        %1459 = vmatpush1.bf16.msra.mxu0 %v1422
        %1460 = vmatprep.subr.bf16.mxu0 0
        %1461 = vmatpush1.bf16.msra.mxu0 %v1423
        %1462 = vmatprep.subr.bf16.mxu0 0
        %1463 = vmatpush1.bf16.msra.mxu0 %v1424
        %1464 = vmatprep.subr.bf16.mxu0 0
        %1465 = vmatpush1.bf16.msra.mxu0 %v1425
        %1466 = vmatprep.subr.bf16.mxu0 0
        %1467 = vmatpush1.bf16.msra.mxu0 %v1426
        %1468 = vmatprep.subr.bf16.mxu0 0
        %1469 = vmatpush1.bf16.msra.mxu0 %v1427
        %1470 = vmatprep.subr.bf16.mxu0 0
        %1471 = vmatpush1.bf16.msra.mxu0 %v1428
        %1472 = vmatprep.subr.bf16.mxu0 0
        %1473 = vmatpush1.bf16.msra.mxu0 %v1429
        %1474 = vmatprep.subr.bf16.mxu0 0
        %1475 = vmatpush1.bf16.msra.mxu0 %v1430
        %1476 = vmatprep.subr.bf16.mxu0 0
        %1477 = vmatpush1.bf16.msra.mxu0 %v1431
        %1478 = vmatprep.subr.bf16.mxu0 0
        %1479 = vmatpush1.bf16.msra.mxu0 %v1432
        %1480 = vmatprep.subr.bf16.mxu0 0
        %1481 = vmatpush1.bf16.msra.mxu0 %v1433
        %1482 = vmatprep.mubr.bf16.mxu0 %v1312
        %1483 = vmatmul.mubr.bf16.gmra.mrb[0].mxu0 %v1311
        %v1484 = vpop.f32.mrb[0].mxu0
        %v1485 = vadd.f32 %v1352, %v1484
        %v1486 = vpop.f32.mrb[0].mxu0
        %v1487 = vpop.f32.mrb[0].mxu0
        %v1488 = vadd.f32 %v1352, %v1487
        %v1489 = vpop.f32.mrb[0].mxu0
        %1490 = vmatprep.mubr.bf16.mxu0 %v1314
        %1491 = vmatmul.mubr.bf16.gmra.mrb[0].mxu0 %v1313
        %v1492 = vpop.f32.mrb[0].mxu0
        %v1493 = vadd.f32 %v1352, %v1492
        %v1494 = vpop.f32.mrb[0].mxu0
        %v1495 = vpop.f32.mrb[0].mxu0
        %v1496 = vadd.f32 %v1352, %v1495
        %v1497 = vpop.f32.mrb[0].mxu0
        %1498 = vdwg.mxu0
        %v1499 = vpack.c.bf16 %v1488, %v1485
        %v1500 = vpack.c.bf16 %v1496, %v1493
        %v1501 = vmax.bf16 %v1499, 0
        %v1502 = vmax.bf16 %v1500, 0
        %v1503 = vld [vmem:[%s5] sm:$0xf]
        %v1504 = vld [vmem:[%s5 + $0x4] sm:$0xf]
        %v1505 = vld [vmem:[%s5 + $0x8] sm:$0xf]
        %v1506 = vld [vmem:[%s5 + $0xc] sm:$0xf]
        %v1507 = vld [vmem:[%s5 + $0x10] sm:$0xf]
        %v1508 = vld [vmem:[%s5 + $0x14] sm:$0xf]
        %v1509 = vld [vmem:[%s5 + $0x18] sm:$0xf]
        %v1510 = vld [vmem:[%s5 + $0x1c] sm:$0xf]
        %v1511 = vld [vmem:[%s5 + $0x20] sm:$0xf]
        %v1512 = vld [vmem:[%s5 + $0x24] sm:$0xf]
        %v1513 = vld [vmem:[%s5 + $0x28] sm:$0xf]
        %v1514 = vld [vmem:[%s5 + $0x2c] sm:$0xf]
        %v1515 = vld [vmem:[%s5 + $0x30] sm:$0xf]
        %v1516 = vld [vmem:[%s5 + $0x34] sm:$0xf]
        %v1517 = vld [vmem:[%s5 + $0x38] sm:$0xf]
        %v1518 = vld [vmem:[%s5 + $0x3c] sm:$0xf]
        %v1519 = vld [vmem:[%s6] sm:$0x1]
        %v1521 = vlaneseq
        %v1522 = vshrl.u32 %v1521, 7
        %v1523 = vsub.s32 0, %v1522
        %v1524 = vrot.slane %v1519, %v1523
        %v1542 = vunpack.c.l.b16 %v1503
        %v1543 = vunpack.c.l.b16 %v1504
        %v1544 = vunpack.c.l.b16 %v1505
        %v1545 = vunpack.c.l.b16 %v1506
        %v1546 = vunpack.c.l.b16 %v1507
        %v1547 = vunpack.c.l.b16 %v1508
        %v1548 = vunpack.c.l.b16 %v1509
        %v1549 = vunpack.c.l.b16 %v1510
        %v1550 = vunpack.c.l.b16 %v1511
        %v1551 = vunpack.c.l.b16 %v1512
        %v1552 = vunpack.c.l.b16 %v1513
        %v1553 = vunpack.c.l.b16 %v1514
        %v1554 = vunpack.c.l.b16 %v1515
        %v1555 = vunpack.c.l.b16 %v1516
        %v1556 = vunpack.c.l.b16 %v1517
        %v1557 = vunpack.c.l.b16 %v1518
        %v1558 = vpack.c.b16 %v1543, %v1542
        %v1559 = vpack.c.b16 %v1545, %v1544
        %v1560 = vpack.c.b16 %v1547, %v1546
        %v1561 = vpack.c.b16 %v1549, %v1548
        %v1562 = vpack.c.b16 %v1551, %v1550
        %v1563 = vpack.c.b16 %v1553, %v1552
        %v1564 = vpack.c.b16 %v1555, %v1554
        %v1565 = vpack.c.b16 %v1557, %v1556
        %1574 = vmatprep.subr.bf16.mxu0 0
        %1575 = vmatpush1.bf16.msra.mxu0 %v1558
        %1576 = vmatprep.subr.bf16.mxu0 0
        %1577 = vmatpush1.bf16.msra.mxu0 %v1559
        %1578 = vmatprep.subr.bf16.mxu0 0
        %1579 = vmatpush1.bf16.msra.mxu0 %v1560
        %1580 = vmatprep.subr.bf16.mxu0 0
        %1581 = vmatpush1.bf16.msra.mxu0 %v1561
        %1582 = vmatprep.subr.bf16.mxu0 0
        %1583 = vmatpush1.bf16.msra.mxu0 %v1562
        %1584 = vmatprep.subr.bf16.mxu0 0
        %1585 = vmatpush1.bf16.msra.mxu0 %v1563
        %1586 = vmatprep.subr.bf16.mxu0 0
        %1587 = vmatpush1.bf16.msra.mxu0 %v1564
        %1588 = vmatprep.subr.bf16.mxu0 0
        %1589 = vmatpush1.bf16.msra.mxu0 %v1565
        %1590 = vmatprep.subr.bf16.mxu0 0
        %1591 = vmatpush1.bf16.msra.mxu0 0
        %1592 = vmatprep.subr.bf16.mxu0 0
        %1593 = vmatpush1.bf16.msra.mxu0 0
        %1594 = vmatprep.subr.bf16.mxu0 0
        %1595 = vmatpush1.bf16.msra.mxu0 0
        %1596 = vmatprep.subr.bf16.mxu0 0
        %1597 = vmatpush1.bf16.msra.mxu0 0
        %1598 = vmatprep.subr.bf16.mxu0 0
        %1599 = vmatpush1.bf16.msra.mxu0 0
        %1600 = vmatprep.subr.bf16.mxu0 0
        %1601 = vmatpush1.bf16.msra.mxu0 0
        %1602 = vmatprep.subr.bf16.mxu0 0
        %1603 = vmatpush1.bf16.msra.mxu0 0
        %1604 = vmatprep.subr.bf16.mxu0 0
        %1605 = vmatpush1.bf16.msra.mxu0 0
        %1606 = vmatprep.mubr.bf16.mxu0 0
        %1607 = vmatmul.mubr.bf16.gmra.mrb[0].mxu0 %v1501
        %v1608 = vpop.f32.mrb[0].mxu0
        %v1609 = vadd.f32 %v1524, %v1608
        %v1610 = vpop.f32.mrb[0].mxu0
        %v1611 = vpop.f32.mrb[0].mxu0
        %v1612 = vadd.f32 %v1524, %v1611
        %v1613 = vpop.f32.mrb[0].mxu0
        %1614 = vmatprep.mubr.bf16.mxu0 0
        %1615 = vmatmul.mubr.bf16.gmra.mrb[0].mxu0 %v1502
        %v1616 = vpop.f32.mrb[0].mxu0
        %v1617 = vadd.f32 %v1524, %v1616
        %v1618 = vpop.f32.mrb[0].mxu0
        %v1619 = vpop.f32.mrb[0].mxu0
        %v1620 = vadd.f32 %v1524, %v1619
        %v1621 = vpop.f32.mrb[0].mxu0
        %1622 = vdwg.mxu0
        %v1623 = vpack.c.bf16 %v1612, %v1609
        %v1624 = vpack.c.bf16 %v1620, %v1617
        %v1625 = vmax.bf16 %v1623, 0
        %v1626 = vmax.bf16 %v1624, 0
        %v1627 = vld [vmem:[%s7] sm:$0xf]
        %v1628 = vld [vmem:[%s7 + $0x4] sm:$0xf]
        %v1629 = vld [vmem:[%s7 + $0x8] sm:$0xf]
        %v1630 = vld [vmem:[%s7 + $0xc] sm:$0xf]
        %v1631 = vld [vmem:[%s7 + $0x10] sm:$0xf]
        %v1632 = vld [vmem:[%s7 + $0x14] sm:$0xf]
        %v1633 = vld [vmem:[%s7 + $0x18] sm:$0xf]
        %v1634 = vld [vmem:[%s7 + $0x1c] sm:$0xf]
        %v1635 = vld [vmem:[%s7 + $0x20] sm:$0xf]
        %v1636 = vld [vmem:[%s7 + $0x24] sm:$0xf]
        %v1637 = vld [vmem:[%s7 + $0x28] sm:$0xf]
        %v1638 = vld [vmem:[%s7 + $0x2c] sm:$0xf]
        %v1639 = vld [vmem:[%s7 + $0x30] sm:$0xf]
        %v1640 = vld [vmem:[%s7 + $0x34] sm:$0xf]
        %v1641 = vld [vmem:[%s7 + $0x38] sm:$0xf]
        %v1642 = vld [vmem:[%s7 + $0x3c] sm:$0xf]
        %v1643 = vld [vmem:[%s8] sm:$0x1]
        %v1645 = vlaneseq
        %v1646 = vshrl.u32 %v1645, 7
        %v1647 = vsub.s32 0, %v1646
        %v1648 = vrot.slane %v1643, %v1647
        %v1666 = vunpack.c.l.b16 %v1627
        %v1667 = vunpack.c.l.b16 %v1628
        %v1668 = vunpack.c.l.b16 %v1629
        %v1669 = vunpack.c.l.b16 %v1630
        %v1670 = vunpack.c.l.b16 %v1631
        %v1671 = vunpack.c.l.b16 %v1632
        %v1672 = vunpack.c.l.b16 %v1633
        %v1673 = vunpack.c.l.b16 %v1634
        %v1674 = vunpack.c.l.b16 %v1635
        %v1675 = vunpack.c.l.b16 %v1636
        %v1676 = vunpack.c.l.b16 %v1637
        %v1677 = vunpack.c.l.b16 %v1638
        %v1678 = vunpack.c.l.b16 %v1639
        %v1679 = vunpack.c.l.b16 %v1640
        %v1680 = vunpack.c.l.b16 %v1641
        %v1681 = vunpack.c.l.b16 %v1642
        %v1682 = vpack.c.b16 %v1667, %v1666
        %v1683 = vpack.c.b16 %v1669, %v1668
        %v1684 = vpack.c.b16 %v1671, %v1670
        %v1685 = vpack.c.b16 %v1673, %v1672
        %v1686 = vpack.c.b16 %v1675, %v1674
        %v1687 = vpack.c.b16 %v1677, %v1676
        %v1688 = vpack.c.b16 %v1679, %v1678
        %v1689 = vpack.c.b16 %v1681, %v1680
        %1698 = vmatprep.subr.bf16.mxu0 0
        %1699 = vmatpush1.bf16.msra.mxu0 %v1682
        %1700 = vmatprep.subr.bf16.mxu0 0
        %1701 = vmatpush1.bf16.msra.mxu0 %v1683
        %1702 = vmatprep.subr.bf16.mxu0 0
        %1703 = vmatpush1.bf16.msra.mxu0 %v1684
        %1704 = vmatprep.subr.bf16.mxu0 0
        %1705 = vmatpush1.bf16.msra.mxu0 %v1685
        %1706 = vmatprep.subr.bf16.mxu0 0
        %1707 = vmatpush1.bf16.msra.mxu0 %v1686
        %1708 = vmatprep.subr.bf16.mxu0 0
        %1709 = vmatpush1.bf16.msra.mxu0 %v1687
        %1710 = vmatprep.subr.bf16.mxu0 0
        %1711 = vmatpush1.bf16.msra.mxu0 %v1688
        %1712 = vmatprep.subr.bf16.mxu0 0
        %1713 = vmatpush1.bf16.msra.mxu0 %v1689
        %1714 = vmatprep.subr.bf16.mxu0 0
        %1715 = vmatpush1.bf16.msra.mxu0 0
        %1716 = vmatprep.subr.bf16.mxu0 0
        %1717 = vmatpush1.bf16.msra.mxu0 0
        %1718 = vmatprep.subr.bf16.mxu0 0
        %1719 = vmatpush1.bf16.msra.mxu0 0
        %1720 = vmatprep.subr.bf16.mxu0 0
        %1721 = vmatpush1.bf16.msra.mxu0 0
        %1722 = vmatprep.subr.bf16.mxu0 0
        %1723 = vmatpush1.bf16.msra.mxu0 0
        %1724 = vmatprep.subr.bf16.mxu0 0
        %1725 = vmatpush1.bf16.msra.mxu0 0
        %1726 = vmatprep.subr.bf16.mxu0 0
        %1727 = vmatpush1.bf16.msra.mxu0 0
        %1728 = vmatprep.subr.bf16.mxu0 0
        %1729 = vmatpush1.bf16.msra.mxu0 0
        %1730 = vmatprep.mubr.bf16.mxu0 0
        %1731 = vmatmul.mubr.bf16.gmra.mrb[0].mxu0 %v1625
        %v1732 = vpop.f32.mrb[0].mxu0
        %v1733 = vadd.f32 %v1648, %v1732
        %v1734 = vpop.f32.mrb[0].mxu0
        %v1735 = vpop.f32.mrb[0].mxu0
        %v1736 = vadd.f32 %v1648, %v1735
        %v1737 = vpop.f32.mrb[0].mxu0
        %1738 = vmatprep.mubr.bf16.mxu0 0
        %1739 = vmatmul.mubr.bf16.gmra.mrb[0].mxu0 %v1626
        %v1740 = vpop.f32.mrb[0].mxu0
        %v1741 = vadd.f32 %v1648, %v1740
        %v1742 = vpop.f32.mrb[0].mxu0
        %v1743 = vpop.f32.mrb[0].mxu0
        %v1744 = vadd.f32 %v1648, %v1743
        %v1745 = vpop.f32.mrb[0].mxu0
        %1746 = vdwg.mxu0
        %v1747 = vpack.c.bf16 %v1736, %v1733
        %v1748 = vpack.c.bf16 %v1744, %v1741
        %v1749 = vmax.bf16 %v1747, 0
        %v1750 = vmax.bf16 %v1748, 0
        %v1751 = vld [vmem:[%s9] sm:$0xff]
        %v1752 = vld [vmem:[%s9 + $0x8] sm:$0xff]
        %v1753 = vld [vmem:[%s9 + $0x10] sm:$0xff]
        %v1754 = vld [vmem:[%s9 + $0x18] sm:$0xff]
        %v1755 = vld [vmem:[%s9 + $0x20] sm:$0xff]
        %v1756 = vld [vmem:[%s9 + $0x28] sm:$0xff]
        %v1757 = vld [vmem:[%s9 + $0x30] sm:$0xff]
        %v1758 = vld [vmem:[%s9 + $0x38] sm:$0xff]
        %v1759 = vld [vmem:[%s9 + $0x40] sm:$0xff]
        %v1760 = vld [vmem:[%s9 + $0x48] sm:$0xff]
        %v1761 = vld [vmem:[%s9 + $0x50] sm:$0xff]
        %v1762 = vld [vmem:[%s9 + $0x58] sm:$0xff]
        %v1763 = vld [vmem:[%s9 + $0x60] sm:$0xff]
        %v1764 = vld [vmem:[%s9 + $0x68] sm:$0xff]
        %v1765 = vld [vmem:[%s9 + $0x70] sm:$0xff]
        %v1766 = vld [vmem:[%s9 + $0x78] sm:$0xff]
        %v1767 = vld [vmem:[%s10] sm:$0x3]
        %v1769 = vlaneseq
        %v1770 = vshrl.u32 %v1769, 7
        %v1771 = vsub.s32 0, %v1770
        %v1772 = vrot.slane %v1767, %v1771
        %v1773 = vlaneseq
        %v1774 = vshrl.u32 %v1773, 7
        %v1775 = vsub.s32 1, %v1774
        %v1776 = vrot.slane %v1767, %v1775
        %v1795 = vunpack.c.l.b16 %v1751
        %v1796 = vunpack.c.h.b16 %v1751
        %v1797 = vunpack.c.l.b16 %v1752
        %v1798 = vunpack.c.h.b16 %v1752
        %v1799 = vunpack.c.l.b16 %v1753
        %v1800 = vunpack.c.h.b16 %v1753
        %v1801 = vunpack.c.l.b16 %v1754
        %v1802 = vunpack.c.h.b16 %v1754
        %v1803 = vunpack.c.l.b16 %v1755
        %v1804 = vunpack.c.h.b16 %v1755
        %v1805 = vunpack.c.l.b16 %v1756
        %v1806 = vunpack.c.h.b16 %v1756
        %v1807 = vunpack.c.l.b16 %v1757
        %v1808 = vunpack.c.h.b16 %v1757
        %v1809 = vunpack.c.l.b16 %v1758
        %v1810 = vunpack.c.h.b16 %v1758
        %v1811 = vunpack.c.l.b16 %v1759
        %v1812 = vunpack.c.h.b16 %v1759
        %v1813 = vunpack.c.l.b16 %v1760
        %v1814 = vunpack.c.h.b16 %v1760
        %v1815 = vunpack.c.l.b16 %v1761
        %v1816 = vunpack.c.h.b16 %v1761
        %v1817 = vunpack.c.l.b16 %v1762
        %v1818 = vunpack.c.h.b16 %v1762
        %v1819 = vunpack.c.l.b16 %v1763
        %v1820 = vunpack.c.h.b16 %v1763
        %v1821 = vunpack.c.l.b16 %v1764
        %v1822 = vunpack.c.h.b16 %v1764
        %v1823 = vunpack.c.l.b16 %v1765
        %v1824 = vunpack.c.h.b16 %v1765
        %v1825 = vunpack.c.l.b16 %v1766
        %v1826 = vunpack.c.h.b16 %v1766
        %v1827 = vpack.c.b16 %v1797, %v1795
        %v1828 = vpack.c.b16 %v1798, %v1796
        %v1829 = vpack.c.b16 %v1801, %v1799
        %v1830 = vpack.c.b16 %v1802, %v1800
        %v1831 = vpack.c.b16 %v1805, %v1803
        %v1832 = vpack.c.b16 %v1806, %v1804
        %v1833 = vpack.c.b16 %v1809, %v1807
        %v1834 = vpack.c.b16 %v1810, %v1808
        %v1835 = vpack.c.b16 %v1813, %v1811
        %v1836 = vpack.c.b16 %v1814, %v1812
        %v1837 = vpack.c.b16 %v1817, %v1815
        %v1838 = vpack.c.b16 %v1818, %v1816
        %v1839 = vpack.c.b16 %v1821, %v1819
        %v1840 = vpack.c.b16 %v1822, %v1820
        %v1841 = vpack.c.b16 %v1825, %v1823
        %v1842 = vpack.c.b16 %v1826, %v1824
        %1859 = vmatprep.subr.bf16.mxu0 %v1828
        %1860 = vmatpush1.bf16.msra.mxu0 %v1827
        %1861 = vmatprep.subr.bf16.mxu0 %v1830
        %1862 = vmatpush1.bf16.msra.mxu0 %v1829
        %1863 = vmatprep.subr.bf16.mxu0 %v1832
        %1864 = vmatpush1.bf16.msra.mxu0 %v1831
        %1865 = vmatprep.subr.bf16.mxu0 %v1834
        %1866 = vmatpush1.bf16.msra.mxu0 %v1833
        %1867 = vmatprep.subr.bf16.mxu0 %v1836
        %1868 = vmatpush1.bf16.msra.mxu0 %v1835
        %1869 = vmatprep.subr.bf16.mxu0 %v1838
        %1870 = vmatpush1.bf16.msra.mxu0 %v1837
        %1871 = vmatprep.subr.bf16.mxu0 %v1840
        %1872 = vmatpush1.bf16.msra.mxu0 %v1839
        %1873 = vmatprep.subr.bf16.mxu0 %v1842
        %1874 = vmatpush1.bf16.msra.mxu0 %v1841
        %1875 = vmatprep.subr.bf16.mxu0 0
        %1876 = vmatpush1.bf16.msra.mxu0 0
        %1877 = vmatprep.subr.bf16.mxu0 0
        %1878 = vmatpush1.bf16.msra.mxu0 0
        %1879 = vmatprep.subr.bf16.mxu0 0
        %1880 = vmatpush1.bf16.msra.mxu0 0
        %1881 = vmatprep.subr.bf16.mxu0 0
        %1882 = vmatpush1.bf16.msra.mxu0 0
        %1883 = vmatprep.subr.bf16.mxu0 0
        %1884 = vmatpush1.bf16.msra.mxu0 0
        %1885 = vmatprep.subr.bf16.mxu0 0
        %1886 = vmatpush1.bf16.msra.mxu0 0
        %1887 = vmatprep.subr.bf16.mxu0 0
        %1888 = vmatpush1.bf16.msra.mxu0 0
        %1889 = vmatprep.subr.bf16.mxu0 0
        %1890 = vmatpush1.bf16.msra.mxu0 0
        %1891 = vmatprep.mubr.bf16.mxu0 0
        %1892 = vmatmul.mubr.bf16.gmra.mrb[0].mxu0 %v1749
        %v1893 = vpop.f32.mrb[0].mxu0
        %v1894 = vadd.f32 %v1772, %v1893
        %v1895 = vpop.f32.mrb[0].mxu0
        %v1896 = vadd.f32 %v1776, %v1895
        %v1897 = vpop.f32.mrb[0].mxu0
        %v1898 = vadd.f32 %v1772, %v1897
        %v1899 = vpop.f32.mrb[0].mxu0
        %v1900 = vadd.f32 %v1776, %v1899
        %1901 = vmatprep.mubr.bf16.mxu0 0
        %1902 = vmatmul.mubr.bf16.gmra.mrb[0].mxu0 %v1750
        %v1903 = vpop.f32.mrb[0].mxu0
        %v1904 = vadd.f32 %v1772, %v1903
        %v1905 = vpop.f32.mrb[0].mxu0
        %v1906 = vadd.f32 %v1776, %v1905
        %v1907 = vpop.f32.mrb[0].mxu0
        %v1908 = vadd.f32 %v1772, %v1907
        %v1909 = vpop.f32.mrb[0].mxu0
        %v1910 = vadd.f32 %v1776, %v1909
        %1911 = vdwg.mxu0
        %v1912 = vpack.c.bf16 %v1898, %v1894
        %v1913 = vpack.c.bf16 %v1900, %v1896
        %v1914 = vpack.c.bf16 %v1908, %v1904
        %v1915 = vpack.c.bf16 %v1910, %v1906
        %v1916 = vmax.bf16 %v1912, 0
        %v1917 = vmax.bf16 %v1913, 0
        %v1918 = vmax.bf16 %v1914, 0
        %v1919 = vmax.bf16 %v1915, 0
        %v1920 = vld [vmem:[%s11] sm:$0xff]
        %v1921 = vld [vmem:[%s11 + $0x8] sm:$0xff]
        %v1922 = vld [vmem:[%s11 + $0x10] sm:$0xff]
        %v1923 = vld [vmem:[%s11 + $0x18] sm:$0xf]
        %v1924 = vld [vmem:[%s11 + $0x1c] sm:$0xff]
        %v1925 = vld [vmem:[%s11 + $0x24] sm:$0xff]
        %v1926 = vld [vmem:[%s11 + $0x2c] sm:$0xff]
        %v1927 = vld [vmem:[%s11 + $0x34] sm:$0xf]
        %v1928 = vld [vmem:[%s11 + $0x38] sm:$0xff]
        %v1929 = vld [vmem:[%s11 + $0x40] sm:$0xff]
        %v1930 = vld [vmem:[%s11 + $0x48] sm:$0xff]
        %v1931 = vld [vmem:[%s11 + $0x50] sm:$0xf]
        %v1932 = vld [vmem:[%s11 + $0x54] sm:$0xff]
        %v1933 = vld [vmem:[%s11 + $0x5c] sm:$0xff]
        %v1934 = vld [vmem:[%s11 + $0x64] sm:$0xff]
        %v1935 = vld [vmem:[%s11 + $0x6c] sm:$0xf]
        %v1936 = vld [vmem:[%s11 + $0x70] sm:$0xff]
        %v1937 = vld [vmem:[%s11 + $0x78] sm:$0xff]
        %v1938 = vld [vmem:[%s11 + $0x80] sm:$0xff]
        %v1939 = vld [vmem:[%s11 + $0x88] sm:$0xf]
        %v1940 = vld [vmem:[%s11 + $0x8c] sm:$0xff]
        %v1941 = vld [vmem:[%s11 + $0x94] sm:$0xff]
        %v1942 = vld [vmem:[%s11 + $0x9c] sm:$0xff]
        %v1943 = vld [vmem:[%s11 + $0xa4] sm:$0xf]
        %v1944 = vld [vmem:[%s11 + $0xa8] sm:$0xff]
        %v1945 = vld [vmem:[%s11 + $0xb0] sm:$0xff]
        %v1946 = vld [vmem:[%s11 + $0xb8] sm:$0xff]
        %v1947 = vld [vmem:[%s11 + $0xc0] sm:$0xf]
        %v1948 = vld [vmem:[%s11 + $0xc4] sm:$0xff]
        %v1949 = vld [vmem:[%s11 + $0xcc] sm:$0xff]
        %v1950 = vld [vmem:[%s11 + $0xd4] sm:$0xff]
        %v1951 = vld [vmem:[%s11 + $0xdc] sm:$0xf]
        %v1952 = vld [vmem:[%s11 + $0xe0] sm:$0xff]
        %v1953 = vld [vmem:[%s11 + $0xe8] sm:$0xff]
        %v1954 = vld [vmem:[%s11 + $0xf0] sm:$0xff]
        %v1955 = vld [vmem:[%s11 + $0xf8] sm:$0xf]
        %v1956 = vld [vmem:[%s11 + $0xfc] sm:$0xff]
        %v1957 = vld [vmem:[%s11 + $0x104] sm:$0xff]
        %v1958 = vld [vmem:[%s11 + $0x10c] sm:$0xff]
        %v1959 = vld [vmem:[%s11 + $0x114] sm:$0xf]
        %v1960 = vld [vmem:[%s11 + $0x118] sm:$0xff]
        %v1961 = vld [vmem:[%s11 + $0x120] sm:$0xff]
        %v1962 = vld [vmem:[%s11 + $0x128] sm:$0xff]
        %v1963 = vld [vmem:[%s11 + $0x130] sm:$0xf]
        %v1964 = vld [vmem:[%s11 + $0x134] sm:$0xff]
        %v1965 = vld [vmem:[%s11 + $0x13c] sm:$0xff]
        %v1966 = vld [vmem:[%s11 + $0x144] sm:$0xff]
        %v1967 = vld [vmem:[%s11 + $0x14c] sm:$0xf]
        %v1968 = vld [vmem:[%s11 + $0x150] sm:$0xff]
        %v1969 = vld [vmem:[%s11 + $0x158] sm:$0xff]
        %v1970 = vld [vmem:[%s11 + $0x160] sm:$0xff]
        %v1971 = vld [vmem:[%s11 + $0x168] sm:$0xf]
        %v1972 = vld [vmem:[%s11 + $0x16c] sm:$0xff]
        %v1973 = vld [vmem:[%s11 + $0x174] sm:$0xff]
        %v1974 = vld [vmem:[%s11 + $0x17c] sm:$0xff]
        %v1975 = vld [vmem:[%s11 + $0x184] sm:$0xf]
        %v1976 = vld [vmem:[%s11 + $0x188] sm:$0xff]
        %v1977 = vld [vmem:[%s11 + $0x190] sm:$0xff]
        %v1978 = vld [vmem:[%s11 + $0x198] sm:$0xff]
        %v1979 = vld [vmem:[%s11 + $0x1a0] sm:$0xf]
        %v1980 = vld [vmem:[%s11 + $0x1a4] sm:$0xff]
        %v1981 = vld [vmem:[%s11 + $0x1ac] sm:$0xff]
        %v1982 = vld [vmem:[%s11 + $0x1b4] sm:$0xff]
        %v1983 = vld [vmem:[%s11 + $0x1bc] sm:$0xf]
        %v1984 = vld [vmem:[%s11 + $0x1c0] sm:$0xff]
        %v1985 = vld [vmem:[%s11 + $0x1c8] sm:$0xff]
        %v1986 = vld [vmem:[%s11 + $0x1d0] sm:$0xff]
        %v1987 = vld [vmem:[%s11 + $0x1d8] sm:$0xf]
        %v1988 = vld [vmem:[%s11 + $0x1dc] sm:$0xff]
        %v1989 = vld [vmem:[%s11 + $0x1e4] sm:$0xff]
        %v1990 = vld [vmem:[%s11 + $0x1ec] sm:$0xff]
        %v1991 = vld [vmem:[%s11 + $0x1f4] sm:$0xf]
        %v1992 = vld [vmem:[%s11 + $0x1f8] sm:$0xff]
        %v1993 = vld [vmem:[%s11 + $0x200] sm:$0xff]
        %v1994 = vld [vmem:[%s11 + $0x208] sm:$0xff]
        %v1995 = vld [vmem:[%s11 + $0x210] sm:$0xf]
        %v1996 = vld [vmem:[%s11 + $0x214] sm:$0xff]
        %v1997 = vld [vmem:[%s11 + $0x21c] sm:$0xff]
        %v1998 = vld [vmem:[%s11 + $0x224] sm:$0xff]
        %v1999 = vld [vmem:[%s11 + $0x22c] sm:$0xf]
        %v2000 = vld [vmem:[%s11 + $0x230] sm:$0xff]
        %v2001 = vld [vmem:[%s11 + $0x238] sm:$0xff]
        %v2002 = vld [vmem:[%s11 + $0x240] sm:$0xff]
        %v2003 = vld [vmem:[%s11 + $0x248] sm:$0xf]
        %v2004 = vld [vmem:[%s11 + $0x24c] sm:$0xff]
        %v2005 = vld [vmem:[%s11 + $0x254] sm:$0xff]
        %v2006 = vld [vmem:[%s11 + $0x25c] sm:$0xff]
        %v2007 = vld [vmem:[%s11 + $0x264] sm:$0xf]
        %v2008 = vld [vmem:[%s11 + $0x268] sm:$0xff]
        %v2009 = vld [vmem:[%s11 + $0x270] sm:$0xff]
        %v2010 = vld [vmem:[%s11 + $0x278] sm:$0xff]
        %v2011 = vld [vmem:[%s11 + $0x280] sm:$0xf]
        %v2012 = vld [vmem:[%s11 + $0x284] sm:$0xff]
        %v2013 = vld [vmem:[%s11 + $0x28c] sm:$0xff]
        %v2014 = vld [vmem:[%s11 + $0x294] sm:$0xff]
        %v2015 = vld [vmem:[%s11 + $0x29c] sm:$0xf]
        %v2016 = vld [vmem:[%s11 + $0x2a0] sm:$0xff]
        %v2017 = vld [vmem:[%s11 + $0x2a8] sm:$0xff]
        %v2018 = vld [vmem:[%s11 + $0x2b0] sm:$0xff]
        %v2019 = vld [vmem:[%s11 + $0x2b8] sm:$0xf]
        %v2020 = vld [vmem:[%s11 + $0x2bc] sm:$0xff]
        %v2021 = vld [vmem:[%s11 + $0x2c4] sm:$0xff]
        %v2022 = vld [vmem:[%s11 + $0x2cc] sm:$0xff]
        %v2023 = vld [vmem:[%s11 + $0x2d4] sm:$0xf]
        %v2024 = vld [vmem:[%s11 + $0x2d8] sm:$0xff]
        %v2025 = vld [vmem:[%s11 + $0x2e0] sm:$0xff]
        %v2026 = vld [vmem:[%s11 + $0x2e8] sm:$0xff]
        %v2027 = vld [vmem:[%s11 + $0x2f0] sm:$0xf]
        %v2028 = vld [vmem:[%s11 + $0x2f4] sm:$0xff]
        %v2029 = vld [vmem:[%s11 + $0x2fc] sm:$0xff]
        %v2030 = vld [vmem:[%s11 + $0x304] sm:$0xff]
        %v2031 = vld [vmem:[%s11 + $0x30c] sm:$0xf]
        %v2032 = vld [vmem:[%s11 + $0x310] sm:$0xff]
        %v2033 = vld [vmem:[%s11 + $0x318] sm:$0xff]
        %v2034 = vld [vmem:[%s11 + $0x320] sm:$0xff]
        %v2035 = vld [vmem:[%s11 + $0x328] sm:$0xf]
        %v2036 = vld [vmem:[%s11 + $0x32c] sm:$0xff]
        %v2037 = vld [vmem:[%s11 + $0x334] sm:$0xff]
        %v2038 = vld [vmem:[%s11 + $0x33c] sm:$0xff]
        %v2039 = vld [vmem:[%s11 + $0x344] sm:$0xf]
        %v2040 = vld [vmem:[%s11 + $0x348] sm:$0xff]
        %v2041 = vld [vmem:[%s11 + $0x350] sm:$0xff]
        %v2042 = vld [vmem:[%s11 + $0x358] sm:$0xff]
        %v2043 = vld [vmem:[%s11 + $0x360] sm:$0xf]
        %v2044 = vld [vmem:[%s11 + $0x364] sm:$0xff]
        %v2045 = vld [vmem:[%s11 + $0x36c] sm:$0xff]
        %v2046 = vld [vmem:[%s11 + $0x374] sm:$0xff]
        %v2047 = vld [vmem:[%s11 + $0x37c] sm:$0xf]
        %v2048 = vld [vmem:[%s12] sm:$0x7f]
        %v2050 = vlaneseq
        %v2051 = vshrl.u32 %v2050, 7
        %v2052 = vsub.s32 0, %v2051
        %v2053 = vrot.slane %v2048, %v2052
        %v2054 = vlaneseq
        %v2055 = vshrl.u32 %v2054, 7
        %v2056 = vsub.s32 1, %v2055
        %v2057 = vrot.slane %v2048, %v2056
        %v2058 = vlaneseq
        %v2059 = vshrl.u32 %v2058, 7
        %v2060 = vsub.s32 2, %v2059
        %v2061 = vrot.slane %v2048, %v2060
        %v2062 = vlaneseq
        %v2063 = vshrl.u32 %v2062, 7
        %v2064 = vsub.s32 3, %v2063
        %v2065 = vrot.slane %v2048, %v2064
        %v2066 = vlaneseq
        %v2067 = vshrl.u32 %v2066, 7
        %v2068 = vsub.s32 4, %v2067
        %v2069 = vrot.slane %v2048, %v2068
        %v2070 = vlaneseq
        %v2071 = vshrl.u32 %v2070, 7
        %v2072 = vsub.s32 5, %v2071
        %v2073 = vrot.slane %v2048, %v2072
        %v2074 = vlaneseq
        %v2075 = vshrl.u32 %v2074, 7
        %v2076 = vsub.s32 6, %v2075
        %v2077 = vrot.slane %v2048, %v2076
        %v2213 = vunpack.c.l.b16 %v1920
        %v2214 = vunpack.c.h.b16 %v1920
        %v2215 = vunpack.c.l.b16 %v1921
        %v2216 = vunpack.c.h.b16 %v1921
        %v2217 = vunpack.c.l.b16 %v1922
        %v2218 = vunpack.c.h.b16 %v1922
        %v2219 = vunpack.c.l.b16 %v1923
        %v2220 = vunpack.c.l.b16 %v1924
        %v2221 = vunpack.c.h.b16 %v1924
        %v2222 = vunpack.c.l.b16 %v1925
        %v2223 = vunpack.c.h.b16 %v1925
        %v2224 = vunpack.c.l.b16 %v1926
        %v2225 = vunpack.c.h.b16 %v1926
        %v2226 = vunpack.c.l.b16 %v1927
        %v2227 = vunpack.c.l.b16 %v1928
        %v2228 = vunpack.c.h.b16 %v1928
        %v2229 = vunpack.c.l.b16 %v1929
        %v2230 = vunpack.c.h.b16 %v1929
        %v2231 = vunpack.c.l.b16 %v1930
        %v2232 = vunpack.c.h.b16 %v1930
        %v2233 = vunpack.c.l.b16 %v1931
        %v2234 = vunpack.c.l.b16 %v1932
        %v2235 = vunpack.c.h.b16 %v1932
        %v2236 = vunpack.c.l.b16 %v1933
        %v2237 = vunpack.c.h.b16 %v1933
        %v2238 = vunpack.c.l.b16 %v1934
        %v2239 = vunpack.c.h.b16 %v1934
        %v2240 = vunpack.c.l.b16 %v1935
        %v2241 = vunpack.c.l.b16 %v1936
        %v2242 = vunpack.c.h.b16 %v1936
        %v2243 = vunpack.c.l.b16 %v1937
        %v2244 = vunpack.c.h.b16 %v1937
        %v2245 = vunpack.c.l.b16 %v1938
        %v2246 = vunpack.c.h.b16 %v1938
        %v2247 = vunpack.c.l.b16 %v1939
        %v2248 = vunpack.c.l.b16 %v1940
        %v2249 = vunpack.c.h.b16 %v1940
        %v2250 = vunpack.c.l.b16 %v1941
        %v2251 = vunpack.c.h.b16 %v1941
        %v2252 = vunpack.c.l.b16 %v1942
        %v2253 = vunpack.c.h.b16 %v1942
        %v2254 = vunpack.c.l.b16 %v1943
        %v2255 = vunpack.c.l.b16 %v1944
        %v2256 = vunpack.c.h.b16 %v1944
        %v2257 = vunpack.c.l.b16 %v1945
        %v2258 = vunpack.c.h.b16 %v1945
        %v2259 = vunpack.c.l.b16 %v1946
        %v2260 = vunpack.c.h.b16 %v1946
        %v2261 = vunpack.c.l.b16 %v1947
        %v2262 = vunpack.c.l.b16 %v1948
        %v2263 = vunpack.c.h.b16 %v1948
        %v2264 = vunpack.c.l.b16 %v1949
        %v2265 = vunpack.c.h.b16 %v1949
        %v2266 = vunpack.c.l.b16 %v1950
        %v2267 = vunpack.c.h.b16 %v1950
        %v2268 = vunpack.c.l.b16 %v1951
        %v2269 = vunpack.c.l.b16 %v1952
        %v2270 = vunpack.c.h.b16 %v1952
        %v2271 = vunpack.c.l.b16 %v1953
        %v2272 = vunpack.c.h.b16 %v1953
        %v2273 = vunpack.c.l.b16 %v1954
        %v2274 = vunpack.c.h.b16 %v1954
        %v2275 = vunpack.c.l.b16 %v1955
        %v2276 = vunpack.c.l.b16 %v1956
        %v2277 = vunpack.c.h.b16 %v1956
        %v2278 = vunpack.c.l.b16 %v1957
        %v2279 = vunpack.c.h.b16 %v1957
        %v2280 = vunpack.c.l.b16 %v1958
        %v2281 = vunpack.c.h.b16 %v1958
        %v2282 = vunpack.c.l.b16 %v1959
        %v2283 = vunpack.c.l.b16 %v1960
        %v2284 = vunpack.c.h.b16 %v1960
        %v2285 = vunpack.c.l.b16 %v1961
        %v2286 = vunpack.c.h.b16 %v1961
        %v2287 = vunpack.c.l.b16 %v1962
        %v2288 = vunpack.c.h.b16 %v1962
        %v2289 = vunpack.c.l.b16 %v1963
        %v2290 = vunpack.c.l.b16 %v1964
        %v2291 = vunpack.c.h.b16 %v1964
        %v2292 = vunpack.c.l.b16 %v1965
        %v2293 = vunpack.c.h.b16 %v1965
        %v2294 = vunpack.c.l.b16 %v1966
        %v2295 = vunpack.c.h.b16 %v1966
        %v2296 = vunpack.c.l.b16 %v1967
        %v2297 = vunpack.c.l.b16 %v1968
        %v2298 = vunpack.c.h.b16 %v1968
        %v2299 = vunpack.c.l.b16 %v1969
        %v2300 = vunpack.c.h.b16 %v1969
        %v2301 = vunpack.c.l.b16 %v1970
        %v2302 = vunpack.c.h.b16 %v1970
        %v2303 = vunpack.c.l.b16 %v1971
        %v2304 = vunpack.c.l.b16 %v1972
        %v2305 = vunpack.c.h.b16 %v1972
        %v2306 = vunpack.c.l.b16 %v1973
        %v2307 = vunpack.c.h.b16 %v1973
        %v2308 = vunpack.c.l.b16 %v1974
        %v2309 = vunpack.c.h.b16 %v1974
        %v2310 = vunpack.c.l.b16 %v1975
        %v2311 = vunpack.c.l.b16 %v1976
        %v2312 = vunpack.c.h.b16 %v1976
        %v2313 = vunpack.c.l.b16 %v1977
        %v2314 = vunpack.c.h.b16 %v1977
        %v2315 = vunpack.c.l.b16 %v1978
        %v2316 = vunpack.c.h.b16 %v1978
        %v2317 = vunpack.c.l.b16 %v1979
        %v2318 = vunpack.c.l.b16 %v1980
        %v2319 = vunpack.c.h.b16 %v1980
        %v2320 = vunpack.c.l.b16 %v1981
        %v2321 = vunpack.c.h.b16 %v1981
        %v2322 = vunpack.c.l.b16 %v1982
        %v2323 = vunpack.c.h.b16 %v1982
        %v2324 = vunpack.c.l.b16 %v1983
        %v2325 = vunpack.c.l.b16 %v1984
        %v2326 = vunpack.c.h.b16 %v1984
        %v2327 = vunpack.c.l.b16 %v1985
        %v2328 = vunpack.c.h.b16 %v1985
        %v2329 = vunpack.c.l.b16 %v1986
        %v2330 = vunpack.c.h.b16 %v1986
        %v2331 = vunpack.c.l.b16 %v1987
        %v2332 = vunpack.c.l.b16 %v1988
        %v2333 = vunpack.c.h.b16 %v1988
        %v2334 = vunpack.c.l.b16 %v1989
        %v2335 = vunpack.c.h.b16 %v1989
        %v2336 = vunpack.c.l.b16 %v1990
        %v2337 = vunpack.c.h.b16 %v1990
        %v2338 = vunpack.c.l.b16 %v1991
        %v2339 = vunpack.c.l.b16 %v1992
        %v2340 = vunpack.c.h.b16 %v1992
        %v2341 = vunpack.c.l.b16 %v1993
        %v2342 = vunpack.c.h.b16 %v1993
        %v2343 = vunpack.c.l.b16 %v1994
        %v2344 = vunpack.c.h.b16 %v1994
        %v2345 = vunpack.c.l.b16 %v1995
        %v2346 = vunpack.c.l.b16 %v1996
        %v2347 = vunpack.c.h.b16 %v1996
        %v2348 = vunpack.c.l.b16 %v1997
        %v2349 = vunpack.c.h.b16 %v1997
        %v2350 = vunpack.c.l.b16 %v1998
        %v2351 = vunpack.c.h.b16 %v1998
        %v2352 = vunpack.c.l.b16 %v1999
        %v2353 = vunpack.c.l.b16 %v2000
        %v2354 = vunpack.c.h.b16 %v2000
        %v2355 = vunpack.c.l.b16 %v2001
        %v2356 = vunpack.c.h.b16 %v2001
        %v2357 = vunpack.c.l.b16 %v2002
        %v2358 = vunpack.c.h.b16 %v2002
        %v2359 = vunpack.c.l.b16 %v2003
        %v2360 = vunpack.c.l.b16 %v2004
        %v2361 = vunpack.c.h.b16 %v2004
        %v2362 = vunpack.c.l.b16 %v2005
        %v2363 = vunpack.c.h.b16 %v2005
        %v2364 = vunpack.c.l.b16 %v2006
        %v2365 = vunpack.c.h.b16 %v2006
        %v2366 = vunpack.c.l.b16 %v2007
        %v2367 = vunpack.c.l.b16 %v2008
        %v2368 = vunpack.c.h.b16 %v2008
        %v2369 = vunpack.c.l.b16 %v2009
        %v2370 = vunpack.c.h.b16 %v2009
        %v2371 = vunpack.c.l.b16 %v2010
        %v2372 = vunpack.c.h.b16 %v2010
        %v2373 = vunpack.c.l.b16 %v2011
        %v2374 = vunpack.c.l.b16 %v2012
        %v2375 = vunpack.c.h.b16 %v2012
        %v2376 = vunpack.c.l.b16 %v2013
        %v2377 = vunpack.c.h.b16 %v2013
        %v2378 = vunpack.c.l.b16 %v2014
        %v2379 = vunpack.c.h.b16 %v2014
        %v2380 = vunpack.c.l.b16 %v2015
        %v2381 = vunpack.c.l.b16 %v2016
        %v2382 = vunpack.c.h.b16 %v2016
        %v2383 = vunpack.c.l.b16 %v2017
        %v2384 = vunpack.c.h.b16 %v2017
        %v2385 = vunpack.c.l.b16 %v2018
        %v2386 = vunpack.c.h.b16 %v2018
        %v2387 = vunpack.c.l.b16 %v2019
        %v2388 = vunpack.c.l.b16 %v2020
        %v2389 = vunpack.c.h.b16 %v2020
        %v2390 = vunpack.c.l.b16 %v2021
        %v2391 = vunpack.c.h.b16 %v2021
        %v2392 = vunpack.c.l.b16 %v2022
        %v2393 = vunpack.c.h.b16 %v2022
        %v2394 = vunpack.c.l.b16 %v2023
        %v2395 = vunpack.c.l.b16 %v2024
        %v2396 = vunpack.c.h.b16 %v2024
        %v2397 = vunpack.c.l.b16 %v2025
        %v2398 = vunpack.c.h.b16 %v2025
        %v2399 = vunpack.c.l.b16 %v2026
        %v2400 = vunpack.c.h.b16 %v2026
        %v2401 = vunpack.c.l.b16 %v2027
        %v2402 = vunpack.c.l.b16 %v2028
        %v2403 = vunpack.c.h.b16 %v2028
        %v2404 = vunpack.c.l.b16 %v2029
        %v2405 = vunpack.c.h.b16 %v2029
        %v2406 = vunpack.c.l.b16 %v2030
        %v2407 = vunpack.c.h.b16 %v2030
        %v2408 = vunpack.c.l.b16 %v2031
        %v2409 = vunpack.c.l.b16 %v2032
        %v2410 = vunpack.c.h.b16 %v2032
        %v2411 = vunpack.c.l.b16 %v2033
        %v2412 = vunpack.c.h.b16 %v2033
        %v2413 = vunpack.c.l.b16 %v2034
        %v2414 = vunpack.c.h.b16 %v2034
        %v2415 = vunpack.c.l.b16 %v2035
        %v2416 = vunpack.c.l.b16 %v2036
        %v2417 = vunpack.c.h.b16 %v2036
        %v2418 = vunpack.c.l.b16 %v2037
        %v2419 = vunpack.c.h.b16 %v2037
        %v2420 = vunpack.c.l.b16 %v2038
        %v2421 = vunpack.c.h.b16 %v2038
        %v2422 = vunpack.c.l.b16 %v2039
        %v2423 = vunpack.c.l.b16 %v2040
        %v2424 = vunpack.c.h.b16 %v2040
        %v2425 = vunpack.c.l.b16 %v2041
        %v2426 = vunpack.c.h.b16 %v2041
        %v2427 = vunpack.c.l.b16 %v2042
        %v2428 = vunpack.c.h.b16 %v2042
        %v2429 = vunpack.c.l.b16 %v2043
        %v2430 = vunpack.c.l.b16 %v2044
        %v2431 = vunpack.c.h.b16 %v2044
        %v2432 = vunpack.c.l.b16 %v2045
        %v2433 = vunpack.c.h.b16 %v2045
        %v2434 = vunpack.c.l.b16 %v2046
        %v2435 = vunpack.c.h.b16 %v2046
        %v2436 = vunpack.c.l.b16 %v2047
        %v2437 = vpack.c.b16 %v2220, %v2213
        %v2438 = vpack.c.b16 %v2221, %v2214
        %v2439 = vpack.c.b16 %v2222, %v2215
        %v2440 = vpack.c.b16 %v2223, %v2216
        %v2441 = vpack.c.b16 %v2224, %v2217
        %v2442 = vpack.c.b16 %v2225, %v2218
        %v2443 = vpack.c.b16 %v2226, %v2219
        %v2444 = vpack.c.b16 %v2234, %v2227
        %v2445 = vpack.c.b16 %v2235, %v2228
        %v2446 = vpack.c.b16 %v2236, %v2229
        %v2447 = vpack.c.b16 %v2237, %v2230
        %v2448 = vpack.c.b16 %v2238, %v2231
        %v2449 = vpack.c.b16 %v2239, %v2232
        %v2450 = vpack.c.b16 %v2240, %v2233
        %v2451 = vpack.c.b16 %v2248, %v2241
        %v2452 = vpack.c.b16 %v2249, %v2242
        %v2453 = vpack.c.b16 %v2250, %v2243
        %v2454 = vpack.c.b16 %v2251, %v2244
        %v2455 = vpack.c.b16 %v2252, %v2245
        %v2456 = vpack.c.b16 %v2253, %v2246
        %v2457 = vpack.c.b16 %v2254, %v2247
        %v2458 = vpack.c.b16 %v2262, %v2255
        %v2459 = vpack.c.b16 %v2263, %v2256
        %v2460 = vpack.c.b16 %v2264, %v2257
        %v2461 = vpack.c.b16 %v2265, %v2258
        %v2462 = vpack.c.b16 %v2266, %v2259
        %v2463 = vpack.c.b16 %v2267, %v2260
        %v2464 = vpack.c.b16 %v2268, %v2261
        %v2465 = vpack.c.b16 %v2276, %v2269
        %v2466 = vpack.c.b16 %v2277, %v2270
        %v2467 = vpack.c.b16 %v2278, %v2271
        %v2468 = vpack.c.b16 %v2279, %v2272
        %v2469 = vpack.c.b16 %v2280, %v2273
        %v2470 = vpack.c.b16 %v2281, %v2274
        %v2471 = vpack.c.b16 %v2282, %v2275
        %v2472 = vpack.c.b16 %v2290, %v2283
        %v2473 = vpack.c.b16 %v2291, %v2284
        %v2474 = vpack.c.b16 %v2292, %v2285
        %v2475 = vpack.c.b16 %v2293, %v2286
        %v2476 = vpack.c.b16 %v2294, %v2287
        %v2477 = vpack.c.b16 %v2295, %v2288
        %v2478 = vpack.c.b16 %v2296, %v2289
        %v2479 = vpack.c.b16 %v2304, %v2297
        %v2480 = vpack.c.b16 %v2305, %v2298
        %v2481 = vpack.c.b16 %v2306, %v2299
        %v2482 = vpack.c.b16 %v2307, %v2300
        %v2483 = vpack.c.b16 %v2308, %v2301
        %v2484 = vpack.c.b16 %v2309, %v2302
        %v2485 = vpack.c.b16 %v2310, %v2303
        %v2486 = vpack.c.b16 %v2318, %v2311
        %v2487 = vpack.c.b16 %v2319, %v2312
        %v2488 = vpack.c.b16 %v2320, %v2313
        %v2489 = vpack.c.b16 %v2321, %v2314
        %v2490 = vpack.c.b16 %v2322, %v2315
        %v2491 = vpack.c.b16 %v2323, %v2316
        %v2492 = vpack.c.b16 %v2324, %v2317
        %v2493 = vpack.c.b16 %v2332, %v2325
        %v2494 = vpack.c.b16 %v2333, %v2326
        %v2495 = vpack.c.b16 %v2334, %v2327
        %v2496 = vpack.c.b16 %v2335, %v2328
        %v2497 = vpack.c.b16 %v2336, %v2329
        %v2498 = vpack.c.b16 %v2337, %v2330
        %v2499 = vpack.c.b16 %v2338, %v2331
        %v2500 = vpack.c.b16 %v2346, %v2339
        %v2501 = vpack.c.b16 %v2347, %v2340
        %v2502 = vpack.c.b16 %v2348, %v2341
        %v2503 = vpack.c.b16 %v2349, %v2342
        %v2504 = vpack.c.b16 %v2350, %v2343
        %v2505 = vpack.c.b16 %v2351, %v2344
        %v2506 = vpack.c.b16 %v2352, %v2345
        %v2507 = vpack.c.b16 %v2360, %v2353
        %v2508 = vpack.c.b16 %v2361, %v2354
        %v2509 = vpack.c.b16 %v2362, %v2355
        %v2510 = vpack.c.b16 %v2363, %v2356
        %v2511 = vpack.c.b16 %v2364, %v2357
        %v2512 = vpack.c.b16 %v2365, %v2358
        %v2513 = vpack.c.b16 %v2366, %v2359
        %v2514 = vpack.c.b16 %v2374, %v2367
        %v2515 = vpack.c.b16 %v2375, %v2368
        %v2516 = vpack.c.b16 %v2376, %v2369
        %v2517 = vpack.c.b16 %v2377, %v2370
        %v2518 = vpack.c.b16 %v2378, %v2371
        %v2519 = vpack.c.b16 %v2379, %v2372
        %v2520 = vpack.c.b16 %v2380, %v2373
        %v2521 = vpack.c.b16 %v2388, %v2381
        %v2522 = vpack.c.b16 %v2389, %v2382
        %v2523 = vpack.c.b16 %v2390, %v2383
        %v2524 = vpack.c.b16 %v2391, %v2384
        %v2525 = vpack.c.b16 %v2392, %v2385
        %v2526 = vpack.c.b16 %v2393, %v2386
        %v2527 = vpack.c.b16 %v2394, %v2387
        %v2528 = vpack.c.b16 %v2402, %v2395
        %v2529 = vpack.c.b16 %v2403, %v2396
        %v2530 = vpack.c.b16 %v2404, %v2397
        %v2531 = vpack.c.b16 %v2405, %v2398
        %v2532 = vpack.c.b16 %v2406, %v2399
        %v2533 = vpack.c.b16 %v2407, %v2400
        %v2534 = vpack.c.b16 %v2408, %v2401
        %v2535 = vpack.c.b16 %v2416, %v2409
        %v2536 = vpack.c.b16 %v2417, %v2410
        %v2537 = vpack.c.b16 %v2418, %v2411
        %v2538 = vpack.c.b16 %v2419, %v2412
        %v2539 = vpack.c.b16 %v2420, %v2413
        %v2540 = vpack.c.b16 %v2421, %v2414
        %v2541 = vpack.c.b16 %v2422, %v2415
        %v2542 = vpack.c.b16 %v2430, %v2423
        %v2543 = vpack.c.b16 %v2431, %v2424
        %v2544 = vpack.c.b16 %v2432, %v2425
        %v2545 = vpack.c.b16 %v2433, %v2426
        %v2546 = vpack.c.b16 %v2434, %v2427
        %v2547 = vpack.c.b16 %v2435, %v2428
        %v2548 = vpack.c.b16 %v2436, %v2429
        %2661 = vmatprep.subr.bf16.mxu0 %v2438
        %2662 = vmatpush1.bf16.msra.mxu0 %v2437
        %2663 = vmatprep.subr.bf16.mxu0 %v2445
        %2664 = vmatpush1.bf16.msra.mxu0 %v2444
        %2665 = vmatprep.subr.bf16.mxu0 %v2452
        %2666 = vmatpush1.bf16.msra.mxu0 %v2451
        %2667 = vmatprep.subr.bf16.mxu0 %v2459
        %2668 = vmatpush1.bf16.msra.mxu0 %v2458
        %2669 = vmatprep.subr.bf16.mxu0 %v2466
        %2670 = vmatpush1.bf16.msra.mxu0 %v2465
        %2671 = vmatprep.subr.bf16.mxu0 %v2473
        %2672 = vmatpush1.bf16.msra.mxu0 %v2472
        %2673 = vmatprep.subr.bf16.mxu0 %v2480
        %2674 = vmatpush1.bf16.msra.mxu0 %v2479
        %2675 = vmatprep.subr.bf16.mxu0 %v2487
        %2676 = vmatpush1.bf16.msra.mxu0 %v2486
        %2677 = vmatprep.subr.bf16.mxu0 %v2494
        %2678 = vmatpush1.bf16.msra.mxu0 %v2493
        %2679 = vmatprep.subr.bf16.mxu0 %v2501
        %2680 = vmatpush1.bf16.msra.mxu0 %v2500
        %2681 = vmatprep.subr.bf16.mxu0 %v2508
        %2682 = vmatpush1.bf16.msra.mxu0 %v2507
        %2683 = vmatprep.subr.bf16.mxu0 %v2515
        %2684 = vmatpush1.bf16.msra.mxu0 %v2514
        %2685 = vmatprep.subr.bf16.mxu0 %v2522
        %2686 = vmatpush1.bf16.msra.mxu0 %v2521
        %2687 = vmatprep.subr.bf16.mxu0 %v2529
        %2688 = vmatpush1.bf16.msra.mxu0 %v2528
        %2689 = vmatprep.subr.bf16.mxu0 %v2536
        %2690 = vmatpush1.bf16.msra.mxu0 %v2535
        %2691 = vmatprep.subr.bf16.mxu0 %v2543
        %2692 = vmatpush1.bf16.msra.mxu0 %v2542
        %2693 = vmatprep.mubr.bf16.mxu0 %v1917
        %2694 = vmatmul.mubr.bf16.gmra.mrb[0].mxu0 %v1916
        %v2695 = vpop.f32.mrb[0].mxu0
        %v2696 = vadd.f32 %v2053, %v2695
        %v2697 = vpop.f32.mrb[0].mxu0
        %v2698 = vadd.f32 %v2057, %v2697
        %v2699 = vpop.f32.mrb[0].mxu0
        %v2700 = vadd.f32 %v2053, %v2699
        %v2701 = vpop.f32.mrb[0].mxu0
        %v2702 = vadd.f32 %v2057, %v2701
        %2703 = vmatprep.mubr.bf16.mxu0 %v1919
        %2704 = vmatmul.mubr.bf16.gmra.mrb[0].mxu0 %v1918
        %v2705 = vpop.f32.mrb[0].mxu0
        %v2706 = vadd.f32 %v2053, %v2705
        %v2707 = vpop.f32.mrb[0].mxu0
        %v2708 = vadd.f32 %v2057, %v2707
        %v2709 = vpop.f32.mrb[0].mxu0
        %v2710 = vadd.f32 %v2053, %v2709
        %v2711 = vpop.f32.mrb[0].mxu0
        %v2712 = vadd.f32 %v2057, %v2711
        %2713 = vdwg.mxu0
        %2714 = vmatprep.subr.bf16.mxu0 %v2440
        %2715 = vmatpush1.bf16.msra.mxu0 %v2439
        %2716 = vmatprep.subr.bf16.mxu0 %v2447
        %2717 = vmatpush1.bf16.msra.mxu0 %v2446
        %2718 = vmatprep.subr.bf16.mxu0 %v2454
        %2719 = vmatpush1.bf16.msra.mxu0 %v2453
        %2720 = vmatprep.subr.bf16.mxu0 %v2461
        %2721 = vmatpush1.bf16.msra.mxu0 %v2460
        %2722 = vmatprep.subr.bf16.mxu0 %v2468
        %2723 = vmatpush1.bf16.msra.mxu0 %v2467
        %2724 = vmatprep.subr.bf16.mxu0 %v2475
        %2725 = vmatpush1.bf16.msra.mxu0 %v2474
        %2726 = vmatprep.subr.bf16.mxu0 %v2482
        %2727 = vmatpush1.bf16.msra.mxu0 %v2481
        %2728 = vmatprep.subr.bf16.mxu0 %v2489
        %2729 = vmatpush1.bf16.msra.mxu0 %v2488
        %2730 = vmatprep.subr.bf16.mxu0 %v2496
        %2731 = vmatpush1.bf16.msra.mxu0 %v2495
        %2732 = vmatprep.subr.bf16.mxu0 %v2503
        %2733 = vmatpush1.bf16.msra.mxu0 %v2502
        %2734 = vmatprep.subr.bf16.mxu0 %v2510
        %2735 = vmatpush1.bf16.msra.mxu0 %v2509
        %2736 = vmatprep.subr.bf16.mxu0 %v2517
        %2737 = vmatpush1.bf16.msra.mxu0 %v2516
        %2738 = vmatprep.subr.bf16.mxu0 %v2524
        %2739 = vmatpush1.bf16.msra.mxu0 %v2523
        %2740 = vmatprep.subr.bf16.mxu0 %v2531
        %2741 = vmatpush1.bf16.msra.mxu0 %v2530
        %2742 = vmatprep.subr.bf16.mxu0 %v2538
        %2743 = vmatpush1.bf16.msra.mxu0 %v2537
        %2744 = vmatprep.subr.bf16.mxu0 %v2545
        %2745 = vmatpush1.bf16.msra.mxu0 %v2544
        %2746 = vmatprep.mubr.bf16.mxu0 %v1917
        %2747 = vmatmul.mubr.bf16.gmra.mrb[0].mxu0 %v1916
        %v2748 = vpop.f32.mrb[0].mxu0
        %v2749 = vadd.f32 %v2061, %v2748
        %v2750 = vpop.f32.mrb[0].mxu0
        %v2751 = vadd.f32 %v2065, %v2750
        %v2752 = vpop.f32.mrb[0].mxu0
        %v2753 = vadd.f32 %v2061, %v2752
        %v2754 = vpop.f32.mrb[0].mxu0
        %v2755 = vadd.f32 %v2065, %v2754
        %2756 = vmatprep.mubr.bf16.mxu0 %v1919
        %2757 = vmatmul.mubr.bf16.gmra.mrb[0].mxu0 %v1918
        %v2758 = vpop.f32.mrb[0].mxu0
        %v2759 = vadd.f32 %v2061, %v2758
        %v2760 = vpop.f32.mrb[0].mxu0
        %v2761 = vadd.f32 %v2065, %v2760
        %v2762 = vpop.f32.mrb[0].mxu0
        %v2763 = vadd.f32 %v2061, %v2762
        %v2764 = vpop.f32.mrb[0].mxu0
        %v2765 = vadd.f32 %v2065, %v2764
        %2766 = vdwg.mxu0
        %2767 = vmatprep.subr.bf16.mxu0 %v2442
        %2768 = vmatpush1.bf16.msra.mxu0 %v2441
        %2769 = vmatprep.subr.bf16.mxu0 %v2449
        %2770 = vmatpush1.bf16.msra.mxu0 %v2448
        %2771 = vmatprep.subr.bf16.mxu0 %v2456
        %2772 = vmatpush1.bf16.msra.mxu0 %v2455
        %2773 = vmatprep.subr.bf16.mxu0 %v2463
        %2774 = vmatpush1.bf16.msra.mxu0 %v2462
        %2775 = vmatprep.subr.bf16.mxu0 %v2470
        %2776 = vmatpush1.bf16.msra.mxu0 %v2469
        %2777 = vmatprep.subr.bf16.mxu0 %v2477
        %2778 = vmatpush1.bf16.msra.mxu0 %v2476
        %2779 = vmatprep.subr.bf16.mxu0 %v2484
        %2780 = vmatpush1.bf16.msra.mxu0 %v2483
        %2781 = vmatprep.subr.bf16.mxu0 %v2491
        %2782 = vmatpush1.bf16.msra.mxu0 %v2490
        %2783 = vmatprep.subr.bf16.mxu0 %v2498
        %2784 = vmatpush1.bf16.msra.mxu0 %v2497
        %2785 = vmatprep.subr.bf16.mxu0 %v2505
        %2786 = vmatpush1.bf16.msra.mxu0 %v2504
        %2787 = vmatprep.subr.bf16.mxu0 %v2512
        %2788 = vmatpush1.bf16.msra.mxu0 %v2511
        %2789 = vmatprep.subr.bf16.mxu0 %v2519
        %2790 = vmatpush1.bf16.msra.mxu0 %v2518
        %2791 = vmatprep.subr.bf16.mxu0 %v2526
        %2792 = vmatpush1.bf16.msra.mxu0 %v2525
        %2793 = vmatprep.subr.bf16.mxu0 %v2533
        %2794 = vmatpush1.bf16.msra.mxu0 %v2532
        %2795 = vmatprep.subr.bf16.mxu0 %v2540
        %2796 = vmatpush1.bf16.msra.mxu0 %v2539
        %2797 = vmatprep.subr.bf16.mxu0 %v2547
        %2798 = vmatpush1.bf16.msra.mxu0 %v2546
        %2799 = vmatprep.mubr.bf16.mxu0 %v1917
        %2800 = vmatmul.mubr.bf16.gmra.mrb[0].mxu0 %v1916
        %v2801 = vpop.f32.mrb[0].mxu0
        %v2802 = vadd.f32 %v2069, %v2801
        %v2803 = vpop.f32.mrb[0].mxu0
        %v2804 = vadd.f32 %v2073, %v2803
        %v2805 = vpop.f32.mrb[0].mxu0
        %v2806 = vadd.f32 %v2069, %v2805
        %v2807 = vpop.f32.mrb[0].mxu0
        %v2808 = vadd.f32 %v2073, %v2807
        %2809 = vmatprep.mubr.bf16.mxu0 %v1919
        %2810 = vmatmul.mubr.bf16.gmra.mrb[0].mxu0 %v1918
        %v2811 = vpop.f32.mrb[0].mxu0
        %v2812 = vadd.f32 %v2069, %v2811
        %v2813 = vpop.f32.mrb[0].mxu0
        %v2814 = vadd.f32 %v2073, %v2813
        %v2815 = vpop.f32.mrb[0].mxu0
        %v2816 = vadd.f32 %v2069, %v2815
        %v2817 = vpop.f32.mrb[0].mxu0
        %v2818 = vadd.f32 %v2073, %v2817
        %2819 = vdwg.mxu0
        %2820 = vmatprep.subr.bf16.mxu0 0
        %2821 = vmatpush1.bf16.msra.mxu0 %v2443
        %2822 = vmatprep.subr.bf16.mxu0 0
        %2823 = vmatpush1.bf16.msra.mxu0 %v2450
        %2824 = vmatprep.subr.bf16.mxu0 0
        %2825 = vmatpush1.bf16.msra.mxu0 %v2457
        %2826 = vmatprep.subr.bf16.mxu0 0
        %2827 = vmatpush1.bf16.msra.mxu0 %v2464
        %2828 = vmatprep.subr.bf16.mxu0 0
        %2829 = vmatpush1.bf16.msra.mxu0 %v2471
        %2830 = vmatprep.subr.bf16.mxu0 0
        %2831 = vmatpush1.bf16.msra.mxu0 %v2478
        %2832 = vmatprep.subr.bf16.mxu0 0
        %2833 = vmatpush1.bf16.msra.mxu0 %v2485
        %2834 = vmatprep.subr.bf16.mxu0 0
        %2835 = vmatpush1.bf16.msra.mxu0 %v2492
        %2836 = vmatprep.subr.bf16.mxu0 0
        %2837 = vmatpush1.bf16.msra.mxu0 %v2499
        %2838 = vmatprep.subr.bf16.mxu0 0
        %2839 = vmatpush1.bf16.msra.mxu0 %v2506
        %2840 = vmatprep.subr.bf16.mxu0 0
        %2841 = vmatpush1.bf16.msra.mxu0 %v2513
        %2842 = vmatprep.subr.bf16.mxu0 0
        %2843 = vmatpush1.bf16.msra.mxu0 %v2520
        %2844 = vmatprep.subr.bf16.mxu0 0
        %2845 = vmatpush1.bf16.msra.mxu0 %v2527
        %2846 = vmatprep.subr.bf16.mxu0 0
        %2847 = vmatpush1.bf16.msra.mxu0 %v2534
        %2848 = vmatprep.subr.bf16.mxu0 0
        %2849 = vmatpush1.bf16.msra.mxu0 %v2541
        %2850 = vmatprep.subr.bf16.mxu0 0
        %2851 = vmatpush1.bf16.msra.mxu0 %v2548
        %2852 = vmatprep.mubr.bf16.mxu0 %v1917
        %2853 = vmatmul.mubr.bf16.gmra.mrb[0].mxu0 %v1916
        %v2854 = vpop.f32.mrb[0].mxu0
        %v2855 = vadd.f32 %v2077, %v2854
        %v2856 = vpop.f32.mrb[0].mxu0
        %v2857 = vpop.f32.mrb[0].mxu0
        %v2858 = vadd.f32 %v2077, %v2857
        %v2859 = vpop.f32.mrb[0].mxu0
        %2860 = vmatprep.mubr.bf16.mxu0 %v1919
        %2861 = vmatmul.mubr.bf16.gmra.mrb[0].mxu0 %v1918
        %v2862 = vpop.f32.mrb[0].mxu0
        %v2863 = vadd.f32 %v2077, %v2862
        %v2864 = vpop.f32.mrb[0].mxu0
        %v2865 = vpop.f32.mrb[0].mxu0
        %v2866 = vadd.f32 %v2077, %v2865
        %v2867 = vpop.f32.mrb[0].mxu0
        %2868 = vdwg.mxu0
        %v2869 = vpack.c.bf16 %v2700, %v2696
        %v2870 = vpack.c.bf16 %v2702, %v2698
        %v2871 = vpack.c.bf16 %v2753, %v2749
        %v2872 = vpack.c.bf16 %v2755, %v2751
        %v2873 = vpack.c.bf16 %v2806, %v2802
        %v2874 = vpack.c.bf16 %v2808, %v2804
        %v2875 = vpack.c.bf16 %v2858, %v2855
        %v2876 = vpack.c.bf16 %v2710, %v2706
        %v2877 = vpack.c.bf16 %v2712, %v2708
        %v2878 = vpack.c.bf16 %v2763, %v2759
        %v2879 = vpack.c.bf16 %v2765, %v2761
        %v2880 = vpack.c.bf16 %v2816, %v2812
        %v2881 = vpack.c.bf16 %v2818, %v2814
        %v2882 = vpack.c.bf16 %v2866, %v2863
        %v2883 = vtanh.bf16.pop %v2869
        %v2884 = vtanh.bf16.pop %v2870
        %v2885 = vtanh.bf16.pop %v2871
        %v2886 = vtanh.bf16.pop %v2872
        %v2887 = vtanh.bf16.pop %v2873
        %v2888 = vtanh.bf16.pop %v2874
        %v2889 = vtanh.bf16.pop %v2875
        %v2890 = vtanh.bf16.pop %v2876
        %v2891 = vtanh.bf16.pop %v2877
        %v2892 = vtanh.bf16.pop %v2878
        %v2893 = vtanh.bf16.pop %v2879
        %v2894 = vtanh.bf16.pop %v2880
        %v2895 = vtanh.bf16.pop %v2881
        %v2896 = vtanh.bf16.pop %v2882
        %v2911 = vunpack.c.l.b16 %v2883
        %v2912 = vunpack.c.l.b16 %v2884
        %v2913 = vunpack.c.l.b16 %v2885
        %v2914 = vunpack.c.l.b16 %v2886
        %v2915 = vunpack.c.l.b16 %v2887
        %v2916 = vunpack.c.l.b16 %v2888
        %v2917 = vunpack.c.l.b16 %v2889
        %v2918 = vunpack.c.h.b16 %v2883
        %v2919 = vunpack.c.h.b16 %v2884
        %v2920 = vunpack.c.h.b16 %v2885
        %v2921 = vunpack.c.h.b16 %v2886
        %v2922 = vunpack.c.h.b16 %v2887
        %v2923 = vunpack.c.h.b16 %v2888
        %v2924 = vunpack.c.h.b16 %v2889
        %v2925 = vunpack.c.l.b16 %v2890
        %v2926 = vunpack.c.l.b16 %v2891
        %v2927 = vunpack.c.l.b16 %v2892
        %v2928 = vunpack.c.l.b16 %v2893
        %v2929 = vunpack.c.l.b16 %v2894
        %v2930 = vunpack.c.l.b16 %v2895
        %v2931 = vunpack.c.l.b16 %v2896
        %v2932 = vunpack.c.h.b16 %v2890
        %v2933 = vunpack.c.h.b16 %v2891
        %v2934 = vunpack.c.h.b16 %v2892
        %v2935 = vunpack.c.h.b16 %v2893
        %v2936 = vunpack.c.h.b16 %v2894
        %v2937 = vunpack.c.h.b16 %v2895
        %v2938 = vunpack.c.h.b16 %v2896
        %v2939 = vpack.c.b16 %v2912, %v2911
        %v2940 = vpack.c.b16 %v2914, %v2913
        %v2941 = vpack.c.b16 %v2916, %v2915
        %v2942 = vpack.c.b16 %v2917, %v2917
        %v2943 = vpack.c.b16 %v2919, %v2918
        %v2944 = vpack.c.b16 %v2921, %v2920
        %v2945 = vpack.c.b16 %v2923, %v2922
        %v2946 = vpack.c.b16 %v2924, %v2924
        %v2947 = vpack.c.b16 %v2926, %v2925
        %v2948 = vpack.c.b16 %v2928, %v2927
        %v2949 = vpack.c.b16 %v2930, %v2929
        %v2950 = vpack.c.b16 %v2931, %v2931
        %v2951 = vpack.c.b16 %v2933, %v2932
        %v2952 = vpack.c.b16 %v2935, %v2934
        %v2953 = vpack.c.b16 %v2937, %v2936
        %v2954 = vpack.c.b16 %v2938, %v2938
        %2971 = vst [vmem:[%s436] sm:$0xff] %v2939
        %2972 = vst [vmem:[%s436 + $0x8] sm:$0xff] %v2940
        %2973 = vst [vmem:[%s436 + $0x10] sm:$0xff] %v2941
        %vm2974 = vcmask 125952
        %2975 = vst.msk [vmem:[%s436 + $0x18] sm:$0xf] %vm2974, %v2942
        %2976 = vst [vmem:[%s436 + $0x1c] sm:$0xff] %v2943
        %2977 = vst [vmem:[%s436 + $0x24] sm:$0xff] %v2944
        %2978 = vst [vmem:[%s436 + $0x2c] sm:$0xff] %v2945
        %2979 = vst.msk [vmem:[%s436 + $0x34] sm:$0xf] %vm2974, %v2946
        %2980 = vst [vmem:[%s436 + $0x38] sm:$0xff] %v2947
        %2981 = vst [vmem:[%s436 + $0x40] sm:$0xff] %v2948
        %2982 = vst [vmem:[%s436 + $0x48] sm:$0xff] %v2949
        %2983 = vst.msk [vmem:[%s436 + $0x50] sm:$0xf] %vm2974, %v2950
        %2984 = vst [vmem:[%s436 + $0x54] sm:$0xff] %v2951
        %2985 = vst [vmem:[%s436 + $0x5c] sm:$0xff] %v2952
        %2986 = vst [vmem:[%s436 + $0x64] sm:$0xff] %v2953
        %2987 = vst.msk [vmem:[%s436 + $0x6c] sm:$0xf] %vm2974, %v2954
        %s2988 = sand.u32 %s313, 1
        %s2989 = scalar_lea.sflag [#allocation3], %s2988
        %s2990 = sand.u32 %s313, 1
        %s2991 = smul.addr %s2990, 112
        %s2992 = scalar_lea.vmem [#allocation2], %s2991
        // Predicated region
        $region73: #{tpu_custom_call.1} parent=71 // pred_check
          %p2993 = pneg %p323
        $region74: #{tpu_custom_call.1} parent=71 // pred_check_branch
          %2995 = sbr.rel (%p2993) target = $region76
        $region75: #{tpu_custom_call.1} parent=71 // pred_region
          %s2996 = smul.u32 4, %s27
          %s2998 = ssub.s32 1792, 1792
          %2999 = vsyncadd %s2989, %s2998
          %s3000 = smul.addr %s2996, 7
          %s3001 = smul.addr %s3000, 64
          %s3002 = scalar_lea.hbm %s13, %s3001
          %s3003 = sshll.u32 %s2992, 4
          %s3004 = int_to_ptr.vmem [resolvable:$true] %s3003
          %3009 = dma.vmem_to_hbm [thread:$0]  %s3004, 1792, %s3002, %s2989, 448, 448, 28
        $region76: #{tpu_custom_call.1} parent=71 // pred_fallthru
          _
      $region72: #{tpu_custom_call.1} parent=5 // pred_fallthru
        _
      %p3010 = scmp.le.s32.totalorder 2, %s22
      // Predicated region
      $region77: #{tpu_custom_call.1} parent=5 // pred_check
        %p3011 = pneg %p3010
      $region78: #{tpu_custom_call.1} parent=5 // pred_check_branch
        %3013 = sbr.rel (%p3011) target = $region80
      $region79: #{tpu_custom_call.1} parent=5 // pred_region
        %s3014 = ssub.s32 %s22, 2
        // Predicated region
        $region81: #{tpu_custom_call.1} parent=79 // pred_check
          %p3015 = pneg %p329
        $region82: #{tpu_custom_call.1} parent=79 // pred_check_branch
          %3017 = sbr.rel (%p3015) target = $region84
        $region83: #{tpu_custom_call.1} parent=79 // pred_region
          %s3018 = sand.u32 %s314, 1
          %s3019 = scalar_lea.sflag [#allocation3], %s3018
          %s3020 = sand.u32 %s314, 1
          %s3021 = smul.addr %s3020, 112
          %s3022 = scalar_lea.vmem [#allocation2], %s3021
          %3023 = dma.done %s3019, 1792
        $region84: #{tpu_custom_call.1} parent=79 // pred_fallthru
          _
      $region80: #{tpu_custom_call.1} parent=5 // pred_fallthru
        _
    $region6: #{tpu_custom_call.1} parent=1 // loop_footer
      %s26 = sadd.s32 1, %s22
    $region7: #{tpu_custom_call.1} parent=1 // loop_footer_branch
      %21 = sbr.rel target = $region3
    $region8: #{tpu_custom_call.1} parent=1 // loop_exit
      _
    %3024 = vsyncpa [#allocation3], 1
    %s3025 = scalar_lea.sflag [#allocation3], 1
    %3026 = vsyncpa %s3025, 1

</llo_original>
